<compile_context>
chip_gen: v7x
topology: tpu7x:2x2x1
jax: 0.10.0
libtpu: 0.0.40
codegen_flags: <defaults>
</compile_context>

<pallas_src>
import functools

import numpy as np
import jax
import jax.numpy as jnp
from jax import lax
from jax.experimental import pallas as pl
from jax.experimental.pallas import tpu as pltpu

HIDDEN_DIM = 32
SIGMA_D = 0.2
SIGMA_A = 15.0
ANGLE_K = 3


# ----------------------------------------------------------------------------
# Parameter / constant setup (plain JAX glue)
# ----------------------------------------------------------------------------
def sinusoidal_freqs(hidden_dim):
    # torch SinusoidalEmbedding: out[..., 2i] = sin(x*w_i), out[..., 2i+1] = cos(x*w_i)
    # encoded as sin(x * w_full + phase) with w_full=[w0,w0,w1,w1,...], phase=[0,pi/2,...]
    div_term = np.exp(np.arange(0, hidden_dim, 2, dtype=np.float64) *
                      (-np.log(10000.0) / hidden_dim))
    w_full = np.repeat(div_term, 2)
    phase = np.tile(np.array([0.0, np.pi / 2.0]), hidden_dim // 2)
    return (jnp.asarray(w_full, jnp.float32)[None, :],
            jnp.asarray(phase, jnp.float32)[None, :])


def init_params(key, hidden_dim):
    ks = jax.random.split(key, 4)
    s = 1.0 / np.sqrt(hidden_dim)
    w_full, phase = sinusoidal_freqs(hidden_dim)
    return dict(
        w_full=w_full, phase=phase,
        wd=jax.random.normal(ks[0], (hidden_dim, hidden_dim), jnp.float32) * s,
        bd=jax.random.normal(ks[1], (1, hidden_dim), jnp.float32) * s,
        wa=jax.random.normal(ks[2], (hidden_dim, hidden_dim), jnp.float32) * s,
        ba=jax.random.normal(ks[3], (1, hidden_dim), jnp.float32) * s,
    )


def get_embedding_indices(points, sigma_d, sigma_a, angle_k):
    """Replicates GeometricStructureEmbedding.get_embedding_indices (glue)."""
    B, N, _ = points.shape
    sq = jnp.sum(points * points, axis=-1)                              # (B,N)
    inner = jnp.einsum('bid,bjd->bij', points, points)
    dist2 = jnp.maximum(sq[:, :, None] + sq[:, None, :] - 2.0 * inner, 0.0)
    dist = jnp.sqrt(dist2)                                              # (B,N,N)
    d_indices = dist / sigma_d

    k = min(angle_k, N - 1)
    # kNN excluding self: smallest k+1 distances, drop the first.
    # TODO(synk): top-k stays in XLA glue; data-dependent sorting has no clean Pallas path.
    _, knn_idx = lax.top_k(-dist, k + 1)                                # (B,N,k+1)
    knn_idx = knn_idx[:, :, 1:]                                         # (B,N,k)
    knn_points = jax.vmap(lambda pts, idx: pts[idx])(points, knn_idx)   # (B,N,k,3)

    ref_vectors = knn_points - points[:, :, None, :]                    # (B,N,k,3)
    anc_vectors = points[:, None, :, :] - points[:, :, None, :]         # (B,N,N,3)
    ref_e = ref_vectors[:, :, None, :, :]                               # (B,N,1,k,3)
    anc_e = anc_vectors[:, :, :, None, :]                               # (B,N,N,1,3)
    cross = jnp.cross(ref_e, anc_e)                                     # (B,N,N,k,3)
    sin_v = jnp.linalg.norm(cross, axis=-1)
    cos_v = jnp.sum(ref_e * anc_e, axis=-1)
    angles = jnp.arctan2(sin_v, cos_v)
    a_indices = angles * (180.0 / (sigma_a * np.pi))                    # (B,N,N,k) float
    return d_indices, a_indices


def _mxu_lane_width():
    """256-lane fold on v6e/v7x (256-wide MXU), 128 elsewhere (v5e & unknown)."""
    try:
        kind = jax.devices()[0].device_kind.lower()
    except Exception:
        return 128
    if any(tag in kind for tag in ('v6', '6e', 'v7', '7x')):
        return 256
    return 128


def _pick_row_tile(total, max_tile):
    """Largest multiple of 8 that divides `total` (itself a multiple of 8), <= max_tile."""
    if total <= max_tile:
        return total
    best = 8
    t = 8
    while t <= max_tile:
        if total % t == 0:
            best = t
        t += 8
    return best


# ----------------------------------------------------------------------------
# Pallas kernel: MXU lane-expansion + sine + proj_d + proj_a + max-over-k
# ----------------------------------------------------------------------------
def geo_kernel(vals_ref, ex_ref, ph_ref, wd_ref, bd_ref, wa_ref, ba_ref, out_ref,
               *, n_angle, gh, reduction):
    # vals_ref : (R2, L) f32, lane g*(K+1)+c = channel c of pair-slot g (rest zero pad)
    # ex_ref   : (L, (K+1)*GH) f32 scatter matrix pre-scaled by sinusoid freqs
    # ph_ref   : (1, (K+1)*GH) f32 phases
    # wd/wa    : (GH, GH) bf16 block-diag kron(I_G, W);  bd/ba: (1, GH) f32
    # out_ref  : (R2, GH) f32  -- GH is a multiple of 128 => dense stores
    # Lane expansion + frequency scaling on the MXU; sine argument stays f32.
    arg = jnp.dot(vals_ref[...], ex_ref[...],
                  preferred_element_type=jnp.float32) + ph_ref[...]     # (R2, (K+1)*GH)
    # One sine pass for all K+1 channels (f32 VPU); bf16 only at the MXU boundary.
    emb = jnp.sin(arg).astype(jnp.bfloat16)

    # proj_d on the distance channel (lane slice at a 128-multiple -> free view).
    d_proj = jnp.dot(emb[:, :gh], wd_ref[...], preferred_element_type=jnp.float32)

    # proj_a on the K angle channels with a running reduction (no concat copies).
    wa = wa_ref[...]
    a_red = None
    for c in range(n_angle):                                            # static K
        a_c = jnp.dot(emb[:, (1 + c) * gh:(2 + c) * gh], wa,
                      preferred_element_type=jnp.float32)
        if a_red is None:
            a_red = a_c
        elif reduction == 'max':
            a_red = jnp.maximum(a_red, a_c)
        else:
            a_red = a_red + a_c
    if reduction != 'max':
        a_red = a_red * (1.0 / n_angle)

    # Biases are constant over k, so adding them after the reduction is exact.
    out_ref[...] = d_proj + bd_ref[...] + a_red + ba_ref[...]           # 128-lane dense


def geometric_structure_embedding(points, params, *, sigma_d=SIGMA_D,
                                  sigma_a=SIGMA_A, angle_k=ANGLE_K,
                                  angle_reduction='max', max_row_tile=512,
                                  lane_width=None):
    # TODO(synk): use_angle_embed=False (distance-only) variant not wired; default config only.
    B, N, _ = points.shape
    H = params['wd'].shape[0]
    d_idx, a_idx = get_embedding_indices(points, sigma_d, sigma_a, angle_k)
    K = a_idx.shape[-1]
    NC = K + 1
    NN = N * N

    # Fold G pairs per lane-dense output row: GH = G*H (128 on v5e, 256 on v6e/v7x).
    if lane_width is None:
        lane_width = _mxu_lane_width()
    G = max(1, lane_width // H)
    GH = G * H

    # ---- pack inputs channel-minor: pure concat/reshape/pad, no HBM transpose ----
    vals = jnp.concatenate([d_idx[..., None], a_idx], axis=-1)          # (B,N,N,K+1)
    vals = vals.reshape(B, NN, NC)
    NN_pad = -(-NN // (8 * G)) * (8 * G)
    R2_total = NN_pad // G
    vals = jnp.pad(vals, ((0, 0), (0, NN_pad - NN), (0, 0)))
    vals = vals.reshape(B, R2_total, G * NC)                            # channel-minor
    C = G * NC
    in_lanes = max(128, -(-C // 128) * 128)                             # keep matmul aligned
    vals = jnp.pad(vals, ((0, 0), (0, 0), (0, in_lanes - C)))           # (B, R2_total, 128)

    R2 = _pick_row_tile(R2_total, max_row_tile)
    n_tiles = R2_total // R2
    if B * n_tiles < 2 and R2_total >= 16:
        # ensure >=2 grid steps so both v7x TensorCores get work
        R2 = _pick_row_tile(R2_total, max(8, R2_total // 2))
        n_tiles = R2_total // R2

    # ---- constants: expansion matrix (scatter * freqs), phase, kron weights ----
    w = np.asarray(params['w_full'], np.float32).reshape(H)
    ph = np.asarray(params['phase'], np.float32).reshape(H)
    expand = np.zeros((in_lanes, NC * GH), np.float32)
    for g in range(G):
        for c in range(NC):
            expand[g * NC + c, c * GH + g * H: c * GH + (g + 1) * H] = w
    expand = jnp.asarray(expand)
    ph_wide = jnp.asarray(np.tile(ph, NC * G)[None, :], jnp.float32)    # (1, NC*GH)

    eye_g = jnp.eye(G, dtype=jnp.float32)
    wd_blk = jnp.kron(eye_g, params['wd']).astype(jnp.bfloat16)         # (GH, GH) bf16
    wa_blk = jnp.kron(eye_g, params['wa']).astype(jnp.bfloat16)
    bd_wide = jnp.tile(params['bd'], (1, G))                            # (1, GH) f32
    ba_wide = jnp.tile(params['ba'], (1, G))

    kernel = functools.partial(geo_kernel, n_angle=K, gh=GH,
                               reduction=angle_reduction)
    out3 = pl.pallas_call(
        kernel,
        out_shape=jax.ShapeDtypeStruct((B, R2_total, GH), jnp.float32),
        grid=(B, n_tiles),
        in_specs=[
            pl.BlockSpec((None, R2, in_lanes), lambda b, t: (b, t, 0)),   # packed values
            pl.BlockSpec((in_lanes, NC * GH), lambda b, t: (0, 0)),       # expansion (freqs)
            pl.BlockSpec((1, NC * GH), lambda b, t: (0, 0)),              # phase
            pl.BlockSpec((GH, GH), lambda b, t: (0, 0)),                  # Wd (kron, bf16)
            pl.BlockSpec((1, GH), lambda b, t: (0, 0)),                   # bd
            pl.BlockSpec((GH, GH), lambda b, t: (0, 0)),                  # Wa (kron, bf16)
            pl.BlockSpec((1, GH), lambda b, t: (0, 0)),                   # ba
        ],
        out_specs=pl.BlockSpec((None, R2, GH), lambda b, t: (b, t, 0)),
        compiler_params=pltpu.CompilerParams(
            dimension_semantics=("parallel", "parallel")),
    )(vals, expand, ph_wide, wd_blk, bd_wide, wa_blk, ba_wide)

    # Free layout plumbing back to (B, N, N, H); padded tail pairs are sliced off.
    return out3.reshape(B, NN_pad, H)[:, :NN].reshape(B, N, N, H)


# ----------------------------------------------------------------------------
# Pure-JAX reference (mirrors the PyTorch forward) for a sanity check
# ----------------------------------------------------------------------------
def reference_forward(points, params, *, sigma_d=SIGMA_D, sigma_a=SIGMA_A,
                      angle_k=ANGLE_K, angle_reduction='max'):
    d_idx, a_idx = get_embedding_indices(points, sigma_d, sigma_a, angle_k)
    w, ph = params['w_full'][0], params['phase'][0]
    d_emb = jnp.sin(d_idx[..., None] * w + ph) @ params['wd'] + params['bd'][0]
    a_emb = jnp.sin(a_idx[..., None] * w + ph) @ params['wa'] + params['ba'][0]
    if angle_reduction == 'max':
        a_red = jnp.max(a_emb, axis=3)
    else:
        a_red = jnp.mean(a_emb, axis=3)
    return d_emb + a_red


if __name__ == "__main__":
    key = jax.random.PRNGKey(0)
    k_pts, k_par = jax.random.split(key)
    B, N = 2, 16
    points = jax.random.normal(k_pts, (B, N, 3), jnp.float32)
    params = init_params(k_par, HIDDEN_DIM)

    out = geometric_structure_embedding(points, params)
    out = jax.block_until_ready(out)

    ref = jax.block_until_ready(reference_forward(points, params))
    assert out.shape == (B, N, N, HIDDEN_DIM)
    np.testing.assert_allclose(np.asarray(out), np.asarray(ref),
                               rtol=2e-2, atol=2e-2)
    print("KERNEL_OK")
</pallas_src>

<mosaic_0001>
module attributes {stable_mosaic.version = 11 : i64} {
  func.func @geo_kernel(%arg0: i32, %arg1: i32, %arg2: memref<1x64x128xf32, #tpu.memory_space<vmem>>, %arg3: memref<128x512xf32, #tpu.memory_space<vmem>>, %arg4: memref<1x512xf32, #tpu.memory_space<vmem>>, %arg5: memref<128x128xbf16, #tpu.memory_space<vmem>>, %arg6: memref<1x128xf32, #tpu.memory_space<vmem>>, %arg7: memref<128x128xbf16, #tpu.memory_space<vmem>>, %arg8: memref<1x128xf32, #tpu.memory_space<vmem>>, %arg9: memref<1x64x128xf32, #tpu.memory_space<vmem>>) attributes {dimension_semantics = [#tpu.dimension_semantics<parallel>, #tpu.dimension_semantics<parallel>], iteration_bounds = array<i64: 2, 1>, scalar_prefetch = 0 : i64, scratch_operands = 0 : i64, tpu.core_type = #tpu.core_type<tc>, window_params = [{transform_indices = @transform_0, window_bounds = array<i64: 1, 64, 128>}, {pipeline_mode = #tpu.pipeline_mode<synchronous>, transform_indices = @transform_1, window_bounds = array<i64: 128, 512>}, {pipeline_mode = #tpu.pipeline_mode<synchronous>, transform_indices = @transform_2, window_bounds = array<i64: 1, 512>}, {pipeline_mode = #tpu.pipeline_mode<synchronous>, transform_indices = @transform_3, window_bounds = array<i64: 128, 128>}, {pipeline_mode = #tpu.pipeline_mode<synchronous>, transform_indices = @transform_4, window_bounds = array<i64: 1, 128>}, {pipeline_mode = #tpu.pipeline_mode<synchronous>, transform_indices = @transform_5, window_bounds = array<i64: 128, 128>}, {pipeline_mode = #tpu.pipeline_mode<synchronous>, transform_indices = @transform_6, window_bounds = array<i64: 1, 128>}, {transform_indices = @transform_7, window_bounds = array<i64: 1, 64, 128>}]} {
    %c0 = arith.constant 0 : index
    %c0_0 = arith.constant 0 : index
    %c0_1 = arith.constant 0 : index
    %0 = vector.load %arg2[%c0, %c0_0, %c0_1] : memref<1x64x128xf32, #tpu.memory_space<vmem>>, vector<1x64x128xf32>
    %1 = vector.shape_cast %0 : vector<1x64x128xf32> to vector<64x128xf32>
    %c0_2 = arith.constant 0 : index
    %c0_3 = arith.constant 0 : index
    %2 = vector.load %arg3[%c0_2, %c0_3] : memref<128x512xf32, #tpu.memory_space<vmem>>, vector<128x512xf32>
    %cst = arith.constant dense<0.000000e+00> : vector<64x512xf32>
    %3 = tpu.matmul %1, %2, %cst {dimension_numbers = #tpu.dot_dimension_numbers<[1], [0], [0], [1], [0, 0, 1, 1], [], []>} : vector<64x128xf32>, vector<128x512xf32>, vector<64x512xf32> -> vector<64x512xf32>
    %c0_4 = arith.constant 0 : index
    %c0_5 = arith.constant 0 : index
    %4 = vector.load %arg4[%c0_4, %c0_5] : memref<1x512xf32, #tpu.memory_space<vmem>>, vector<1x512xf32>
    %5 = vector.broadcast %4 : vector<1x512xf32> to vector<64x512xf32>
    %6 = arith.addf %3, %5 : vector<64x512xf32>
    %7 = math.sin %6 : vector<64x512xf32>
    %8 = arith.truncf %7 : vector<64x512xf32> to vector<64x512xbf16>
    %9 = vector.extract_strided_slice %8 {offsets = [0, 0], sizes = [64, 128], strides = [1, 1]} : vector<64x512xbf16> to vector<64x128xbf16>
    %c0_6 = arith.constant 0 : index
    %c0_7 = arith.constant 0 : index
    %10 = vector.load %arg5[%c0_6, %c0_7] : memref<128x128xbf16, #tpu.memory_space<vmem>>, vector<128x128xbf16>
    %cst_8 = arith.constant dense<0.000000e+00> : vector<64x128xf32>
    %11 = tpu.matmul %9, %10, %cst_8 {dimension_numbers = #tpu.dot_dimension_numbers<[1], [0], [0], [1], [0, 0, 1, 1], [], []>} : vector<64x128xbf16>, vector<128x128xbf16>, vector<64x128xf32> -> vector<64x128xf32>
    %c0_9 = arith.constant 0 : index
    %c0_10 = arith.constant 0 : index
    %12 = vector.load %arg7[%c0_9, %c0_10] : memref<128x128xbf16, #tpu.memory_space<vmem>>, vector<128x128xbf16>
    %13 = vector.extract_strided_slice %8 {offsets = [0, 128], sizes = [64, 128], strides = [1, 1]} : vector<64x512xbf16> to vector<64x128xbf16>
    %cst_11 = arith.constant dense<0.000000e+00> : vector<64x128xf32>
    %14 = tpu.matmul %13, %12, %cst_11 {dimension_numbers = #tpu.dot_dimension_numbers<[1], [0], [0], [1], [0, 0, 1, 1], [], []>} : vector<64x128xbf16>, vector<128x128xbf16>, vector<64x128xf32> -> vector<64x128xf32>
    %15 = vector.extract_strided_slice %8 {offsets = [0, 256], sizes = [64, 128], strides = [1, 1]} : vector<64x512xbf16> to vector<64x128xbf16>
    %cst_12 = arith.constant dense<0.000000e+00> : vector<64x128xf32>
    %16 = tpu.matmul %15, %12, %cst_12 {dimension_numbers = #tpu.dot_dimension_numbers<[1], [0], [0], [1], [0, 0, 1, 1], [], []>} : vector<64x128xbf16>, vector<128x128xbf16>, vector<64x128xf32> -> vector<64x128xf32>
    %17 = arith.maximumf %14, %16 : vector<64x128xf32>
    %18 = vector.extract_strided_slice %8 {offsets = [0, 384], sizes = [64, 128], strides = [1, 1]} : vector<64x512xbf16> to vector<64x128xbf16>
    %cst_13 = arith.constant dense<0.000000e+00> : vector<64x128xf32>
    %19 = tpu.matmul %18, %12, %cst_13 {dimension_numbers = #tpu.dot_dimension_numbers<[1], [0], [0], [1], [0, 0, 1, 1], [], []>} : vector<64x128xbf16>, vector<128x128xbf16>, vector<64x128xf32> -> vector<64x128xf32>
    %20 = arith.maximumf %17, %19 : vector<64x128xf32>
    %c0_14 = arith.constant 0 : index
    %c0_15 = arith.constant 0 : index
    %21 = vector.load %arg6[%c0_14, %c0_15] : memref<1x128xf32, #tpu.memory_space<vmem>>, vector<1x128xf32>
    %22 = vector.broadcast %21 : vector<1x128xf32> to vector<64x128xf32>
    %23 = arith.addf %11, %22 : vector<64x128xf32>
    %24 = arith.addf %23, %20 : vector<64x128xf32>
    %c0_16 = arith.constant 0 : index
    %c0_17 = arith.constant 0 : index
    %25 = vector.load %arg8[%c0_16, %c0_17] : memref<1x128xf32, #tpu.memory_space<vmem>>, vector<1x128xf32>
    %26 = vector.broadcast %25 : vector<1x128xf32> to vector<64x128xf32>
    %27 = arith.addf %24, %26 : vector<64x128xf32>
    %c0_18 = arith.constant 0 : index
    %c0_19 = arith.constant 0 : index
    %c0_20 = arith.constant 0 : index
    %28 = vector.load %arg9[%c0_18, %c0_19, %c0_20] : memref<1x64x128xf32, #tpu.memory_space<vmem>>, vector<1x64x128xf32>
    %29 = vector.shape_cast %28 : vector<1x64x128xf32> to vector<64x128xf32>
    %30 = vector.shape_cast %27 : vector<64x128xf32> to vector<1x64x128xf32>
    tpu.vector_store %arg9[%c0_18, %c0_19, %c0_20], %30 {strides = array<i32>} : memref<1x64x128xf32, #tpu.memory_space<vmem>>, vector<1x64x128xf32>,
    return
  }
  func.func @transform_0(%arg0: i32, %arg1: i32) -> (i32, i32, i32) {
    %c0_i32 = arith.constant 0 : i32
    %c0_i32_0 = arith.constant 0 : i32
    return %arg0, %arg1, %c0_i32 : i32, i32, i32
  }
  func.func @transform_1(%arg0: i32, %arg1: i32) -> (i32, i32) {
    %c0_i32 = arith.constant 0 : i32
    %c0_i32_0 = arith.constant 0 : i32
    %c0_i32_1 = arith.constant 0 : i32
    return %c0_i32, %c0_i32_0 : i32, i32
  }
  func.func @transform_2(%arg0: i32, %arg1: i32) -> (i32, i32) {
    %c0_i32 = arith.constant 0 : i32
    %c0_i32_0 = arith.constant 0 : i32
    %c0_i32_1 = arith.constant 0 : i32
    return %c0_i32, %c0_i32_0 : i32, i32
  }
  func.func @transform_3(%arg0: i32, %arg1: i32) -> (i32, i32) {
    %c0_i32 = arith.constant 0 : i32
    %c0_i32_0 = arith.constant 0 : i32
    %c0_i32_1 = arith.constant 0 : i32
    return %c0_i32, %c0_i32_0 : i32, i32
  }
  func.func @transform_4(%arg0: i32, %arg1: i32) -> (i32, i32) {
    %c0_i32 = arith.constant 0 : i32
    %c0_i32_0 = arith.constant 0 : i32
    %c0_i32_1 = arith.constant 0 : i32
    return %c0_i32, %c0_i32_0 : i32, i32
  }
  func.func @transform_5(%arg0: i32, %arg1: i32) -> (i32, i32) {
    %c0_i32 = arith.constant 0 : i32
    %c0_i32_0 = arith.constant 0 : i32
    %c0_i32_1 = arith.constant 0 : i32
    return %c0_i32, %c0_i32_0 : i32, i32
  }
  func.func @transform_6(%arg0: i32, %arg1: i32) -> (i32, i32) {
    %c0_i32 = arith.constant 0 : i32
    %c0_i32_0 = arith.constant 0 : i32
    %c0_i32_1 = arith.constant 0 : i32
    return %c0_i32, %c0_i32_0 : i32, i32
  }
  func.func @transform_7(%arg0: i32, %arg1: i32) -> (i32, i32, i32) {
    %c0_i32 = arith.constant 0 : i32
    %c0_i32_0 = arith.constant 0 : i32
    return %arg0, %arg1, %c0_i32 : i32, i32, i32
  }
}

</mosaic_0001>

<llo_original>
// kernel: tpu_custom_call.1
$region0: #{tpu_custom_call.1}
  #allocation0 [shape = 'u32[]', space=smem, size = 0x4, offset = 0x4, fixed_abs, tag = 'smem constant byte address 0x4 - core index']
  #allocation1 [shape = 'u32[144,128]{1,0:T(1,128)}', space=vmem, size = 0x12000, scoped, tag = 'internal scratch']
  %s0 = inlined_call_operand.hbm [shape: f32[2,64,128], index: 0, kind: input, shape index: {}]
  %s1 = inlined_call_operand.hbm [shape: f32[128,512], index: 1, kind: input, shape index: {}]
  %s2 = inlined_call_operand.vmem [shape: f32[1,512], index: 2, kind: input, shape index: {}]
  %s3 = inlined_call_operand.hbm [shape: bf16[128,128], index: 3, kind: input, shape index: {}]
  %s4 = inlined_call_operand.vmem [shape: f32[1,128], index: 4, kind: input, shape index: {}]
  %s5 = inlined_call_operand.hbm [shape: bf16[128,128], index: 5, kind: input, shape index: {}]
  %s6 = inlined_call_operand.vmem [shape: f32[1,128], index: 6, kind: input, shape index: {}]
  %s7 = inlined_call_operand.hbm [shape: f32[2,64,128], index: 7, kind: output, shape index: {}]
  %s8 = sld [smem:[#allocation0]]
  $region77: #{tpu_custom_call.1} parent=0
    _
  %s10 = ssub.s32 1, %s8
  %s11 = scalar_select 0, %s10, %s8
  $region1: #{tpu_custom_call.1} parent=0
    #allocation2 [shape = 'u8[65536]{0}', space=vmem, size = 0x10000, scoped, tag = 'input window, operand 0']
    #allocation3 [shape = 's32[2]{0}', space=sflag, size = 0x8, scoped, tag = 'scoped memory for tpu_custom_call.1']
    #allocation4 [shape = 's32[2]{0}', space=sflag, size = 0x8, scoped, tag = 'scoped memory for tpu_custom_call.1']
    #allocation5 [shape = 'u8[262144]{0}', space=vmem, size = 0x40000, scoped, tag = 'input window, operand 1, single buffered']
    #allocation6 [shape = 's32[1]{0}', space=sflag, size = 0x4, scoped, tag = 'scoped memory for tpu_custom_call.1']
    #allocation7 [shape = 'u8[32768]{0}', space=vmem, size = 0x8000, scoped, tag = 'input window, operand 3, single buffered']
    #allocation8 [shape = 'u8[32768]{0}', space=vmem, size = 0x8000, scoped, tag = 'input window, operand 5, single buffered']
    #allocation9 [shape = 's32[1]{0}', space=sflag, size = 0x4, scoped, tag = 'scoped memory for tpu_custom_call.1']
    #allocation10 [shape = 'u8[65536]{0}', space=vmem, size = 0x10000, scoped, tag = 'output window, operand 0']
    %12 = vsyncpa [#allocation3], 0
    %s13 = scalar_lea.sflag [#allocation3], 1
    %14 = vsyncpa %s13, 0
    %15 = vsyncpa [#allocation6], 0
    %16 = vsyncpa [#allocation9], 0
    %17 = vsyncpa [#allocation4], 0
    %s18 = scalar_lea.sflag [#allocation4], 1
    %19 = vsyncpa %s18, 0
    loop: start=0, step=1, limit=4
    $region2: #{tpu_custom_call.1} parent=1 // loop_pre_header
      _
    $region3: #{tpu_custom_call.1} parent=1 // loop_header
      %s21 = sphi 0, %s25
      %p22 = scmp.ge.s32.totalorder %s21, 4
      %s28 = sphi 0, %s40
      %s29 = sphi 0, %s36
      %s30 = sphi 0, %s28
      %s31 = sphi 0, %s29
      %s32 = sphi 0, %s30
      %s33 = sphi 0, %s31
      %s45 = sphi 0, %s47
      %s48 = sphi 0, %s45
      %s49 = sphi 0, %s48
      %s65 = sphi 0, %s49
      %s69 = sphi 0, %s69
      %s71 = sphi 0, %s69
      %s72 = sphi 0, %s71
      %s86 = sphi 0, %s72
      %s90 = sphi 0, %s90
      %s92 = sphi 0, %s90
      %s93 = sphi 0, %s92
      %s107 = sphi 0, %s93
      %s111 = sphi 0, %s111
      %s113 = sphi 0, %s111
      %s114 = sphi 0, %s113
      %s128 = sphi 0, %s114
      %s132 = sphi 0, %s132
      %s134 = sphi 0, %s132
      %s135 = sphi 0, %s134
      %s149 = sphi 0, %s135
      %s153 = sphi 0, %s153
      %s155 = sphi 0, %s153
      %s156 = sphi 0, %s155
      %s170 = sphi 0, %s156
      %s174 = sphi 0, %s174
      %s176 = sphi 0, %s174
      %s177 = sphi 0, %s176
      %s191 = sphi 0, %s177
      %s199 = sphi 0, %s201
      %s202 = sphi 0, %s199
      %s203 = sphi 0, %s202
      %s219 = sphi 0, %s203
    $region4: #{tpu_custom_call.1} parent=1 // loop_header_branch
      %24 = sbr.rel (%p22) target = $region8
    $region5: #{tpu_custom_call.1} parent=1 // loop_body
      %s26 = ssub.s32 %s21, 1
      %s27 = ssub.s32 %s21, 2
      %s34 = sadd.s32 1, %s29
      %p35 = scmp.ge.s32.totalorder %s34, 1
      %s36 = scalar_select %p35, 0, %s34
      %s37 = sadd.s32 1, %s28
      %s38 = scalar_select %p35, %s37, %s28
      %p39 = scmp.ge.s32.totalorder %s38, 2
      %s40 = scalar_select %p39, 0, %s38
      %s41 = ssub.s32 %s28, %s40
      %s42 = ssub.s32 %s29, %s36
      %s43 = sor.u32 %s41, %s42
      %p44 = scmp.eq.s32.totalorder %s43, 0
      %s46 = sadd.s32 %s45, 1
      %s47 = scalar_select %p44, %s45, %s46
      %p50 = pneg %p44
      %p51 = scmp.eq.s32.totalorder %s21, 1
      %p52 = por %p50, %p51
      %p53 = scmp.ne.s32.totalorder %s45, %s48
      %p54 = scmp.eq.s32.totalorder %s21, 0
      %p55 = por %p53, %p54
      %p56 = scmp.ne.s32.totalorder %s45, %s48
      %p57 = scmp.eq.s32.totalorder %s26, 1
      %p58 = por %p56, %p57
      %p59 = scmp.ne.s32.totalorder %s48, %s49
      %p60 = scmp.eq.s32.totalorder %s26, 0
      %p61 = por %p59, %p60
      %p62 = scmp.ne.s32.totalorder %s48, %s49
      %p63 = scmp.eq.s32.totalorder %s27, 1
      %p64 = por %p62, %p63
      %p66 = scmp.ne.s32.totalorder %s49, %s65
      %p67 = scmp.eq.s32.totalorder %s27, 0
      %p68 = por %p66, %p67
      %s70 = sadd.s32 %s69, 1
      %p73 = scmp.eq.s32.totalorder %s21, 1
      %p74 = scmp.ne.s32.totalorder %s69, %s71
      %p75 = scmp.eq.s32.totalorder %s21, 0
      %p76 = por %p74, %p75
      %p77 = scmp.ne.s32.totalorder %s69, %s71
      %p78 = scmp.eq.s32.totalorder %s26, 1
      %p79 = por %p77, %p78
      %p80 = scmp.ne.s32.totalorder %s71, %s72
      %p81 = scmp.eq.s32.totalorder %s26, 0
      %p82 = por %p80, %p81
      %p83 = scmp.ne.s32.totalorder %s71, %s72
      %p84 = scmp.eq.s32.totalorder %s27, 1
      %p85 = por %p83, %p84
      %p87 = scmp.ne.s32.totalorder %s72, %s86
      %p88 = scmp.eq.s32.totalorder %s27, 0
      %p89 = por %p87, %p88
      %s91 = sadd.s32 %s90, 1
      %p94 = scmp.eq.s32.totalorder %s21, 1
      %p95 = scmp.ne.s32.totalorder %s90, %s92
      %p96 = scmp.eq.s32.totalorder %s21, 0
      %p97 = por %p95, %p96
      %p98 = scmp.ne.s32.totalorder %s90, %s92
      %p99 = scmp.eq.s32.totalorder %s26, 1
      %p100 = por %p98, %p99
      %p101 = scmp.ne.s32.totalorder %s92, %s93
      %p102 = scmp.eq.s32.totalorder %s26, 0
      %p103 = por %p101, %p102
      %p104 = scmp.ne.s32.totalorder %s92, %s93
      %p105 = scmp.eq.s32.totalorder %s27, 1
      %p106 = por %p104, %p105
      %p108 = scmp.ne.s32.totalorder %s93, %s107
      %p109 = scmp.eq.s32.totalorder %s27, 0
      %p110 = por %p108, %p109
      %s112 = sadd.s32 %s111, 1
      %p115 = scmp.eq.s32.totalorder %s21, 1
      %p116 = scmp.ne.s32.totalorder %s111, %s113
      %p117 = scmp.eq.s32.totalorder %s21, 0
      %p118 = por %p116, %p117
      %p119 = scmp.ne.s32.totalorder %s111, %s113
      %p120 = scmp.eq.s32.totalorder %s26, 1
      %p121 = por %p119, %p120
      %p122 = scmp.ne.s32.totalorder %s113, %s114
      %p123 = scmp.eq.s32.totalorder %s26, 0
      %p124 = por %p122, %p123
      %p125 = scmp.ne.s32.totalorder %s113, %s114
      %p126 = scmp.eq.s32.totalorder %s27, 1
      %p127 = por %p125, %p126
      %p129 = scmp.ne.s32.totalorder %s114, %s128
      %p130 = scmp.eq.s32.totalorder %s27, 0
      %p131 = por %p129, %p130
      %s133 = sadd.s32 %s132, 1
      %p136 = scmp.eq.s32.totalorder %s21, 1
      %p137 = scmp.ne.s32.totalorder %s132, %s134
      %p138 = scmp.eq.s32.totalorder %s21, 0
      %p139 = por %p137, %p138
      %p140 = scmp.ne.s32.totalorder %s132, %s134
      %p141 = scmp.eq.s32.totalorder %s26, 1
      %p142 = por %p140, %p141
      %p143 = scmp.ne.s32.totalorder %s134, %s135
      %p144 = scmp.eq.s32.totalorder %s26, 0
      %p145 = por %p143, %p144
      %p146 = scmp.ne.s32.totalorder %s134, %s135
      %p147 = scmp.eq.s32.totalorder %s27, 1
      %p148 = por %p146, %p147
      %p150 = scmp.ne.s32.totalorder %s135, %s149
      %p151 = scmp.eq.s32.totalorder %s27, 0
      %p152 = por %p150, %p151
      %s154 = sadd.s32 %s153, 1
      %p157 = scmp.eq.s32.totalorder %s21, 1
      %p158 = scmp.ne.s32.totalorder %s153, %s155
      %p159 = scmp.eq.s32.totalorder %s21, 0
      %p160 = por %p158, %p159
      %p161 = scmp.ne.s32.totalorder %s153, %s155
      %p162 = scmp.eq.s32.totalorder %s26, 1
      %p163 = por %p161, %p162
      %p164 = scmp.ne.s32.totalorder %s155, %s156
      %p165 = scmp.eq.s32.totalorder %s26, 0
      %p166 = por %p164, %p165
      %p167 = scmp.ne.s32.totalorder %s155, %s156
      %p168 = scmp.eq.s32.totalorder %s27, 1
      %p169 = por %p167, %p168
      %p171 = scmp.ne.s32.totalorder %s156, %s170
      %p172 = scmp.eq.s32.totalorder %s27, 0
      %p173 = por %p171, %p172
      %s175 = sadd.s32 %s174, 1
      %p178 = scmp.eq.s32.totalorder %s21, 1
      %p179 = scmp.ne.s32.totalorder %s174, %s176
      %p180 = scmp.eq.s32.totalorder %s21, 0
      %p181 = por %p179, %p180
      %p182 = scmp.ne.s32.totalorder %s174, %s176
      %p183 = scmp.eq.s32.totalorder %s26, 1
      %p184 = por %p182, %p183
      %p185 = scmp.ne.s32.totalorder %s176, %s177
      %p186 = scmp.eq.s32.totalorder %s26, 0
      %p187 = por %p185, %p186
      %p188 = scmp.ne.s32.totalorder %s176, %s177
      %p189 = scmp.eq.s32.totalorder %s27, 1
      %p190 = por %p188, %p189
      %p192 = scmp.ne.s32.totalorder %s177, %s191
      %p193 = scmp.eq.s32.totalorder %s27, 0
      %p194 = por %p192, %p193
      %s195 = ssub.s32 %s28, %s40
      %s196 = ssub.s32 %s29, %s36
      %s197 = sor.u32 %s195, %s196
      %p198 = scmp.eq.s32.totalorder %s197, 0
      %s200 = sadd.s32 %s199, 1
      %s201 = scalar_select %p198, %s199, %s200
      %p204 = pneg %p198
      %p205 = scmp.eq.s32.totalorder %s21, 1
      %p206 = por %p204, %p205
      %p207 = scmp.ne.s32.totalorder %s199, %s202
      %p208 = scmp.eq.s32.totalorder %s21, 0
      %p209 = por %p207, %p208
      %p210 = scmp.ne.s32.totalorder %s199, %s202
      %p211 = scmp.eq.s32.totalorder %s26, 1
      %p212 = por %p210, %p211
      %p213 = scmp.ne.s32.totalorder %s202, %s203
      %p214 = scmp.eq.s32.totalorder %s26, 0
      %p215 = por %p213, %p214
      %p216 = scmp.ne.s32.totalorder %s202, %s203
      %p217 = scmp.eq.s32.totalorder %s27, 1
      %p218 = por %p216, %p217
      %p220 = scmp.ne.s32.totalorder %s203, %s219
      %p221 = scmp.eq.s32.totalorder %s27, 0
      %p222 = por %p220, %p221
      %p223 = scmp.le.s32.totalorder 1, %s21
      %p224 = scmp.lt.s32.totalorder %s21, 3
      %p225 = pnand %p223, %p224
      %p226 = pneg %p225
      // Predicated region
      $region9: #{tpu_custom_call.1} parent=5 // pred_check
        _
      $region10: #{tpu_custom_call.1} parent=5 // pred_check_branch
        %228 = sbr.rel (%p225) target = $region12
      $region11: #{tpu_custom_call.1} parent=5 // pred_region
        %s229 = ssub.s32 %s21, 1
        // Predicated region
        $region13: #{tpu_custom_call.1} parent=11 // pred_check
          %p230 = pneg %p82
        $region14: #{tpu_custom_call.1} parent=11 // pred_check_branch
          %232 = sbr.rel (%p230) target = $region16
        $region15: #{tpu_custom_call.1} parent=11 // pred_region
          %s234 = ssub.s32 8192, 8192
          %235 = vsyncadd [#allocation6], %s234
          %s236 = sshll.u32 [#allocation5], 4
          %s237 = int_to_ptr.vmem [resolvable:$true] %s236
          %242 = dma.hbm_to_vmem [thread:$0]  %s1, 8192, %s237, [#allocation6], 512, 512, 32
        $region16: #{tpu_custom_call.1} parent=11 // pred_fallthru
          _
        // Predicated region
        $region17: #{tpu_custom_call.1} parent=11 // pred_check
          %p243 = pneg %p103
        $region18: #{tpu_custom_call.1} parent=11 // pred_check_branch
          %245 = sbr.rel (%p243) target = $region20
        $region19: #{tpu_custom_call.1} parent=11 // pred_region
          _
        $region20: #{tpu_custom_call.1} parent=11 // pred_fallthru
          _
        // Predicated region
        $region21: #{tpu_custom_call.1} parent=11 // pred_check
          %p246 = pneg %p124
        $region22: #{tpu_custom_call.1} parent=11 // pred_check_branch
          %248 = sbr.rel (%p246) target = $region24
        $region23: #{tpu_custom_call.1} parent=11 // pred_region
          %s250 = ssub.s32 1024, 1024
          %251 = vsyncadd [#allocation6], %s250
          %s252 = sshll.u32 [#allocation7], 4
          %s253 = int_to_ptr.vmem [resolvable:$true] %s252
          %258 = dma.hbm_to_vmem [thread:$0]  %s3, 1024, %s253, [#allocation6], 64, 64, 4
        $region24: #{tpu_custom_call.1} parent=11 // pred_fallthru
          _
        // Predicated region
        $region25: #{tpu_custom_call.1} parent=11 // pred_check
          %p259 = pneg %p145
        $region26: #{tpu_custom_call.1} parent=11 // pred_check_branch
          %261 = sbr.rel (%p259) target = $region28
        $region27: #{tpu_custom_call.1} parent=11 // pred_region
          _
        $region28: #{tpu_custom_call.1} parent=11 // pred_fallthru
          _
        // Predicated region
        $region29: #{tpu_custom_call.1} parent=11 // pred_check
          %p262 = pneg %p166
        $region30: #{tpu_custom_call.1} parent=11 // pred_check_branch
          %264 = sbr.rel (%p262) target = $region32
        $region31: #{tpu_custom_call.1} parent=11 // pred_region
          %s266 = ssub.s32 1024, 1024
          %267 = vsyncadd [#allocation9], %s266
          %s268 = sshll.u32 [#allocation8], 4
          %s269 = int_to_ptr.vmem [resolvable:$true] %s268
          %274 = dma.hbm_to_vmem [thread:$0]  %s5, 1024, %s269, [#allocation9], 64, 64, 4
        $region32: #{tpu_custom_call.1} parent=11 // pred_fallthru
          _
        // Predicated region
        $region33: #{tpu_custom_call.1} parent=11 // pred_check
          %p275 = pneg %p187
        $region34: #{tpu_custom_call.1} parent=11 // pred_check_branch
          %277 = sbr.rel (%p275) target = $region36
        $region35: #{tpu_custom_call.1} parent=11 // pred_region
          _
        $region36: #{tpu_custom_call.1} parent=11 // pred_fallthru
          _
      $region12: #{tpu_custom_call.1} parent=5 // pred_fallthru
        _
      %p278 = scmp.lt.s32.totalorder %s21, 2
      // Predicated region
      $region37: #{tpu_custom_call.1} parent=5 // pred_check
        %p279 = pneg %p278
      $region38: #{tpu_custom_call.1} parent=5 // pred_check_branch
        %281 = sbr.rel (%p279) target = $region40
      $region39: #{tpu_custom_call.1} parent=5 // pred_region
        // Predicated region
        $region41: #{tpu_custom_call.1} parent=39 // pred_check
          %p282 = pneg %p55
        $region42: #{tpu_custom_call.1} parent=39 // pred_check_branch
          %284 = sbr.rel (%p282) target = $region44
        $region43: #{tpu_custom_call.1} parent=39 // pred_region
          %s285 = sand.u32 %s45, 1
          %s286 = scalar_lea.sflag [#allocation3], %s285
          %s287 = sand.u32 %s45, 1
          %s288 = smul.addr %s287, 64
          %s289 = scalar_lea.vmem [#allocation2], %s288
          %s290 = smul.u32 8, %s29
          %s292 = ssub.s32 1024, 1024
          %293 = vsyncadd %s286, %s292
          %s294 = smul.addr %s28, 8
          %s295 = sadd.s32 %s290, %s294
          %s296 = smul.addr %s295, 128
          %s297 = scalar_lea.hbm %s0, %s296
          %s298 = sshll.u32 %s289, 4
          %s299 = int_to_ptr.vmem [resolvable:$true] %s298
          %304 = dma.hbm_to_vmem [thread:$0]  %s297, 1024, %s299, %s286, 128, 128, 8
        $region44: #{tpu_custom_call.1} parent=39 // pred_fallthru
          _
      $region40: #{tpu_custom_call.1} parent=5 // pred_fallthru
        _
      %p305 = scmp.le.s32.totalorder 1, %s21
      %p306 = scmp.lt.s32.totalorder %s21, 3
      %p307 = pnand %p305, %p306
      %p308 = pneg %p307
      // Predicated region
      $region45: #{tpu_custom_call.1} parent=5 // pred_check
        _
      $region46: #{tpu_custom_call.1} parent=5 // pred_check_branch
        %310 = sbr.rel (%p307) target = $region48
      $region47: #{tpu_custom_call.1} parent=5 // pred_region
        %s311 = ssub.s32 %s21, 1
        %s312 = sand.u32 %s48, 1
        %s313 = scalar_lea.sflag [#allocation3], %s312
        %s314 = sand.u32 %s48, 1
        %s315 = smul.addr %s314, 64
        %s316 = scalar_lea.vmem [#allocation2], %s315
        // Predicated region
        $region49: #{tpu_custom_call.1} parent=47 // pred_check
          %p317 = pneg %p61
        $region50: #{tpu_custom_call.1} parent=47 // pred_check_branch
          %319 = sbr.rel (%p317) target = $region52
        $region51: #{tpu_custom_call.1} parent=47 // pred_region
          %320 = dma.done %s313, 1024
        $region52: #{tpu_custom_call.1} parent=47 // pred_fallthru
          _
        // Predicated region
        $region53: #{tpu_custom_call.1} parent=47 // pred_check
          %p321 = pneg %p82
        $region54: #{tpu_custom_call.1} parent=47 // pred_check_branch
          %323 = sbr.rel (%p321) target = $region56
        $region55: #{tpu_custom_call.1} parent=47 // pred_region
          %324 = dma.done [#allocation6], 8192
        $region56: #{tpu_custom_call.1} parent=47 // pred_fallthru
          _
        // Predicated region
        $region57: #{tpu_custom_call.1} parent=47 // pred_check
          %p325 = pneg %p124
        $region58: #{tpu_custom_call.1} parent=47 // pred_check_branch
          %327 = sbr.rel (%p325) target = $region60
        $region59: #{tpu_custom_call.1} parent=47 // pred_region
          %328 = dma.done [#allocation6], 1024
        $region60: #{tpu_custom_call.1} parent=47 // pred_fallthru
          _
        // Predicated region
        $region61: #{tpu_custom_call.1} parent=47 // pred_check
          %p329 = pneg %p166
        $region62: #{tpu_custom_call.1} parent=47 // pred_check_branch
          %331 = sbr.rel (%p329) target = $region64
        $region63: #{tpu_custom_call.1} parent=47 // pred_region
          %332 = dma.done [#allocation9], 1024
        $region64: #{tpu_custom_call.1} parent=47 // pred_fallthru
          _
        %s333 = sand.u32 %s48, 1
        %s334 = scalar_lea.sflag [#allocation3], %s333
        %s335 = sand.u32 %s48, 1
        %s336 = smul.addr %s335, 64
        %s337 = scalar_lea.vmem [#allocation2], %s336
        %p338 = pneg %p61
        %p339 = pneg %p58
        %p340 = pneg %p82
        %p341 = pneg %p79
        %p342 = pneg %p103
        %p343 = pneg %p100
        %p344 = pneg %p124
        %p345 = pneg %p121
        %p346 = pneg %p145
        %p347 = pneg %p142
        %p348 = pneg %p166
        %p349 = pneg %p163
        %p350 = pneg %p187
        %p351 = pneg %p184
        %p352 = pneg %p215
        %p353 = pneg %p212
        %s354 = sand.u32 %s202, 1
        %s355 = scalar_lea.sflag [#allocation4], %s354
        %s356 = sand.u32 %s202, 1
        %s357 = smul.addr %s356, 64
        %s358 = scalar_lea.vmem [#allocation10], %s357
        %s359 = smul.u32 8, %s31
        %s360 = smul.u32 8, %s31
        %v362 = vld [vmem:[%s316] sm:$0xff]
        %v363 = vld [vmem:[%s316 + $0x8] sm:$0xff]
        %v364 = vld [vmem:[%s316 + $0x10] sm:$0xff]
        %v365 = vld [vmem:[%s316 + $0x18] sm:$0xff]
        %v366 = vld [vmem:[%s316 + $0x20] sm:$0xff]
        %v367 = vld [vmem:[%s316 + $0x28] sm:$0xff]
        %v368 = vld [vmem:[%s316 + $0x30] sm:$0xff]
        %v369 = vld [vmem:[%s316 + $0x38] sm:$0xff]
        %v370 = vld [vmem:[#allocation5] sm:$0xff]
        %v371 = vld [vmem:[#allocation5 + $0x8] sm:$0xff]
        %v372 = vld [vmem:[#allocation5 + $0x10] sm:$0xff]
        %v373 = vld [vmem:[#allocation5 + $0x18] sm:$0xff]
        %v374 = vld [vmem:[#allocation5 + $0x20] sm:$0xff]
        %v375 = vld [vmem:[#allocation5 + $0x28] sm:$0xff]
        %v376 = vld [vmem:[#allocation5 + $0x30] sm:$0xff]
        %v377 = vld [vmem:[#allocation5 + $0x38] sm:$0xff]
        %v378 = vld [vmem:[#allocation5 + $0x40] sm:$0xff]
        %v379 = vld [vmem:[#allocation5 + $0x48] sm:$0xff]
        %v380 = vld [vmem:[#allocation5 + $0x50] sm:$0xff]
        %v381 = vld [vmem:[#allocation5 + $0x58] sm:$0xff]
        %v382 = vld [vmem:[#allocation5 + $0x60] sm:$0xff]
        %v383 = vld [vmem:[#allocation5 + $0x68] sm:$0xff]
        %v384 = vld [vmem:[#allocation5 + $0x70] sm:$0xff]
        %v385 = vld [vmem:[#allocation5 + $0x78] sm:$0xff]
        %v386 = vld [vmem:[#allocation5 + $0x80] sm:$0xff]
        %v387 = vld [vmem:[#allocation5 + $0x88] sm:$0xff]
        %v388 = vld [vmem:[#allocation5 + $0x90] sm:$0xff]
        %v389 = vld [vmem:[#allocation5 + $0x98] sm:$0xff]
        %v390 = vld [vmem:[#allocation5 + $0xa0] sm:$0xff]
        %v391 = vld [vmem:[#allocation5 + $0xa8] sm:$0xff]
        %v392 = vld [vmem:[#allocation5 + $0xb0] sm:$0xff]
        %v393 = vld [vmem:[#allocation5 + $0xb8] sm:$0xff]
        %v394 = vld [vmem:[#allocation5 + $0xc0] sm:$0xff]
        %v395 = vld [vmem:[#allocation5 + $0xc8] sm:$0xff]
        %v396 = vld [vmem:[#allocation5 + $0xd0] sm:$0xff]
        %v397 = vld [vmem:[#allocation5 + $0xd8] sm:$0xff]
        %v398 = vld [vmem:[#allocation5 + $0xe0] sm:$0xff]
        %v399 = vld [vmem:[#allocation5 + $0xe8] sm:$0xff]
        %v400 = vld [vmem:[#allocation5 + $0xf0] sm:$0xff]
        %v401 = vld [vmem:[#allocation5 + $0xf8] sm:$0xff]
        %v402 = vld [vmem:[#allocation5 + $0x100] sm:$0xff]
        %v403 = vld [vmem:[#allocation5 + $0x108] sm:$0xff]
        %v404 = vld [vmem:[#allocation5 + $0x110] sm:$0xff]
        %v405 = vld [vmem:[#allocation5 + $0x118] sm:$0xff]
        %v406 = vld [vmem:[#allocation5 + $0x120] sm:$0xff]
        %v407 = vld [vmem:[#allocation5 + $0x128] sm:$0xff]
        %v408 = vld [vmem:[#allocation5 + $0x130] sm:$0xff]
        %v409 = vld [vmem:[#allocation5 + $0x138] sm:$0xff]
        %v410 = vld [vmem:[#allocation5 + $0x140] sm:$0xff]
        %v411 = vld [vmem:[#allocation5 + $0x148] sm:$0xff]
        %v412 = vld [vmem:[#allocation5 + $0x150] sm:$0xff]
        %v413 = vld [vmem:[#allocation5 + $0x158] sm:$0xff]
        %v414 = vld [vmem:[#allocation5 + $0x160] sm:$0xff]
        %v415 = vld [vmem:[#allocation5 + $0x168] sm:$0xff]
        %v416 = vld [vmem:[#allocation5 + $0x170] sm:$0xff]
        %v417 = vld [vmem:[#allocation5 + $0x178] sm:$0xff]
        %v418 = vld [vmem:[#allocation5 + $0x180] sm:$0xff]
        %v419 = vld [vmem:[#allocation5 + $0x188] sm:$0xff]
        %v420 = vld [vmem:[#allocation5 + $0x190] sm:$0xff]
        %v421 = vld [vmem:[#allocation5 + $0x198] sm:$0xff]
        %v422 = vld [vmem:[#allocation5 + $0x1a0] sm:$0xff]
        %v423 = vld [vmem:[#allocation5 + $0x1a8] sm:$0xff]
        %v424 = vld [vmem:[#allocation5 + $0x1b0] sm:$0xff]
        %v425 = vld [vmem:[#allocation5 + $0x1b8] sm:$0xff]
        %v426 = vld [vmem:[#allocation5 + $0x1c0] sm:$0xff]
        %v427 = vld [vmem:[#allocation5 + $0x1c8] sm:$0xff]
        %v428 = vld [vmem:[#allocation5 + $0x1d0] sm:$0xff]
        %v429 = vld [vmem:[#allocation5 + $0x1d8] sm:$0xff]
        %v430 = vld [vmem:[#allocation5 + $0x1e0] sm:$0xff]
        %v431 = vld [vmem:[#allocation5 + $0x1e8] sm:$0xff]
        %v432 = vld [vmem:[#allocation5 + $0x1f0] sm:$0xff]
        %v433 = vld [vmem:[#allocation5 + $0x1f8] sm:$0xff]
        %v434 = vld [vmem:[%s2] sm:$0xf]
        %v436 = vlaneseq
        %v437 = vshrl.u32 %v436, 7
        %v438 = vsub.s32 0, %v437
        %v439 = vrot.slane %v434, %v438
        %v440 = vlaneseq
        %v441 = vshrl.u32 %v440, 7
        %v442 = vsub.s32 1, %v441
        %v443 = vrot.slane %v434, %v442
        %v444 = vlaneseq
        %v445 = vshrl.u32 %v444, 7
        %v446 = vsub.s32 2, %v445
        %v447 = vrot.slane %v434, %v446
        %v448 = vlaneseq
        %v449 = vshrl.u32 %v448, 7
        %v450 = vsub.s32 3, %v449
        %v451 = vrot.slane %v434, %v450
        %456 = vmatprep.subr.mxu0 %v371
        %457 = vmatpush1.msra.mxu0 %v370
        %458 = vmatprep.subr.mxu0 %v375
        %459 = vmatpush1.msra.mxu0 %v374
        %460 = vmatprep.subr.mxu0 %v379
        %461 = vmatpush1.msra.mxu0 %v378
        %462 = vmatprep.subr.mxu0 %v383
        %463 = vmatpush1.msra.mxu0 %v382
        %464 = vmatprep.subr.mxu0 %v387
        %465 = vmatpush1.msra.mxu0 %v386
        %466 = vmatprep.subr.mxu0 %v391
        %467 = vmatpush1.msra.mxu0 %v390
        %468 = vmatprep.subr.mxu0 %v395
        %469 = vmatpush1.msra.mxu0 %v394
        %470 = vmatprep.subr.mxu0 %v399
        %471 = vmatpush1.msra.mxu0 %v398
        %472 = vmatprep.subr.mxu0 %v403
        %473 = vmatpush1.msra.mxu0 %v402
        %474 = vmatprep.subr.mxu0 %v407
        %475 = vmatpush1.msra.mxu0 %v406
        %476 = vmatprep.subr.mxu0 %v411
        %477 = vmatpush1.msra.mxu0 %v410
        %478 = vmatprep.subr.mxu0 %v415
        %479 = vmatpush1.msra.mxu0 %v414
        %480 = vmatprep.subr.mxu0 %v419
        %481 = vmatpush1.msra.mxu0 %v418
        %482 = vmatprep.subr.mxu0 %v423
        %483 = vmatpush1.msra.mxu0 %v422
        %484 = vmatprep.subr.mxu0 %v427
        %485 = vmatpush1.msra.mxu0 %v426
        %486 = vmatprep.subr.mxu0 %v431
        %487 = vmatpush1.msra.mxu0 %v430
        %488 = vmatprep.subr.mxu0 0.0
        %489 = vmatpush1.msra.mxu0 0.0
        %490 = vmatprep.subr.mxu0 0.0
        %491 = vmatpush1.msra.mxu0 0.0
        %492 = vmatprep.subr.mxu0 0.0
        %493 = vmatpush1.msra.mxu0 0.0
        %494 = vmatprep.subr.mxu0 0.0
        %495 = vmatpush1.msra.mxu0 0.0
        %496 = vmatprep.subr.mxu0 0.0
        %497 = vmatpush1.msra.mxu0 0.0
        %498 = vmatprep.subr.mxu0 0.0
        %499 = vmatpush1.msra.mxu0 0.0
        %500 = vmatprep.subr.mxu0 0.0
        %501 = vmatpush1.msra.mxu0 0.0
        %502 = vmatprep.subr.mxu0 0.0
        %503 = vmatpush1.msra.mxu0 0.0
        %504 = vmatprep.subr.mxu0 0.0
        %505 = vmatpush1.msra.mxu0 0.0
        %506 = vmatprep.subr.mxu0 0.0
        %507 = vmatpush1.msra.mxu0 0.0
        %508 = vmatprep.subr.mxu0 0.0
        %509 = vmatpush1.msra.mxu0 0.0
        %510 = vmatprep.subr.mxu0 0.0
        %511 = vmatpush1.msra.mxu0 0.0
        %512 = vmatprep.subr.mxu0 0.0
        %513 = vmatpush1.msra.mxu0 0.0
        %514 = vmatprep.subr.mxu0 0.0
        %515 = vmatpush1.msra.mxu0 0.0
        %516 = vmatprep.subr.mxu0 0.0
        %517 = vmatpush1.msra.mxu0 0.0
        %518 = vmatprep.subr.mxu0 0.0
        %519 = vmatpush1.msra.mxu0 0.0
        %520 = vmatprep.mubr.f32.mxu0 0.0
        %521 = vmatmul.mubr.f32.gmra.mrb[0].mxu0 %v362
        %v522 = vpop.f32.mrb[0].mxu0
        %v523 = vadd.f32 %v439, %v522
        %v524 = vpop.f32.mrb[0].mxu0
        %v525 = vadd.f32 %v443, %v524
        %526 = vmatprep.mubr.f32.mxu0 0.0
        %527 = vmatmul.mubr.f32.gmra.mrb[0].mxu0 %v363
        %v528 = vpop.f32.mrb[0].mxu0
        %v529 = vadd.f32 %v439, %v528
        %v530 = vpop.f32.mrb[0].mxu0
        %v531 = vadd.f32 %v443, %v530
        %532 = vmatprep.mubr.f32.mxu0 0.0
        %533 = vmatmul.mubr.f32.gmra.mrb[0].mxu0 %v364
        %v534 = vpop.f32.mrb[0].mxu0
        %v535 = vadd.f32 %v439, %v534
        %v536 = vpop.f32.mrb[0].mxu0
        %v537 = vadd.f32 %v443, %v536
        %538 = vmatprep.mubr.f32.mxu0 0.0
        %539 = vmatmul.mubr.f32.gmra.mrb[0].mxu0 %v365
        %v540 = vpop.f32.mrb[0].mxu0
        %v541 = vadd.f32 %v439, %v540
        %v542 = vpop.f32.mrb[0].mxu0
        %v543 = vadd.f32 %v443, %v542
        %544 = vmatprep.mubr.f32.mxu0 0.0
        %545 = vmatmul.mubr.f32.gmra.mrb[0].mxu0 %v366
        %v546 = vpop.f32.mrb[0].mxu0
        %v547 = vadd.f32 %v439, %v546
        %v548 = vpop.f32.mrb[0].mxu0
        %v549 = vadd.f32 %v443, %v548
        %550 = vmatprep.mubr.f32.mxu0 0.0
        %551 = vmatmul.mubr.f32.gmra.mrb[0].mxu0 %v367
        %v552 = vpop.f32.mrb[0].mxu0
        %v553 = vadd.f32 %v439, %v552
        %v554 = vpop.f32.mrb[0].mxu0
        %v555 = vadd.f32 %v443, %v554
        %556 = vmatprep.mubr.f32.mxu0 0.0
        %557 = vmatmul.mubr.f32.gmra.mrb[0].mxu0 %v368
        %v558 = vpop.f32.mrb[0].mxu0
        %v559 = vadd.f32 %v439, %v558
        %v560 = vpop.f32.mrb[0].mxu0
        %v561 = vadd.f32 %v443, %v560
        %562 = vmatprep.mubr.f32.mxu0 0.0
        %563 = vmatmul.mubr.f32.gmra.mrb[0].mxu0 %v369
        %v564 = vpop.f32.mrb[0].mxu0
        %v565 = vadd.f32 %v439, %v564
        %v566 = vpop.f32.mrb[0].mxu0
        %v567 = vadd.f32 %v443, %v566
        %568 = vdwg.mxu0
        %569 = vmatprep.subr.mxu0 %v373
        %570 = vmatpush1.msra.mxu0 %v372
        %571 = vmatprep.subr.mxu0 %v377
        %572 = vmatpush1.msra.mxu0 %v376
        %573 = vmatprep.subr.mxu0 %v381
        %574 = vmatpush1.msra.mxu0 %v380
        %575 = vmatprep.subr.mxu0 %v385
        %576 = vmatpush1.msra.mxu0 %v384
        %577 = vmatprep.subr.mxu0 %v389
        %578 = vmatpush1.msra.mxu0 %v388
        %579 = vmatprep.subr.mxu0 %v393
        %580 = vmatpush1.msra.mxu0 %v392
        %581 = vmatprep.subr.mxu0 %v397
        %582 = vmatpush1.msra.mxu0 %v396
        %583 = vmatprep.subr.mxu0 %v401
        %584 = vmatpush1.msra.mxu0 %v400
        %585 = vmatprep.subr.mxu0 %v405
        %586 = vmatpush1.msra.mxu0 %v404
        %587 = vmatprep.subr.mxu0 %v409
        %588 = vmatpush1.msra.mxu0 %v408
        %589 = vmatprep.subr.mxu0 %v413
        %590 = vmatpush1.msra.mxu0 %v412
        %591 = vmatprep.subr.mxu0 %v417
        %592 = vmatpush1.msra.mxu0 %v416
        %593 = vmatprep.subr.mxu0 %v421
        %594 = vmatpush1.msra.mxu0 %v420
        %595 = vmatprep.subr.mxu0 %v425
        %596 = vmatpush1.msra.mxu0 %v424
        %597 = vmatprep.subr.mxu0 %v429
        %598 = vmatpush1.msra.mxu0 %v428
        %599 = vmatprep.subr.mxu0 %v433
        %600 = vmatpush1.msra.mxu0 %v432
        %601 = vmatprep.subr.mxu0 0.0
        %602 = vmatpush1.msra.mxu0 0.0
        %603 = vmatprep.subr.mxu0 0.0
        %604 = vmatpush1.msra.mxu0 0.0
        %605 = vmatprep.subr.mxu0 0.0
        %606 = vmatpush1.msra.mxu0 0.0
        %607 = vmatprep.subr.mxu0 0.0
        %608 = vmatpush1.msra.mxu0 0.0
        %609 = vmatprep.subr.mxu0 0.0
        %610 = vmatpush1.msra.mxu0 0.0
        %611 = vmatprep.subr.mxu0 0.0
        %612 = vmatpush1.msra.mxu0 0.0
        %613 = vmatprep.subr.mxu0 0.0
        %614 = vmatpush1.msra.mxu0 0.0
        %615 = vmatprep.subr.mxu0 0.0
        %616 = vmatpush1.msra.mxu0 0.0
        %617 = vmatprep.subr.mxu0 0.0
        %618 = vmatpush1.msra.mxu0 0.0
        %619 = vmatprep.subr.mxu0 0.0
        %620 = vmatpush1.msra.mxu0 0.0
        %621 = vmatprep.subr.mxu0 0.0
        %622 = vmatpush1.msra.mxu0 0.0
        %623 = vmatprep.subr.mxu0 0.0
        %624 = vmatpush1.msra.mxu0 0.0
        %625 = vmatprep.subr.mxu0 0.0
        %626 = vmatpush1.msra.mxu0 0.0
        %627 = vmatprep.subr.mxu0 0.0
        %628 = vmatpush1.msra.mxu0 0.0
        %629 = vmatprep.subr.mxu0 0.0
        %630 = vmatpush1.msra.mxu0 0.0
        %631 = vmatprep.subr.mxu0 0.0
        %632 = vmatpush1.msra.mxu0 0.0
        %633 = vmatprep.mubr.f32.mxu0 0.0
        %634 = vmatmul.mubr.f32.gmra.mrb[0].mxu0 %v362
        %v635 = vpop.f32.mrb[0].mxu0
        %v636 = vadd.f32 %v447, %v635
        %v637 = vpop.f32.mrb[0].mxu0
        %v638 = vadd.f32 %v451, %v637
        %639 = vmatprep.mubr.f32.mxu0 0.0
        %640 = vmatmul.mubr.f32.gmra.mrb[0].mxu0 %v363
        %v641 = vpop.f32.mrb[0].mxu0
        %v642 = vadd.f32 %v447, %v641
        %v643 = vpop.f32.mrb[0].mxu0
        %v644 = vadd.f32 %v451, %v643
        %645 = vmatprep.mubr.f32.mxu0 0.0
        %646 = vmatmul.mubr.f32.gmra.mrb[0].mxu0 %v364
        %v647 = vpop.f32.mrb[0].mxu0
        %v648 = vadd.f32 %v447, %v647
        %v649 = vpop.f32.mrb[0].mxu0
        %v650 = vadd.f32 %v451, %v649
        %651 = vmatprep.mubr.f32.mxu0 0.0
        %652 = vmatmul.mubr.f32.gmra.mrb[0].mxu0 %v365
        %v653 = vpop.f32.mrb[0].mxu0
        %v654 = vadd.f32 %v447, %v653
        %v655 = vpop.f32.mrb[0].mxu0
        %v656 = vadd.f32 %v451, %v655
        %657 = vmatprep.mubr.f32.mxu0 0.0
        %658 = vmatmul.mubr.f32.gmra.mrb[0].mxu0 %v366
        %v659 = vpop.f32.mrb[0].mxu0
        %v660 = vadd.f32 %v447, %v659
        %v661 = vpop.f32.mrb[0].mxu0
        %v662 = vadd.f32 %v451, %v661
        %663 = vmatprep.mubr.f32.mxu0 0.0
        %664 = vmatmul.mubr.f32.gmra.mrb[0].mxu0 %v367
        %v665 = vpop.f32.mrb[0].mxu0
        %v666 = vadd.f32 %v447, %v665
        %v667 = vpop.f32.mrb[0].mxu0
        %v668 = vadd.f32 %v451, %v667
        %669 = vmatprep.mubr.f32.mxu0 0.0
        %670 = vmatmul.mubr.f32.gmra.mrb[0].mxu0 %v368
        %v671 = vpop.f32.mrb[0].mxu0
        %v672 = vadd.f32 %v447, %v671
        %v673 = vpop.f32.mrb[0].mxu0
        %v674 = vadd.f32 %v451, %v673
        %675 = vmatprep.mubr.f32.mxu0 0.0
        %676 = vmatmul.mubr.f32.gmra.mrb[0].mxu0 %v369
        %v677 = vpop.f32.mrb[0].mxu0
        %v678 = vadd.f32 %v447, %v677
        %v679 = vpop.f32.mrb[0].mxu0
        %v680 = vadd.f32 %v451, %v679
        %681 = vdwg.mxu0
        %v682 = vand.u32 2147483647, %v523
        %vm683 = vcmp.le.f32.partialorder %v682, 0.7853982
        %vm684 = vcmp.lt.s32.totalorder %v523, 0
        %v685 = vand.u32 %v523, 2139095040
        %v686 = vshrl.u32 %v685, 23
        %v687 = vsub.s32 %v686, 127
        %v688 = vand.u32 2147483647, %v523
        %v689 = vand.u32 %v688, 8388607
        %v690 = vor.u32 %v689, 8388608
        %v691 = vsub.s32 0, %v690
        %v692 = vadd.s32 %v687, 1
        %vm693 = vcmp.gt.s32.totalorder %v692, 0
        %v694 = vsel %vm693, %v692, 0
        %v695 = vshrl.u32 %v694, 5
        %v696 = vand.u32 %v694, 31
        %v697 = vsub.s32 32, %v696
        %v698 = vshrl.u32 683565275, %v697
        %v699 = vshll.u32 683565275, %v696
        %v700 = vshrl.u32 2475754826, %v697
        %v701 = vor.u32 %v699, %v700
        %v702 = vshll.u32 2475754826, %v696
        %v703 = vshrl.u32 2131351028, %v697
        %v704 = vor.u32 %v702, %v703
        %v705 = vshll.u32 2131351028, %v696
        %v706 = vshrl.u32 2102212464, %v697
        %v707 = vor.u32 %v705, %v706
        %v708 = vshll.u32 2102212464, %v696
        %v709 = vshrl.u32 920167782, %v697
        %v710 = vor.u32 %v708, %v709
        %v711 = vshll.u32 920167782, %v696
        %v712 = vshrl.u32 1326507024, %v697
        %v713 = vor.u32 %v711, %v712
        %vm714 = vcmp.lt.s32.totalorder %v695, 1
        %vm715 = vcmp.lt.s32.totalorder %v695, 2
        %vm716 = vcmp.lt.s32.totalorder %v695, 3
        %vm717 = vcmp.lt.s32.totalorder %v695, 4
        %v718 = vsel %vm714, %v698, %v701
        %v719 = vsel %vm717, %v707, 2102212464
        %v720 = vsel %vm716, %v704, %v719
        %v721 = vsel %vm715, %v718, %v720
        %v722 = vsel %vm714, %v701, %v704
        %v723 = vsel %vm717, %v710, 920167782
        %v724 = vsel %vm716, %v707, %v723
        %v725 = vsel %vm715, %v722, %v724
        %v726 = vsel %vm714, %v704, %v707
        %v727 = vsel %vm717, %v713, 1326507024
        %v728 = vsel %vm716, %v710, %v727
        %v729 = vsel %vm715, %v726, %v728
        %v730 = vshll.u32 %v690, 8
        %v731 = vmul.u32.u64.compose %v730, %v729
        %v732 = vextract.low.u32 %v731
        %v733 = vextract.high.u32 %v731
        %v734 = vmul.u32.u64.compose %v730, %v725
        %v735 = vextract.low.u32 %v734
        %v736 = vextract.high.u32 %v734
        %v737 = vmul.u32 %v730, %v721
        %v738 = vadd.s32 %v733, %v735
        %vm739 = vc.u32 %v733, %v735
        %v740 = vadd.s32 %v736, 1
        %v741 = vsel %vm739, %v740, %v736
        %v742 = vadd.s32 %v737, %v741
        %v743 = vadd.s32 %v742, 536870912
        %v744 = vshrl.u32 %v743, 30
        %v745 = vshll.u32 %v744, 30
        %v746 = vsub.s32 %v742, %v745
        %vm747 = vcmp.lt.s32.totalorder %v746, 0
        %v748 = vsub.s32 0, %v746
        %v749 = vsel %vm747, %v748, %v746
        %v750 = vclz %v749
        %v751 = vsub.s32 %v750, 2
        %vm752 = vcmp.gt.s32.totalorder 0, %v751
        %v753 = vsel %vm752, 0, %v751
        %v754 = vsub.s32 32, %v753
        %v755 = vshll.u32 %v746, %v753
        %v756 = vshrl.u32 %v738, %v754
        %v757 = vor.u32 %v755, %v756
        %v758 = vsub.s32 4294967266, %v753
        %v759 = vadd.s32 %v758, 127
        %v760 = vshll.u32 %v759, 23
        %v761 = vor.u32 4788187, %v760
        %v762 = vand.u32 2147483647, %v761
        %v764 = vcvt.s32.f32 %v757
        %v765 = vmul.f32 %v764, %v762
        %v766 = vxor.u32 %v765, 2147483648
        %v767 = vsel %vm684, %v766, %v765
        %v768 = vsub.s32 4, %v744
        %v769 = vsel %vm684, %v768, %v744
        %v770 = vsel %vm683, %v523, %v767
        %v771 = vsel %vm683, 0, %v769
        %v772 = vcosq.f32.pop %v770
        %v773 = vsinq.f32.pop %v770
        %vm774 = vweird.f32 %v523
        %v775 = vadd.s32 %v771, 3
        %v776 = vand.u32 %v775, 3
        %vm777 = vcmp.lt.s32.totalorder %v776, 2
        %vm778 = vcmp.eq.s32.totalorder %v776, 0
        %v779 = vxor.u32 %v773, 2147483648
        %v780 = vsel %vm778, %v772, %v779
        %vm781 = vcmp.eq.s32.totalorder %v776, 2
        %v782 = vxor.u32 %v772, 2147483648
        %v783 = vsel %vm781, %v782, %v773
        %v784 = vsel %vm777, %v780, %v783
        %v785 = vsel %vm774, nan, %v784
        %v786 = vand.u32 2147483647, %v525
        %vm787 = vcmp.le.f32.partialorder %v786, 0.7853982
        %vm788 = vcmp.lt.s32.totalorder %v525, 0
        %v789 = vand.u32 %v525, 2139095040
        %v790 = vshrl.u32 %v789, 23
        %v791 = vsub.s32 %v790, 127
        %v792 = vand.u32 2147483647, %v525
        %v793 = vand.u32 %v792, 8388607
        %v794 = vor.u32 %v793, 8388608
        %v795 = vsub.s32 0, %v794
        %v796 = vadd.s32 %v791, 1
        %vm797 = vcmp.gt.s32.totalorder %v796, 0
        %v798 = vsel %vm797, %v796, 0
        %v799 = vshrl.u32 %v798, 5
        %v800 = vand.u32 %v798, 31
        %v801 = vsub.s32 32, %v800
        %v802 = vshrl.u32 683565275, %v801
        %v803 = vshll.u32 683565275, %v800
        %v804 = vshrl.u32 2475754826, %v801
        %v805 = vor.u32 %v803, %v804
        %v806 = vshll.u32 2475754826, %v800
        %v807 = vshrl.u32 2131351028, %v801
        %v808 = vor.u32 %v806, %v807
        %v809 = vshll.u32 2131351028, %v800
        %v810 = vshrl.u32 2102212464, %v801
        %v811 = vor.u32 %v809, %v810
        %v812 = vshll.u32 2102212464, %v800
        %v813 = vshrl.u32 920167782, %v801
        %v814 = vor.u32 %v812, %v813
        %v815 = vshll.u32 920167782, %v800
        %v816 = vshrl.u32 1326507024, %v801
        %v817 = vor.u32 %v815, %v816
        %vm818 = vcmp.lt.s32.totalorder %v799, 1
        %vm819 = vcmp.lt.s32.totalorder %v799, 2
        %vm820 = vcmp.lt.s32.totalorder %v799, 3
        %vm821 = vcmp.lt.s32.totalorder %v799, 4
        %v822 = vsel %vm818, %v802, %v805
        %v823 = vsel %vm821, %v811, 2102212464
        %v824 = vsel %vm820, %v808, %v823
        %v825 = vsel %vm819, %v822, %v824
        %v826 = vsel %vm818, %v805, %v808
        %v827 = vsel %vm821, %v814, 920167782
        %v828 = vsel %vm820, %v811, %v827
        %v829 = vsel %vm819, %v826, %v828
        %v830 = vsel %vm818, %v808, %v811
        %v831 = vsel %vm821, %v817, 1326507024
        %v832 = vsel %vm820, %v814, %v831
        %v833 = vsel %vm819, %v830, %v832
        %v834 = vshll.u32 %v794, 8
        %v835 = vmul.u32.u64.compose %v834, %v833
        %v836 = vextract.low.u32 %v835
        %v837 = vextract.high.u32 %v835
        %v838 = vmul.u32.u64.compose %v834, %v829
        %v839 = vextract.low.u32 %v838
        %v840 = vextract.high.u32 %v838
        %v841 = vmul.u32 %v834, %v825
        %v842 = vadd.s32 %v837, %v839
        %vm843 = vc.u32 %v837, %v839
        %v844 = vadd.s32 %v840, 1
        %v845 = vsel %vm843, %v844, %v840
        %v846 = vadd.s32 %v841, %v845
        %v847 = vadd.s32 %v846, 536870912
        %v848 = vshrl.u32 %v847, 30
        %v849 = vshll.u32 %v848, 30
        %v850 = vsub.s32 %v846, %v849
        %vm851 = vcmp.lt.s32.totalorder %v850, 0
        %v852 = vsub.s32 0, %v850
        %v853 = vsel %vm851, %v852, %v850
        %v854 = vclz %v853
        %v855 = vsub.s32 %v854, 2
        %vm856 = vcmp.gt.s32.totalorder 0, %v855
        %v857 = vsel %vm856, 0, %v855
        %v858 = vsub.s32 32, %v857
        %v859 = vshll.u32 %v850, %v857
        %v860 = vshrl.u32 %v842, %v858
        %v861 = vor.u32 %v859, %v860
        %v862 = vsub.s32 4294967266, %v857
        %v863 = vadd.s32 %v862, 127
        %v864 = vshll.u32 %v863, 23
        %v865 = vor.u32 4788187, %v864
        %v866 = vand.u32 2147483647, %v865
        %v868 = vcvt.s32.f32 %v861
        %v869 = vmul.f32 %v868, %v866
        %v870 = vxor.u32 %v869, 2147483648
        %v871 = vsel %vm788, %v870, %v869
        %v872 = vsub.s32 4, %v848
        %v873 = vsel %vm788, %v872, %v848
        %v874 = vsel %vm787, %v525, %v871
        %v875 = vsel %vm787, 0, %v873
        %v876 = vcosq.f32.pop %v874
        %v877 = vsinq.f32.pop %v874
        %vm878 = vweird.f32 %v525
        %v879 = vadd.s32 %v875, 3
        %v880 = vand.u32 %v879, 3
        %vm881 = vcmp.lt.s32.totalorder %v880, 2
        %vm882 = vcmp.eq.s32.totalorder %v880, 0
        %v883 = vxor.u32 %v877, 2147483648
        %v884 = vsel %vm882, %v876, %v883
        %vm885 = vcmp.eq.s32.totalorder %v880, 2
        %v886 = vxor.u32 %v876, 2147483648
        %v887 = vsel %vm885, %v886, %v877
        %v888 = vsel %vm881, %v884, %v887
        %v889 = vsel %vm878, nan, %v888
        %v890 = vand.u32 2147483647, %v636
        %vm891 = vcmp.le.f32.partialorder %v890, 0.7853982
        %vm892 = vcmp.lt.s32.totalorder %v636, 0
        %v893 = vand.u32 %v636, 2139095040
        %v894 = vshrl.u32 %v893, 23
        %v895 = vsub.s32 %v894, 127
        %v896 = vand.u32 2147483647, %v636
        %v897 = vand.u32 %v896, 8388607
        %v898 = vor.u32 %v897, 8388608
        %v899 = vsub.s32 0, %v898
        %v900 = vadd.s32 %v895, 1
        %vm901 = vcmp.gt.s32.totalorder %v900, 0
        %v902 = vsel %vm901, %v900, 0
        %v903 = vshrl.u32 %v902, 5
        %v904 = vand.u32 %v902, 31
        %v905 = vsub.s32 32, %v904
        %v906 = vshrl.u32 683565275, %v905
        %v907 = vshll.u32 683565275, %v904
        %v908 = vshrl.u32 2475754826, %v905
        %v909 = vor.u32 %v907, %v908
        %v910 = vshll.u32 2475754826, %v904
        %v911 = vshrl.u32 2131351028, %v905
        %v912 = vor.u32 %v910, %v911
        %v913 = vshll.u32 2131351028, %v904
        %v914 = vshrl.u32 2102212464, %v905
        %v915 = vor.u32 %v913, %v914
        %v916 = vshll.u32 2102212464, %v904
        %v917 = vshrl.u32 920167782, %v905
        %v918 = vor.u32 %v916, %v917
        %v919 = vshll.u32 920167782, %v904
        %v920 = vshrl.u32 1326507024, %v905
        %v921 = vor.u32 %v919, %v920
        %vm922 = vcmp.lt.s32.totalorder %v903, 1
        %vm923 = vcmp.lt.s32.totalorder %v903, 2
        %vm924 = vcmp.lt.s32.totalorder %v903, 3
        %vm925 = vcmp.lt.s32.totalorder %v903, 4
        %v926 = vsel %vm922, %v906, %v909
        %v927 = vsel %vm925, %v915, 2102212464
        %v928 = vsel %vm924, %v912, %v927
        %v929 = vsel %vm923, %v926, %v928
        %v930 = vsel %vm922, %v909, %v912
        %v931 = vsel %vm925, %v918, 920167782
        %v932 = vsel %vm924, %v915, %v931
        %v933 = vsel %vm923, %v930, %v932
        %v934 = vsel %vm922, %v912, %v915
        %v935 = vsel %vm925, %v921, 1326507024
        %v936 = vsel %vm924, %v918, %v935
        %v937 = vsel %vm923, %v934, %v936
        %v938 = vshll.u32 %v898, 8
        %v939 = vmul.u32.u64.compose %v938, %v937
        %v940 = vextract.low.u32 %v939
        %v941 = vextract.high.u32 %v939
        %v942 = vmul.u32.u64.compose %v938, %v933
        %v943 = vextract.low.u32 %v942
        %v944 = vextract.high.u32 %v942
        %v945 = vmul.u32 %v938, %v929
        %v946 = vadd.s32 %v941, %v943
        %vm947 = vc.u32 %v941, %v943
        %v948 = vadd.s32 %v944, 1
        %v949 = vsel %vm947, %v948, %v944
        %v950 = vadd.s32 %v945, %v949
        %v951 = vadd.s32 %v950, 536870912
        %v952 = vshrl.u32 %v951, 30
        %v953 = vshll.u32 %v952, 30
        %v954 = vsub.s32 %v950, %v953
        %vm955 = vcmp.lt.s32.totalorder %v954, 0
        %v956 = vsub.s32 0, %v954
        %v957 = vsel %vm955, %v956, %v954
        %v958 = vclz %v957
        %v959 = vsub.s32 %v958, 2
        %vm960 = vcmp.gt.s32.totalorder 0, %v959
        %v961 = vsel %vm960, 0, %v959
        %v962 = vsub.s32 32, %v961
        %v963 = vshll.u32 %v954, %v961
        %v964 = vshrl.u32 %v946, %v962
        %v965 = vor.u32 %v963, %v964
        %v966 = vsub.s32 4294967266, %v961
        %v967 = vadd.s32 %v966, 127
        %v968 = vshll.u32 %v967, 23
        %v969 = vor.u32 4788187, %v968
        %v970 = vand.u32 2147483647, %v969
        %v972 = vcvt.s32.f32 %v965
        %v973 = vmul.f32 %v972, %v970
        %v974 = vxor.u32 %v973, 2147483648
        %v975 = vsel %vm892, %v974, %v973
        %v976 = vsub.s32 4, %v952
        %v977 = vsel %vm892, %v976, %v952
        %v978 = vsel %vm891, %v636, %v975
        %v979 = vsel %vm891, 0, %v977
        %v980 = vcosq.f32.pop %v978
        %v981 = vsinq.f32.pop %v978
        %vm982 = vweird.f32 %v636
        %v983 = vadd.s32 %v979, 3
        %v984 = vand.u32 %v983, 3
        %vm985 = vcmp.lt.s32.totalorder %v984, 2
        %vm986 = vcmp.eq.s32.totalorder %v984, 0
        %v987 = vxor.u32 %v981, 2147483648
        %v988 = vsel %vm986, %v980, %v987
        %vm989 = vcmp.eq.s32.totalorder %v984, 2
        %v990 = vxor.u32 %v980, 2147483648
        %v991 = vsel %vm989, %v990, %v981
        %v992 = vsel %vm985, %v988, %v991
        %v993 = vsel %vm982, nan, %v992
        %v994 = vand.u32 2147483647, %v638
        %vm995 = vcmp.le.f32.partialorder %v994, 0.7853982
        %vm996 = vcmp.lt.s32.totalorder %v638, 0
        %v997 = vand.u32 %v638, 2139095040
        %v998 = vshrl.u32 %v997, 23
        %v999 = vsub.s32 %v998, 127
        %v1000 = vand.u32 2147483647, %v638
        %v1001 = vand.u32 %v1000, 8388607
        %v1002 = vor.u32 %v1001, 8388608
        %v1003 = vsub.s32 0, %v1002
        %v1004 = vadd.s32 %v999, 1
        %vm1005 = vcmp.gt.s32.totalorder %v1004, 0
        %v1006 = vsel %vm1005, %v1004, 0
        %v1007 = vshrl.u32 %v1006, 5
        %v1008 = vand.u32 %v1006, 31
        %v1009 = vsub.s32 32, %v1008
        %v1010 = vshrl.u32 683565275, %v1009
        %v1011 = vshll.u32 683565275, %v1008
        %v1012 = vshrl.u32 2475754826, %v1009
        %v1013 = vor.u32 %v1011, %v1012
        %v1014 = vshll.u32 2475754826, %v1008
        %v1015 = vshrl.u32 2131351028, %v1009
        %v1016 = vor.u32 %v1014, %v1015
        %v1017 = vshll.u32 2131351028, %v1008
        %v1018 = vshrl.u32 2102212464, %v1009
        %v1019 = vor.u32 %v1017, %v1018
        %v1020 = vshll.u32 2102212464, %v1008
        %v1021 = vshrl.u32 920167782, %v1009
        %v1022 = vor.u32 %v1020, %v1021
        %v1023 = vshll.u32 920167782, %v1008
        %v1024 = vshrl.u32 1326507024, %v1009
        %v1025 = vor.u32 %v1023, %v1024
        %vm1026 = vcmp.lt.s32.totalorder %v1007, 1
        %vm1027 = vcmp.lt.s32.totalorder %v1007, 2
        %vm1028 = vcmp.lt.s32.totalorder %v1007, 3
        %vm1029 = vcmp.lt.s32.totalorder %v1007, 4
        %v1030 = vsel %vm1026, %v1010, %v1013
        %v1031 = vsel %vm1029, %v1019, 2102212464
        %v1032 = vsel %vm1028, %v1016, %v1031
        %v1033 = vsel %vm1027, %v1030, %v1032
        %v1034 = vsel %vm1026, %v1013, %v1016
        %v1035 = vsel %vm1029, %v1022, 920167782
        %v1036 = vsel %vm1028, %v1019, %v1035
        %v1037 = vsel %vm1027, %v1034, %v1036
        %v1038 = vsel %vm1026, %v1016, %v1019
        %v1039 = vsel %vm1029, %v1025, 1326507024
        %v1040 = vsel %vm1028, %v1022, %v1039
        %v1041 = vsel %vm1027, %v1038, %v1040
        %v1042 = vshll.u32 %v1002, 8
        %v1043 = vmul.u32.u64.compose %v1042, %v1041
        %v1044 = vextract.low.u32 %v1043
        %v1045 = vextract.high.u32 %v1043
        %v1046 = vmul.u32.u64.compose %v1042, %v1037
        %v1047 = vextract.low.u32 %v1046
        %v1048 = vextract.high.u32 %v1046
        %v1049 = vmul.u32 %v1042, %v1033
        %v1050 = vadd.s32 %v1045, %v1047
        %vm1051 = vc.u32 %v1045, %v1047
        %v1052 = vadd.s32 %v1048, 1
        %v1053 = vsel %vm1051, %v1052, %v1048
        %v1054 = vadd.s32 %v1049, %v1053
        %v1055 = vadd.s32 %v1054, 536870912
        %v1056 = vshrl.u32 %v1055, 30
        %v1057 = vshll.u32 %v1056, 30
        %v1058 = vsub.s32 %v1054, %v1057
        %vm1059 = vcmp.lt.s32.totalorder %v1058, 0
        %v1060 = vsub.s32 0, %v1058
        %v1061 = vsel %vm1059, %v1060, %v1058
        %v1062 = vclz %v1061
        %v1063 = vsub.s32 %v1062, 2
        %vm1064 = vcmp.gt.s32.totalorder 0, %v1063
        %v1065 = vsel %vm1064, 0, %v1063
        %v1066 = vsub.s32 32, %v1065
        %v1067 = vshll.u32 %v1058, %v1065
        %v1068 = vshrl.u32 %v1050, %v1066
        %v1069 = vor.u32 %v1067, %v1068
        %v1070 = vsub.s32 4294967266, %v1065
        %v1071 = vadd.s32 %v1070, 127
        %v1072 = vshll.u32 %v1071, 23
        %v1073 = vor.u32 4788187, %v1072
        %v1074 = vand.u32 2147483647, %v1073
        %v1076 = vcvt.s32.f32 %v1069
        %v1077 = vmul.f32 %v1076, %v1074
        %v1078 = vxor.u32 %v1077, 2147483648
        %v1079 = vsel %vm996, %v1078, %v1077
        %v1080 = vsub.s32 4, %v1056
        %v1081 = vsel %vm996, %v1080, %v1056
        %v1082 = vsel %vm995, %v638, %v1079
        %v1083 = vsel %vm995, 0, %v1081
        %v1084 = vcosq.f32.pop %v1082
        %v1085 = vsinq.f32.pop %v1082
        %vm1086 = vweird.f32 %v638
        %v1087 = vadd.s32 %v1083, 3
        %v1088 = vand.u32 %v1087, 3
        %vm1089 = vcmp.lt.s32.totalorder %v1088, 2
        %vm1090 = vcmp.eq.s32.totalorder %v1088, 0
        %v1091 = vxor.u32 %v1085, 2147483648
        %v1092 = vsel %vm1090, %v1084, %v1091
        %vm1093 = vcmp.eq.s32.totalorder %v1088, 2
        %v1094 = vxor.u32 %v1084, 2147483648
        %v1095 = vsel %vm1093, %v1094, %v1085
        %v1096 = vsel %vm1089, %v1092, %v1095
        %v1097 = vsel %vm1086, nan, %v1096
        %v1098 = vand.u32 2147483647, %v529
        %vm1099 = vcmp.le.f32.partialorder %v1098, 0.7853982
        %vm1100 = vcmp.lt.s32.totalorder %v529, 0
        %v1101 = vand.u32 %v529, 2139095040
        %v1102 = vshrl.u32 %v1101, 23
        %v1103 = vsub.s32 %v1102, 127
        %v1104 = vand.u32 2147483647, %v529
        %v1105 = vand.u32 %v1104, 8388607
        %v1106 = vor.u32 %v1105, 8388608
        %v1107 = vsub.s32 0, %v1106
        %v1108 = vadd.s32 %v1103, 1
        %vm1109 = vcmp.gt.s32.totalorder %v1108, 0
        %v1110 = vsel %vm1109, %v1108, 0
        %v1111 = vshrl.u32 %v1110, 5
        %v1112 = vand.u32 %v1110, 31
        %v1113 = vsub.s32 32, %v1112
        %v1114 = vshrl.u32 683565275, %v1113
        %v1115 = vshll.u32 683565275, %v1112
        %v1116 = vshrl.u32 2475754826, %v1113
        %v1117 = vor.u32 %v1115, %v1116
        %v1118 = vshll.u32 2475754826, %v1112
        %v1119 = vshrl.u32 2131351028, %v1113
        %v1120 = vor.u32 %v1118, %v1119
        %v1121 = vshll.u32 2131351028, %v1112
        %v1122 = vshrl.u32 2102212464, %v1113
        %v1123 = vor.u32 %v1121, %v1122
        %v1124 = vshll.u32 2102212464, %v1112
        %v1125 = vshrl.u32 920167782, %v1113
        %v1126 = vor.u32 %v1124, %v1125
        %v1127 = vshll.u32 920167782, %v1112
        %v1128 = vshrl.u32 1326507024, %v1113
        %v1129 = vor.u32 %v1127, %v1128
        %vm1130 = vcmp.lt.s32.totalorder %v1111, 1
        %vm1131 = vcmp.lt.s32.totalorder %v1111, 2
        %vm1132 = vcmp.lt.s32.totalorder %v1111, 3
        %vm1133 = vcmp.lt.s32.totalorder %v1111, 4
        %v1134 = vsel %vm1130, %v1114, %v1117
        %v1135 = vsel %vm1133, %v1123, 2102212464
        %v1136 = vsel %vm1132, %v1120, %v1135
        %v1137 = vsel %vm1131, %v1134, %v1136
        %v1138 = vsel %vm1130, %v1117, %v1120
        %v1139 = vsel %vm1133, %v1126, 920167782
        %v1140 = vsel %vm1132, %v1123, %v1139
        %v1141 = vsel %vm1131, %v1138, %v1140
        %v1142 = vsel %vm1130, %v1120, %v1123
        %v1143 = vsel %vm1133, %v1129, 1326507024
        %v1144 = vsel %vm1132, %v1126, %v1143
        %v1145 = vsel %vm1131, %v1142, %v1144
        %v1146 = vshll.u32 %v1106, 8
        %v1147 = vmul.u32.u64.compose %v1146, %v1145
        %v1148 = vextract.low.u32 %v1147
        %v1149 = vextract.high.u32 %v1147
        %v1150 = vmul.u32.u64.compose %v1146, %v1141
        %v1151 = vextract.low.u32 %v1150
        %v1152 = vextract.high.u32 %v1150
        %v1153 = vmul.u32 %v1146, %v1137
        %v1154 = vadd.s32 %v1149, %v1151
        %vm1155 = vc.u32 %v1149, %v1151
        %v1156 = vadd.s32 %v1152, 1
        %v1157 = vsel %vm1155, %v1156, %v1152
        %v1158 = vadd.s32 %v1153, %v1157
        %v1159 = vadd.s32 %v1158, 536870912
        %v1160 = vshrl.u32 %v1159, 30
        %v1161 = vshll.u32 %v1160, 30
        %v1162 = vsub.s32 %v1158, %v1161
        %vm1163 = vcmp.lt.s32.totalorder %v1162, 0
        %v1164 = vsub.s32 0, %v1162
        %v1165 = vsel %vm1163, %v1164, %v1162
        %v1166 = vclz %v1165
        %v1167 = vsub.s32 %v1166, 2
        %vm1168 = vcmp.gt.s32.totalorder 0, %v1167
        %v1169 = vsel %vm1168, 0, %v1167
        %v1170 = vsub.s32 32, %v1169
        %v1171 = vshll.u32 %v1162, %v1169
        %v1172 = vshrl.u32 %v1154, %v1170
        %v1173 = vor.u32 %v1171, %v1172
        %v1174 = vsub.s32 4294967266, %v1169
        %v1175 = vadd.s32 %v1174, 127
        %v1176 = vshll.u32 %v1175, 23
        %v1177 = vor.u32 4788187, %v1176
        %v1178 = vand.u32 2147483647, %v1177
        %v1180 = vcvt.s32.f32 %v1173
        %v1181 = vmul.f32 %v1180, %v1178
        %v1182 = vxor.u32 %v1181, 2147483648
        %v1183 = vsel %vm1100, %v1182, %v1181
        %v1184 = vsub.s32 4, %v1160
        %v1185 = vsel %vm1100, %v1184, %v1160
        %v1186 = vsel %vm1099, %v529, %v1183
        %v1187 = vsel %vm1099, 0, %v1185
        %v1188 = vcosq.f32.pop %v1186
        %v1189 = vsinq.f32.pop %v1186
        %vm1190 = vweird.f32 %v529
        %v1191 = vadd.s32 %v1187, 3
        %v1192 = vand.u32 %v1191, 3
        %vm1193 = vcmp.lt.s32.totalorder %v1192, 2
        %vm1194 = vcmp.eq.s32.totalorder %v1192, 0
        %v1195 = vxor.u32 %v1189, 2147483648
        %v1196 = vsel %vm1194, %v1188, %v1195
        %vm1197 = vcmp.eq.s32.totalorder %v1192, 2
        %v1198 = vxor.u32 %v1188, 2147483648
        %v1199 = vsel %vm1197, %v1198, %v1189
        %v1200 = vsel %vm1193, %v1196, %v1199
        %v1201 = vsel %vm1190, nan, %v1200
        %v1202 = vand.u32 2147483647, %v531
        %vm1203 = vcmp.le.f32.partialorder %v1202, 0.7853982
        %vm1204 = vcmp.lt.s32.totalorder %v531, 0
        %v1205 = vand.u32 %v531, 2139095040
        %v1206 = vshrl.u32 %v1205, 23
        %v1207 = vsub.s32 %v1206, 127
        %v1208 = vand.u32 2147483647, %v531
        %v1209 = vand.u32 %v1208, 8388607
        %v1210 = vor.u32 %v1209, 8388608
        %v1211 = vsub.s32 0, %v1210
        %v1212 = vadd.s32 %v1207, 1
        %vm1213 = vcmp.gt.s32.totalorder %v1212, 0
        %v1214 = vsel %vm1213, %v1212, 0
        %v1215 = vshrl.u32 %v1214, 5
        %v1216 = vand.u32 %v1214, 31
        %v1217 = vsub.s32 32, %v1216
        %v1218 = vshrl.u32 683565275, %v1217
        %v1219 = vshll.u32 683565275, %v1216
        %v1220 = vshrl.u32 2475754826, %v1217
        %v1221 = vor.u32 %v1219, %v1220
        %v1222 = vshll.u32 2475754826, %v1216
        %v1223 = vshrl.u32 2131351028, %v1217
        %v1224 = vor.u32 %v1222, %v1223
        %v1225 = vshll.u32 2131351028, %v1216
        %v1226 = vshrl.u32 2102212464, %v1217
        %v1227 = vor.u32 %v1225, %v1226
        %v1228 = vshll.u32 2102212464, %v1216
        %v1229 = vshrl.u32 920167782, %v1217
        %v1230 = vor.u32 %v1228, %v1229
        %v1231 = vshll.u32 920167782, %v1216
        %v1232 = vshrl.u32 1326507024, %v1217
        %v1233 = vor.u32 %v1231, %v1232
        %vm1234 = vcmp.lt.s32.totalorder %v1215, 1
        %vm1235 = vcmp.lt.s32.totalorder %v1215, 2
        %vm1236 = vcmp.lt.s32.totalorder %v1215, 3
        %vm1237 = vcmp.lt.s32.totalorder %v1215, 4
        %v1238 = vsel %vm1234, %v1218, %v1221
        %v1239 = vsel %vm1237, %v1227, 2102212464
        %v1240 = vsel %vm1236, %v1224, %v1239
        %v1241 = vsel %vm1235, %v1238, %v1240
        %v1242 = vsel %vm1234, %v1221, %v1224
        %v1243 = vsel %vm1237, %v1230, 920167782
        %v1244 = vsel %vm1236, %v1227, %v1243
        %v1245 = vsel %vm1235, %v1242, %v1244
        %v1246 = vsel %vm1234, %v1224, %v1227
        %v1247 = vsel %vm1237, %v1233, 1326507024
        %v1248 = vsel %vm1236, %v1230, %v1247
        %v1249 = vsel %vm1235, %v1246, %v1248
        %v1250 = vshll.u32 %v1210, 8
        %v1251 = vmul.u32.u64.compose %v1250, %v1249
        %v1252 = vextract.low.u32 %v1251
        %v1253 = vextract.high.u32 %v1251
        %v1254 = vmul.u32.u64.compose %v1250, %v1245
        %v1255 = vextract.low.u32 %v1254
        %v1256 = vextract.high.u32 %v1254
        %v1257 = vmul.u32 %v1250, %v1241
        %v1258 = vadd.s32 %v1253, %v1255
        %vm1259 = vc.u32 %v1253, %v1255
        %v1260 = vadd.s32 %v1256, 1
        %v1261 = vsel %vm1259, %v1260, %v1256
        %v1262 = vadd.s32 %v1257, %v1261
        %v1263 = vadd.s32 %v1262, 536870912
        %v1264 = vshrl.u32 %v1263, 30
        %v1265 = vshll.u32 %v1264, 30
        %v1266 = vsub.s32 %v1262, %v1265
        %vm1267 = vcmp.lt.s32.totalorder %v1266, 0
        %v1268 = vsub.s32 0, %v1266
        %v1269 = vsel %vm1267, %v1268, %v1266
        %v1270 = vclz %v1269
        %v1271 = vsub.s32 %v1270, 2
        %vm1272 = vcmp.gt.s32.totalorder 0, %v1271
        %v1273 = vsel %vm1272, 0, %v1271
        %v1274 = vsub.s32 32, %v1273
        %v1275 = vshll.u32 %v1266, %v1273
        %v1276 = vshrl.u32 %v1258, %v1274
        %v1277 = vor.u32 %v1275, %v1276
        %v1278 = vsub.s32 4294967266, %v1273
        %v1279 = vadd.s32 %v1278, 127
        %v1280 = vshll.u32 %v1279, 23
        %v1281 = vor.u32 4788187, %v1280
        %v1282 = vand.u32 2147483647, %v1281
        %v1284 = vcvt.s32.f32 %v1277
        %v1285 = vmul.f32 %v1284, %v1282
        %v1286 = vxor.u32 %v1285, 2147483648
        %v1287 = vsel %vm1204, %v1286, %v1285
        %v1288 = vsub.s32 4, %v1264
        %v1289 = vsel %vm1204, %v1288, %v1264
        %v1290 = vsel %vm1203, %v531, %v1287
        %v1291 = vsel %vm1203, 0, %v1289
        %v1292 = vcosq.f32.pop %v1290
        %v1293 = vsinq.f32.pop %v1290
        %vm1294 = vweird.f32 %v531
        %v1295 = vadd.s32 %v1291, 3
        %v1296 = vand.u32 %v1295, 3
        %vm1297 = vcmp.lt.s32.totalorder %v1296, 2
        %vm1298 = vcmp.eq.s32.totalorder %v1296, 0
        %v1299 = vxor.u32 %v1293, 2147483648
        %v1300 = vsel %vm1298, %v1292, %v1299
        %vm1301 = vcmp.eq.s32.totalorder %v1296, 2
        %v1302 = vxor.u32 %v1292, 2147483648
        %v1303 = vsel %vm1301, %v1302, %v1293
        %v1304 = vsel %vm1297, %v1300, %v1303
        %v1305 = vsel %vm1294, nan, %v1304
        %v1306 = vand.u32 2147483647, %v642
        %vm1307 = vcmp.le.f32.partialorder %v1306, 0.7853982
        %vm1308 = vcmp.lt.s32.totalorder %v642, 0
        %v1309 = vand.u32 %v642, 2139095040
        %v1310 = vshrl.u32 %v1309, 23
        %v1311 = vsub.s32 %v1310, 127
        %v1312 = vand.u32 2147483647, %v642
        %v1313 = vand.u32 %v1312, 8388607
        %v1314 = vor.u32 %v1313, 8388608
        %v1315 = vsub.s32 0, %v1314
        %v1316 = vadd.s32 %v1311, 1
        %vm1317 = vcmp.gt.s32.totalorder %v1316, 0
        %v1318 = vsel %vm1317, %v1316, 0
        %v1319 = vshrl.u32 %v1318, 5
        %v1320 = vand.u32 %v1318, 31
        %v1321 = vsub.s32 32, %v1320
        %v1322 = vshrl.u32 683565275, %v1321
        %v1323 = vshll.u32 683565275, %v1320
        %v1324 = vshrl.u32 2475754826, %v1321
        %v1325 = vor.u32 %v1323, %v1324
        %v1326 = vshll.u32 2475754826, %v1320
        %v1327 = vshrl.u32 2131351028, %v1321
        %v1328 = vor.u32 %v1326, %v1327
        %v1329 = vshll.u32 2131351028, %v1320
        %v1330 = vshrl.u32 2102212464, %v1321
        %v1331 = vor.u32 %v1329, %v1330
        %v1332 = vshll.u32 2102212464, %v1320
        %v1333 = vshrl.u32 920167782, %v1321
        %v1334 = vor.u32 %v1332, %v1333
        %v1335 = vshll.u32 920167782, %v1320
        %v1336 = vshrl.u32 1326507024, %v1321
        %v1337 = vor.u32 %v1335, %v1336
        %vm1338 = vcmp.lt.s32.totalorder %v1319, 1
        %vm1339 = vcmp.lt.s32.totalorder %v1319, 2
        %vm1340 = vcmp.lt.s32.totalorder %v1319, 3
        %vm1341 = vcmp.lt.s32.totalorder %v1319, 4
        %v1342 = vsel %vm1338, %v1322, %v1325
        %v1343 = vsel %vm1341, %v1331, 2102212464
        %v1344 = vsel %vm1340, %v1328, %v1343
        %v1345 = vsel %vm1339, %v1342, %v1344
        %v1346 = vsel %vm1338, %v1325, %v1328
        %v1347 = vsel %vm1341, %v1334, 920167782
        %v1348 = vsel %vm1340, %v1331, %v1347
        %v1349 = vsel %vm1339, %v1346, %v1348
        %v1350 = vsel %vm1338, %v1328, %v1331
        %v1351 = vsel %vm1341, %v1337, 1326507024
        %v1352 = vsel %vm1340, %v1334, %v1351
        %v1353 = vsel %vm1339, %v1350, %v1352
        %v1354 = vshll.u32 %v1314, 8
        %v1355 = vmul.u32.u64.compose %v1354, %v1353
        %v1356 = vextract.low.u32 %v1355
        %v1357 = vextract.high.u32 %v1355
        %v1358 = vmul.u32.u64.compose %v1354, %v1349
        %v1359 = vextract.low.u32 %v1358
        %v1360 = vextract.high.u32 %v1358
        %v1361 = vmul.u32 %v1354, %v1345
        %v1362 = vadd.s32 %v1357, %v1359
        %vm1363 = vc.u32 %v1357, %v1359
        %v1364 = vadd.s32 %v1360, 1
        %v1365 = vsel %vm1363, %v1364, %v1360
        %v1366 = vadd.s32 %v1361, %v1365
        %v1367 = vadd.s32 %v1366, 536870912
        %v1368 = vshrl.u32 %v1367, 30
        %v1369 = vshll.u32 %v1368, 30
        %v1370 = vsub.s32 %v1366, %v1369
        %vm1371 = vcmp.lt.s32.totalorder %v1370, 0
        %v1372 = vsub.s32 0, %v1370
        %v1373 = vsel %vm1371, %v1372, %v1370
        %v1374 = vclz %v1373
        %v1375 = vsub.s32 %v1374, 2
        %vm1376 = vcmp.gt.s32.totalorder 0, %v1375
        %v1377 = vsel %vm1376, 0, %v1375
        %v1378 = vsub.s32 32, %v1377
        %v1379 = vshll.u32 %v1370, %v1377
        %v1380 = vshrl.u32 %v1362, %v1378
        %v1381 = vor.u32 %v1379, %v1380
        %v1382 = vsub.s32 4294967266, %v1377
        %v1383 = vadd.s32 %v1382, 127
        %v1384 = vshll.u32 %v1383, 23
        %v1385 = vor.u32 4788187, %v1384
        %v1386 = vand.u32 2147483647, %v1385
        %v1388 = vcvt.s32.f32 %v1381
        %v1389 = vmul.f32 %v1388, %v1386
        %v1390 = vxor.u32 %v1389, 2147483648
        %v1391 = vsel %vm1308, %v1390, %v1389
        %v1392 = vsub.s32 4, %v1368
        %v1393 = vsel %vm1308, %v1392, %v1368
        %v1394 = vsel %vm1307, %v642, %v1391
        %v1395 = vsel %vm1307, 0, %v1393
        %v1396 = vcosq.f32.pop %v1394
        %v1397 = vsinq.f32.pop %v1394
        %vm1398 = vweird.f32 %v642
        %v1399 = vadd.s32 %v1395, 3
        %v1400 = vand.u32 %v1399, 3
        %vm1401 = vcmp.lt.s32.totalorder %v1400, 2
        %vm1402 = vcmp.eq.s32.totalorder %v1400, 0
        %v1403 = vxor.u32 %v1397, 2147483648
        %v1404 = vsel %vm1402, %v1396, %v1403
        %vm1405 = vcmp.eq.s32.totalorder %v1400, 2
        %v1406 = vxor.u32 %v1396, 2147483648
        %v1407 = vsel %vm1405, %v1406, %v1397
        %v1408 = vsel %vm1401, %v1404, %v1407
        %v1409 = vsel %vm1398, nan, %v1408
        %v1410 = vand.u32 2147483647, %v644
        %vm1411 = vcmp.le.f32.partialorder %v1410, 0.7853982
        %vm1412 = vcmp.lt.s32.totalorder %v644, 0
        %v1413 = vand.u32 %v644, 2139095040
        %v1414 = vshrl.u32 %v1413, 23
        %v1415 = vsub.s32 %v1414, 127
        %v1416 = vand.u32 2147483647, %v644
        %v1417 = vand.u32 %v1416, 8388607
        %v1418 = vor.u32 %v1417, 8388608
        %v1419 = vsub.s32 0, %v1418
        %v1420 = vadd.s32 %v1415, 1
        %vm1421 = vcmp.gt.s32.totalorder %v1420, 0
        %v1422 = vsel %vm1421, %v1420, 0
        %v1423 = vshrl.u32 %v1422, 5
        %v1424 = vand.u32 %v1422, 31
        %v1425 = vsub.s32 32, %v1424
        %v1426 = vshrl.u32 683565275, %v1425
        %v1427 = vshll.u32 683565275, %v1424
        %v1428 = vshrl.u32 2475754826, %v1425
        %v1429 = vor.u32 %v1427, %v1428
        %v1430 = vshll.u32 2475754826, %v1424
        %v1431 = vshrl.u32 2131351028, %v1425
        %v1432 = vor.u32 %v1430, %v1431
        %v1433 = vshll.u32 2131351028, %v1424
        %v1434 = vshrl.u32 2102212464, %v1425
        %v1435 = vor.u32 %v1433, %v1434
        %v1436 = vshll.u32 2102212464, %v1424
        %v1437 = vshrl.u32 920167782, %v1425
        %v1438 = vor.u32 %v1436, %v1437
        %v1439 = vshll.u32 920167782, %v1424
        %v1440 = vshrl.u32 1326507024, %v1425
        %v1441 = vor.u32 %v1439, %v1440
        %vm1442 = vcmp.lt.s32.totalorder %v1423, 1
        %vm1443 = vcmp.lt.s32.totalorder %v1423, 2
        %vm1444 = vcmp.lt.s32.totalorder %v1423, 3
        %vm1445 = vcmp.lt.s32.totalorder %v1423, 4
        %v1446 = vsel %vm1442, %v1426, %v1429
        %v1447 = vsel %vm1445, %v1435, 2102212464
        %v1448 = vsel %vm1444, %v1432, %v1447
        %v1449 = vsel %vm1443, %v1446, %v1448
        %v1450 = vsel %vm1442, %v1429, %v1432
        %v1451 = vsel %vm1445, %v1438, 920167782
        %v1452 = vsel %vm1444, %v1435, %v1451
        %v1453 = vsel %vm1443, %v1450, %v1452
        %v1454 = vsel %vm1442, %v1432, %v1435
        %v1455 = vsel %vm1445, %v1441, 1326507024
        %v1456 = vsel %vm1444, %v1438, %v1455
        %v1457 = vsel %vm1443, %v1454, %v1456
        %v1458 = vshll.u32 %v1418, 8
        %v1459 = vmul.u32.u64.compose %v1458, %v1457
        %v1460 = vextract.low.u32 %v1459
        %v1461 = vextract.high.u32 %v1459
        %v1462 = vmul.u32.u64.compose %v1458, %v1453
        %v1463 = vextract.low.u32 %v1462
        %v1464 = vextract.high.u32 %v1462
        %v1465 = vmul.u32 %v1458, %v1449
        %v1466 = vadd.s32 %v1461, %v1463
        %vm1467 = vc.u32 %v1461, %v1463
        %v1468 = vadd.s32 %v1464, 1
        %v1469 = vsel %vm1467, %v1468, %v1464
        %v1470 = vadd.s32 %v1465, %v1469
        %v1471 = vadd.s32 %v1470, 536870912
        %v1472 = vshrl.u32 %v1471, 30
        %v1473 = vshll.u32 %v1472, 30
        %v1474 = vsub.s32 %v1470, %v1473
        %vm1475 = vcmp.lt.s32.totalorder %v1474, 0
        %v1476 = vsub.s32 0, %v1474
        %v1477 = vsel %vm1475, %v1476, %v1474
        %v1478 = vclz %v1477
        %v1479 = vsub.s32 %v1478, 2
        %vm1480 = vcmp.gt.s32.totalorder 0, %v1479
        %v1481 = vsel %vm1480, 0, %v1479
        %v1482 = vsub.s32 32, %v1481
        %v1483 = vshll.u32 %v1474, %v1481
        %v1484 = vshrl.u32 %v1466, %v1482
        %v1485 = vor.u32 %v1483, %v1484
        %v1486 = vsub.s32 4294967266, %v1481
        %v1487 = vadd.s32 %v1486, 127
        %v1488 = vshll.u32 %v1487, 23
        %v1489 = vor.u32 4788187, %v1488
        %v1490 = vand.u32 2147483647, %v1489
        %v1492 = vcvt.s32.f32 %v1485
        %v1493 = vmul.f32 %v1492, %v1490
        %v1494 = vxor.u32 %v1493, 2147483648
        %v1495 = vsel %vm1412, %v1494, %v1493
        %v1496 = vsub.s32 4, %v1472
        %v1497 = vsel %vm1412, %v1496, %v1472
        %v1498 = vsel %vm1411, %v644, %v1495
        %v1499 = vsel %vm1411, 0, %v1497
        %v1500 = vcosq.f32.pop %v1498
        %v1501 = vsinq.f32.pop %v1498
        %vm1502 = vweird.f32 %v644
        %v1503 = vadd.s32 %v1499, 3
        %v1504 = vand.u32 %v1503, 3
        %vm1505 = vcmp.lt.s32.totalorder %v1504, 2
        %vm1506 = vcmp.eq.s32.totalorder %v1504, 0
        %v1507 = vxor.u32 %v1501, 2147483648
        %v1508 = vsel %vm1506, %v1500, %v1507
        %vm1509 = vcmp.eq.s32.totalorder %v1504, 2
        %v1510 = vxor.u32 %v1500, 2147483648
        %v1511 = vsel %vm1509, %v1510, %v1501
        %v1512 = vsel %vm1505, %v1508, %v1511
        %v1513 = vsel %vm1502, nan, %v1512
        %v1514 = vand.u32 2147483647, %v535
        %vm1515 = vcmp.le.f32.partialorder %v1514, 0.7853982
        %vm1516 = vcmp.lt.s32.totalorder %v535, 0
        %v1517 = vand.u32 %v535, 2139095040
        %v1518 = vshrl.u32 %v1517, 23
        %v1519 = vsub.s32 %v1518, 127
        %v1520 = vand.u32 2147483647, %v535
        %v1521 = vand.u32 %v1520, 8388607
        %v1522 = vor.u32 %v1521, 8388608
        %v1523 = vsub.s32 0, %v1522
        %v1524 = vadd.s32 %v1519, 1
        %vm1525 = vcmp.gt.s32.totalorder %v1524, 0
        %v1526 = vsel %vm1525, %v1524, 0
        %v1527 = vshrl.u32 %v1526, 5
        %v1528 = vand.u32 %v1526, 31
        %v1529 = vsub.s32 32, %v1528
        %v1530 = vshrl.u32 683565275, %v1529
        %v1531 = vshll.u32 683565275, %v1528
        %v1532 = vshrl.u32 2475754826, %v1529
        %v1533 = vor.u32 %v1531, %v1532
        %v1534 = vshll.u32 2475754826, %v1528
        %v1535 = vshrl.u32 2131351028, %v1529
        %v1536 = vor.u32 %v1534, %v1535
        %v1537 = vshll.u32 2131351028, %v1528
        %v1538 = vshrl.u32 2102212464, %v1529
        %v1539 = vor.u32 %v1537, %v1538
        %v1540 = vshll.u32 2102212464, %v1528
        %v1541 = vshrl.u32 920167782, %v1529
        %v1542 = vor.u32 %v1540, %v1541
        %v1543 = vshll.u32 920167782, %v1528
        %v1544 = vshrl.u32 1326507024, %v1529
        %v1545 = vor.u32 %v1543, %v1544
        %vm1546 = vcmp.lt.s32.totalorder %v1527, 1
        %vm1547 = vcmp.lt.s32.totalorder %v1527, 2
        %vm1548 = vcmp.lt.s32.totalorder %v1527, 3
        %vm1549 = vcmp.lt.s32.totalorder %v1527, 4
        %v1550 = vsel %vm1546, %v1530, %v1533
        %v1551 = vsel %vm1549, %v1539, 2102212464
        %v1552 = vsel %vm1548, %v1536, %v1551
        %v1553 = vsel %vm1547, %v1550, %v1552
        %v1554 = vsel %vm1546, %v1533, %v1536
        %v1555 = vsel %vm1549, %v1542, 920167782
        %v1556 = vsel %vm1548, %v1539, %v1555
        %v1557 = vsel %vm1547, %v1554, %v1556
        %v1558 = vsel %vm1546, %v1536, %v1539
        %v1559 = vsel %vm1549, %v1545, 1326507024
        %v1560 = vsel %vm1548, %v1542, %v1559
        %v1561 = vsel %vm1547, %v1558, %v1560
        %v1562 = vshll.u32 %v1522, 8
        %v1563 = vmul.u32.u64.compose %v1562, %v1561
        %v1564 = vextract.low.u32 %v1563
        %v1565 = vextract.high.u32 %v1563
        %v1566 = vmul.u32.u64.compose %v1562, %v1557
        %v1567 = vextract.low.u32 %v1566
        %v1568 = vextract.high.u32 %v1566
        %v1569 = vmul.u32 %v1562, %v1553
        %v1570 = vadd.s32 %v1565, %v1567
        %vm1571 = vc.u32 %v1565, %v1567
        %v1572 = vadd.s32 %v1568, 1
        %v1573 = vsel %vm1571, %v1572, %v1568
        %v1574 = vadd.s32 %v1569, %v1573
        %v1575 = vadd.s32 %v1574, 536870912
        %v1576 = vshrl.u32 %v1575, 30
        %v1577 = vshll.u32 %v1576, 30
        %v1578 = vsub.s32 %v1574, %v1577
        %vm1579 = vcmp.lt.s32.totalorder %v1578, 0
        %v1580 = vsub.s32 0, %v1578
        %v1581 = vsel %vm1579, %v1580, %v1578
        %v1582 = vclz %v1581
        %v1583 = vsub.s32 %v1582, 2
        %vm1584 = vcmp.gt.s32.totalorder 0, %v1583
        %v1585 = vsel %vm1584, 0, %v1583
        %v1586 = vsub.s32 32, %v1585
        %v1587 = vshll.u32 %v1578, %v1585
        %v1588 = vshrl.u32 %v1570, %v1586
        %v1589 = vor.u32 %v1587, %v1588
        %v1590 = vsub.s32 4294967266, %v1585
        %v1591 = vadd.s32 %v1590, 127
        %v1592 = vshll.u32 %v1591, 23
        %v1593 = vor.u32 4788187, %v1592
        %v1594 = vand.u32 2147483647, %v1593
        %v1596 = vcvt.s32.f32 %v1589
        %v1597 = vmul.f32 %v1596, %v1594
        %v1598 = vxor.u32 %v1597, 2147483648
        %v1599 = vsel %vm1516, %v1598, %v1597
        %v1600 = vsub.s32 4, %v1576
        %v1601 = vsel %vm1516, %v1600, %v1576
        %v1602 = vsel %vm1515, %v535, %v1599
        %v1603 = vsel %vm1515, 0, %v1601
        %v1604 = vcosq.f32.pop %v1602
        %v1605 = vsinq.f32.pop %v1602
        %vm1606 = vweird.f32 %v535
        %v1607 = vadd.s32 %v1603, 3
        %v1608 = vand.u32 %v1607, 3
        %vm1609 = vcmp.lt.s32.totalorder %v1608, 2
        %vm1610 = vcmp.eq.s32.totalorder %v1608, 0
        %v1611 = vxor.u32 %v1605, 2147483648
        %v1612 = vsel %vm1610, %v1604, %v1611
        %vm1613 = vcmp.eq.s32.totalorder %v1608, 2
        %v1614 = vxor.u32 %v1604, 2147483648
        %v1615 = vsel %vm1613, %v1614, %v1605
        %v1616 = vsel %vm1609, %v1612, %v1615
        %v1617 = vsel %vm1606, nan, %v1616
        %v1618 = vand.u32 2147483647, %v537
        %vm1619 = vcmp.le.f32.partialorder %v1618, 0.7853982
        %vm1620 = vcmp.lt.s32.totalorder %v537, 0
        %v1621 = vand.u32 %v537, 2139095040
        %v1622 = vshrl.u32 %v1621, 23
        %v1623 = vsub.s32 %v1622, 127
        %v1624 = vand.u32 2147483647, %v537
        %v1625 = vand.u32 %v1624, 8388607
        %v1626 = vor.u32 %v1625, 8388608
        %v1627 = vsub.s32 0, %v1626
        %v1628 = vadd.s32 %v1623, 1
        %vm1629 = vcmp.gt.s32.totalorder %v1628, 0
        %v1630 = vsel %vm1629, %v1628, 0
        %v1631 = vshrl.u32 %v1630, 5
        %v1632 = vand.u32 %v1630, 31
        %v1633 = vsub.s32 32, %v1632
        %v1634 = vshrl.u32 683565275, %v1633
        %v1635 = vshll.u32 683565275, %v1632
        %v1636 = vshrl.u32 2475754826, %v1633
        %v1637 = vor.u32 %v1635, %v1636
        %v1638 = vshll.u32 2475754826, %v1632
        %v1639 = vshrl.u32 2131351028, %v1633
        %v1640 = vor.u32 %v1638, %v1639
        %v1641 = vshll.u32 2131351028, %v1632
        %v1642 = vshrl.u32 2102212464, %v1633
        %v1643 = vor.u32 %v1641, %v1642
        %v1644 = vshll.u32 2102212464, %v1632
        %v1645 = vshrl.u32 920167782, %v1633
        %v1646 = vor.u32 %v1644, %v1645
        %v1647 = vshll.u32 920167782, %v1632
        %v1648 = vshrl.u32 1326507024, %v1633
        %v1649 = vor.u32 %v1647, %v1648
        %vm1650 = vcmp.lt.s32.totalorder %v1631, 1
        %vm1651 = vcmp.lt.s32.totalorder %v1631, 2
        %vm1652 = vcmp.lt.s32.totalorder %v1631, 3
        %vm1653 = vcmp.lt.s32.totalorder %v1631, 4
        %v1654 = vsel %vm1650, %v1634, %v1637
        %v1655 = vsel %vm1653, %v1643, 2102212464
        %v1656 = vsel %vm1652, %v1640, %v1655
        %v1657 = vsel %vm1651, %v1654, %v1656
        %v1658 = vsel %vm1650, %v1637, %v1640
        %v1659 = vsel %vm1653, %v1646, 920167782
        %v1660 = vsel %vm1652, %v1643, %v1659
        %v1661 = vsel %vm1651, %v1658, %v1660
        %v1662 = vsel %vm1650, %v1640, %v1643
        %v1663 = vsel %vm1653, %v1649, 1326507024
        %v1664 = vsel %vm1652, %v1646, %v1663
        %v1665 = vsel %vm1651, %v1662, %v1664
        %v1666 = vshll.u32 %v1626, 8
        %v1667 = vmul.u32.u64.compose %v1666, %v1665
        %v1668 = vextract.low.u32 %v1667
        %v1669 = vextract.high.u32 %v1667
        %v1670 = vmul.u32.u64.compose %v1666, %v1661
        %v1671 = vextract.low.u32 %v1670
        %v1672 = vextract.high.u32 %v1670
        %v1673 = vmul.u32 %v1666, %v1657
        %v1674 = vadd.s32 %v1669, %v1671
        %vm1675 = vc.u32 %v1669, %v1671
        %v1676 = vadd.s32 %v1672, 1
        %v1677 = vsel %vm1675, %v1676, %v1672
        %v1678 = vadd.s32 %v1673, %v1677
        %v1679 = vadd.s32 %v1678, 536870912
        %v1680 = vshrl.u32 %v1679, 30
        %v1681 = vshll.u32 %v1680, 30
        %v1682 = vsub.s32 %v1678, %v1681
        %vm1683 = vcmp.lt.s32.totalorder %v1682, 0
        %v1684 = vsub.s32 0, %v1682
        %v1685 = vsel %vm1683, %v1684, %v1682
        %v1686 = vclz %v1685
        %v1687 = vsub.s32 %v1686, 2
        %vm1688 = vcmp.gt.s32.totalorder 0, %v1687
        %v1689 = vsel %vm1688, 0, %v1687
        %v1690 = vsub.s32 32, %v1689
        %v1691 = vshll.u32 %v1682, %v1689
        %v1692 = vshrl.u32 %v1674, %v1690
        %v1693 = vor.u32 %v1691, %v1692
        %v1694 = vsub.s32 4294967266, %v1689
        %v1695 = vadd.s32 %v1694, 127
        %v1696 = vshll.u32 %v1695, 23
        %v1697 = vor.u32 4788187, %v1696
        %v1698 = vand.u32 2147483647, %v1697
        %v1700 = vcvt.s32.f32 %v1693
        %v1701 = vmul.f32 %v1700, %v1698
        %v1702 = vxor.u32 %v1701, 2147483648
        %v1703 = vsel %vm1620, %v1702, %v1701
        %v1704 = vsub.s32 4, %v1680
        %v1705 = vsel %vm1620, %v1704, %v1680
        %v1706 = vsel %vm1619, %v537, %v1703
        %v1707 = vsel %vm1619, 0, %v1705
        %v1708 = vcosq.f32.pop %v1706
        %v1709 = vsinq.f32.pop %v1706
        %vm1710 = vweird.f32 %v537
        %v1711 = vadd.s32 %v1707, 3
        %v1712 = vand.u32 %v1711, 3
        %vm1713 = vcmp.lt.s32.totalorder %v1712, 2
        %vm1714 = vcmp.eq.s32.totalorder %v1712, 0
        %v1715 = vxor.u32 %v1709, 2147483648
        %v1716 = vsel %vm1714, %v1708, %v1715
        %vm1717 = vcmp.eq.s32.totalorder %v1712, 2
        %v1718 = vxor.u32 %v1708, 2147483648
        %v1719 = vsel %vm1717, %v1718, %v1709
        %v1720 = vsel %vm1713, %v1716, %v1719
        %v1721 = vsel %vm1710, nan, %v1720
        %v1722 = vand.u32 2147483647, %v648
        %vm1723 = vcmp.le.f32.partialorder %v1722, 0.7853982
        %vm1724 = vcmp.lt.s32.totalorder %v648, 0
        %v1725 = vand.u32 %v648, 2139095040
        %v1726 = vshrl.u32 %v1725, 23
        %v1727 = vsub.s32 %v1726, 127
        %v1728 = vand.u32 2147483647, %v648
        %v1729 = vand.u32 %v1728, 8388607
        %v1730 = vor.u32 %v1729, 8388608
        %v1731 = vsub.s32 0, %v1730
        %v1732 = vadd.s32 %v1727, 1
        %vm1733 = vcmp.gt.s32.totalorder %v1732, 0
        %v1734 = vsel %vm1733, %v1732, 0
        %v1735 = vshrl.u32 %v1734, 5
        %v1736 = vand.u32 %v1734, 31
        %v1737 = vsub.s32 32, %v1736
        %v1738 = vshrl.u32 683565275, %v1737
        %v1739 = vshll.u32 683565275, %v1736
        %v1740 = vshrl.u32 2475754826, %v1737
        %v1741 = vor.u32 %v1739, %v1740
        %v1742 = vshll.u32 2475754826, %v1736
        %v1743 = vshrl.u32 2131351028, %v1737
        %v1744 = vor.u32 %v1742, %v1743
        %v1745 = vshll.u32 2131351028, %v1736
        %v1746 = vshrl.u32 2102212464, %v1737
        %v1747 = vor.u32 %v1745, %v1746
        %v1748 = vshll.u32 2102212464, %v1736
        %v1749 = vshrl.u32 920167782, %v1737
        %v1750 = vor.u32 %v1748, %v1749
        %v1751 = vshll.u32 920167782, %v1736
        %v1752 = vshrl.u32 1326507024, %v1737
        %v1753 = vor.u32 %v1751, %v1752
        %vm1754 = vcmp.lt.s32.totalorder %v1735, 1
        %vm1755 = vcmp.lt.s32.totalorder %v1735, 2
        %vm1756 = vcmp.lt.s32.totalorder %v1735, 3
        %vm1757 = vcmp.lt.s32.totalorder %v1735, 4
        %v1758 = vsel %vm1754, %v1738, %v1741
        %v1759 = vsel %vm1757, %v1747, 2102212464
        %v1760 = vsel %vm1756, %v1744, %v1759
        %v1761 = vsel %vm1755, %v1758, %v1760
        %v1762 = vsel %vm1754, %v1741, %v1744
        %v1763 = vsel %vm1757, %v1750, 920167782
        %v1764 = vsel %vm1756, %v1747, %v1763
        %v1765 = vsel %vm1755, %v1762, %v1764
        %v1766 = vsel %vm1754, %v1744, %v1747
        %v1767 = vsel %vm1757, %v1753, 1326507024
        %v1768 = vsel %vm1756, %v1750, %v1767
        %v1769 = vsel %vm1755, %v1766, %v1768
        %v1770 = vshll.u32 %v1730, 8
        %v1771 = vmul.u32.u64.compose %v1770, %v1769
        %v1772 = vextract.low.u32 %v1771
        %v1773 = vextract.high.u32 %v1771
        %v1774 = vmul.u32.u64.compose %v1770, %v1765
        %v1775 = vextract.low.u32 %v1774
        %v1776 = vextract.high.u32 %v1774
        %v1777 = vmul.u32 %v1770, %v1761
        %v1778 = vadd.s32 %v1773, %v1775
        %vm1779 = vc.u32 %v1773, %v1775
        %v1780 = vadd.s32 %v1776, 1
        %v1781 = vsel %vm1779, %v1780, %v1776
        %v1782 = vadd.s32 %v1777, %v1781
        %v1783 = vadd.s32 %v1782, 536870912
        %v1784 = vshrl.u32 %v1783, 30
        %v1785 = vshll.u32 %v1784, 30
        %v1786 = vsub.s32 %v1782, %v1785
        %vm1787 = vcmp.lt.s32.totalorder %v1786, 0
        %v1788 = vsub.s32 0, %v1786
        %v1789 = vsel %vm1787, %v1788, %v1786
        %v1790 = vclz %v1789
        %v1791 = vsub.s32 %v1790, 2
        %vm1792 = vcmp.gt.s32.totalorder 0, %v1791
        %v1793 = vsel %vm1792, 0, %v1791
        %v1794 = vsub.s32 32, %v1793
        %v1795 = vshll.u32 %v1786, %v1793
        %v1796 = vshrl.u32 %v1778, %v1794
        %v1797 = vor.u32 %v1795, %v1796
        %v1798 = vsub.s32 4294967266, %v1793
        %v1799 = vadd.s32 %v1798, 127
        %v1800 = vshll.u32 %v1799, 23
        %v1801 = vor.u32 4788187, %v1800
        %v1802 = vand.u32 2147483647, %v1801
        %v1804 = vcvt.s32.f32 %v1797
        %v1805 = vmul.f32 %v1804, %v1802
        %v1806 = vxor.u32 %v1805, 2147483648
        %v1807 = vsel %vm1724, %v1806, %v1805
        %v1808 = vsub.s32 4, %v1784
        %v1809 = vsel %vm1724, %v1808, %v1784
        %v1810 = vsel %vm1723, %v648, %v1807
        %v1811 = vsel %vm1723, 0, %v1809
        %v1812 = vcosq.f32.pop %v1810
        %v1813 = vsinq.f32.pop %v1810
        %vm1814 = vweird.f32 %v648
        %v1815 = vadd.s32 %v1811, 3
        %v1816 = vand.u32 %v1815, 3
        %vm1817 = vcmp.lt.s32.totalorder %v1816, 2
        %vm1818 = vcmp.eq.s32.totalorder %v1816, 0
        %v1819 = vxor.u32 %v1813, 2147483648
        %v1820 = vsel %vm1818, %v1812, %v1819
        %vm1821 = vcmp.eq.s32.totalorder %v1816, 2
        %v1822 = vxor.u32 %v1812, 2147483648
        %v1823 = vsel %vm1821, %v1822, %v1813
        %v1824 = vsel %vm1817, %v1820, %v1823
        %v1825 = vsel %vm1814, nan, %v1824
        %v1826 = vand.u32 2147483647, %v650
        %vm1827 = vcmp.le.f32.partialorder %v1826, 0.7853982
        %vm1828 = vcmp.lt.s32.totalorder %v650, 0
        %v1829 = vand.u32 %v650, 2139095040
        %v1830 = vshrl.u32 %v1829, 23
        %v1831 = vsub.s32 %v1830, 127
        %v1832 = vand.u32 2147483647, %v650
        %v1833 = vand.u32 %v1832, 8388607
        %v1834 = vor.u32 %v1833, 8388608
        %v1835 = vsub.s32 0, %v1834
        %v1836 = vadd.s32 %v1831, 1
        %vm1837 = vcmp.gt.s32.totalorder %v1836, 0
        %v1838 = vsel %vm1837, %v1836, 0
        %v1839 = vshrl.u32 %v1838, 5
        %v1840 = vand.u32 %v1838, 31
        %v1841 = vsub.s32 32, %v1840
        %v1842 = vshrl.u32 683565275, %v1841
        %v1843 = vshll.u32 683565275, %v1840
        %v1844 = vshrl.u32 2475754826, %v1841
        %v1845 = vor.u32 %v1843, %v1844
        %v1846 = vshll.u32 2475754826, %v1840
        %v1847 = vshrl.u32 2131351028, %v1841
        %v1848 = vor.u32 %v1846, %v1847
        %v1849 = vshll.u32 2131351028, %v1840
        %v1850 = vshrl.u32 2102212464, %v1841
        %v1851 = vor.u32 %v1849, %v1850
        %v1852 = vshll.u32 2102212464, %v1840
        %v1853 = vshrl.u32 920167782, %v1841
        %v1854 = vor.u32 %v1852, %v1853
        %v1855 = vshll.u32 920167782, %v1840
        %v1856 = vshrl.u32 1326507024, %v1841
        %v1857 = vor.u32 %v1855, %v1856
        %vm1858 = vcmp.lt.s32.totalorder %v1839, 1
        %vm1859 = vcmp.lt.s32.totalorder %v1839, 2
        %vm1860 = vcmp.lt.s32.totalorder %v1839, 3
        %vm1861 = vcmp.lt.s32.totalorder %v1839, 4
        %v1862 = vsel %vm1858, %v1842, %v1845
        %v1863 = vsel %vm1861, %v1851, 2102212464
        %v1864 = vsel %vm1860, %v1848, %v1863
        %v1865 = vsel %vm1859, %v1862, %v1864
        %v1866 = vsel %vm1858, %v1845, %v1848
        %v1867 = vsel %vm1861, %v1854, 920167782
        %v1868 = vsel %vm1860, %v1851, %v1867
        %v1869 = vsel %vm1859, %v1866, %v1868
        %v1870 = vsel %vm1858, %v1848, %v1851
        %v1871 = vsel %vm1861, %v1857, 1326507024
        %v1872 = vsel %vm1860, %v1854, %v1871
        %v1873 = vsel %vm1859, %v1870, %v1872
        %v1874 = vshll.u32 %v1834, 8
        %v1875 = vmul.u32.u64.compose %v1874, %v1873
        %v1876 = vextract.low.u32 %v1875
        %v1877 = vextract.high.u32 %v1875
        %v1878 = vmul.u32.u64.compose %v1874, %v1869
        %v1879 = vextract.low.u32 %v1878
        %v1880 = vextract.high.u32 %v1878
        %v1881 = vmul.u32 %v1874, %v1865
        %v1882 = vadd.s32 %v1877, %v1879
        %vm1883 = vc.u32 %v1877, %v1879
        %v1884 = vadd.s32 %v1880, 1
        %v1885 = vsel %vm1883, %v1884, %v1880
        %v1886 = vadd.s32 %v1881, %v1885
        %v1887 = vadd.s32 %v1886, 536870912
        %v1888 = vshrl.u32 %v1887, 30
        %v1889 = vshll.u32 %v1888, 30
        %v1890 = vsub.s32 %v1886, %v1889
        %vm1891 = vcmp.lt.s32.totalorder %v1890, 0
        %v1892 = vsub.s32 0, %v1890
        %v1893 = vsel %vm1891, %v1892, %v1890
        %v1894 = vclz %v1893
        %v1895 = vsub.s32 %v1894, 2
        %vm1896 = vcmp.gt.s32.totalorder 0, %v1895
        %v1897 = vsel %vm1896, 0, %v1895
        %v1898 = vsub.s32 32, %v1897
        %v1899 = vshll.u32 %v1890, %v1897
        %v1900 = vshrl.u32 %v1882, %v1898
        %v1901 = vor.u32 %v1899, %v1900
        %v1902 = vsub.s32 4294967266, %v1897
        %v1903 = vadd.s32 %v1902, 127
        %v1904 = vshll.u32 %v1903, 23
        %v1905 = vor.u32 4788187, %v1904
        %v1906 = vand.u32 2147483647, %v1905
        %v1908 = vcvt.s32.f32 %v1901
        %v1909 = vmul.f32 %v1908, %v1906
        %v1910 = vxor.u32 %v1909, 2147483648
        %v1911 = vsel %vm1828, %v1910, %v1909
        %v1912 = vsub.s32 4, %v1888
        %v1913 = vsel %vm1828, %v1912, %v1888
        %v1914 = vsel %vm1827, %v650, %v1911
        %v1915 = vsel %vm1827, 0, %v1913
        %v1916 = vcosq.f32.pop %v1914
        %v1917 = vsinq.f32.pop %v1914
        %vm1918 = vweird.f32 %v650
        %v1919 = vadd.s32 %v1915, 3
        %v1920 = vand.u32 %v1919, 3
        %vm1921 = vcmp.lt.s32.totalorder %v1920, 2
        %vm1922 = vcmp.eq.s32.totalorder %v1920, 0
        %v1923 = vxor.u32 %v1917, 2147483648
        %v1924 = vsel %vm1922, %v1916, %v1923
        %vm1925 = vcmp.eq.s32.totalorder %v1920, 2
        %v1926 = vxor.u32 %v1916, 2147483648
        %v1927 = vsel %vm1925, %v1926, %v1917
        %v1928 = vsel %vm1921, %v1924, %v1927
        %v1929 = vsel %vm1918, nan, %v1928
        %v1930 = vand.u32 2147483647, %v541
        %vm1931 = vcmp.le.f32.partialorder %v1930, 0.7853982
        %vm1932 = vcmp.lt.s32.totalorder %v541, 0
        %v1933 = vand.u32 %v541, 2139095040
        %v1934 = vshrl.u32 %v1933, 23
        %v1935 = vsub.s32 %v1934, 127
        %v1936 = vand.u32 2147483647, %v541
        %v1937 = vand.u32 %v1936, 8388607
        %v1938 = vor.u32 %v1937, 8388608
        %v1939 = vsub.s32 0, %v1938
        %v1940 = vadd.s32 %v1935, 1
        %vm1941 = vcmp.gt.s32.totalorder %v1940, 0
        %v1942 = vsel %vm1941, %v1940, 0
        %v1943 = vshrl.u32 %v1942, 5
        %v1944 = vand.u32 %v1942, 31
        %v1945 = vsub.s32 32, %v1944
        %v1946 = vshrl.u32 683565275, %v1945
        %v1947 = vshll.u32 683565275, %v1944
        %v1948 = vshrl.u32 2475754826, %v1945
        %v1949 = vor.u32 %v1947, %v1948
        %v1950 = vshll.u32 2475754826, %v1944
        %v1951 = vshrl.u32 2131351028, %v1945
        %v1952 = vor.u32 %v1950, %v1951
        %v1953 = vshll.u32 2131351028, %v1944
        %v1954 = vshrl.u32 2102212464, %v1945
        %v1955 = vor.u32 %v1953, %v1954
        %v1956 = vshll.u32 2102212464, %v1944
        %v1957 = vshrl.u32 920167782, %v1945
        %v1958 = vor.u32 %v1956, %v1957
        %v1959 = vshll.u32 920167782, %v1944
        %v1960 = vshrl.u32 1326507024, %v1945
        %v1961 = vor.u32 %v1959, %v1960
        %vm1962 = vcmp.lt.s32.totalorder %v1943, 1
        %vm1963 = vcmp.lt.s32.totalorder %v1943, 2
        %vm1964 = vcmp.lt.s32.totalorder %v1943, 3
        %vm1965 = vcmp.lt.s32.totalorder %v1943, 4
        %v1966 = vsel %vm1962, %v1946, %v1949
        %v1967 = vsel %vm1965, %v1955, 2102212464
        %v1968 = vsel %vm1964, %v1952, %v1967
        %v1969 = vsel %vm1963, %v1966, %v1968
        %v1970 = vsel %vm1962, %v1949, %v1952
        %v1971 = vsel %vm1965, %v1958, 920167782
        %v1972 = vsel %vm1964, %v1955, %v1971
        %v1973 = vsel %vm1963, %v1970, %v1972
        %v1974 = vsel %vm1962, %v1952, %v1955
        %v1975 = vsel %vm1965, %v1961, 1326507024
        %v1976 = vsel %vm1964, %v1958, %v1975
        %v1977 = vsel %vm1963, %v1974, %v1976
        %v1978 = vshll.u32 %v1938, 8
        %v1979 = vmul.u32.u64.compose %v1978, %v1977
        %v1980 = vextract.low.u32 %v1979
        %v1981 = vextract.high.u32 %v1979
        %v1982 = vmul.u32.u64.compose %v1978, %v1973
        %v1983 = vextract.low.u32 %v1982
        %v1984 = vextract.high.u32 %v1982
        %v1985 = vmul.u32 %v1978, %v1969
        %v1986 = vadd.s32 %v1981, %v1983
        %vm1987 = vc.u32 %v1981, %v1983
        %v1988 = vadd.s32 %v1984, 1
        %v1989 = vsel %vm1987, %v1988, %v1984
        %v1990 = vadd.s32 %v1985, %v1989
        %v1991 = vadd.s32 %v1990, 536870912
        %v1992 = vshrl.u32 %v1991, 30
        %v1993 = vshll.u32 %v1992, 30
        %v1994 = vsub.s32 %v1990, %v1993
        %vm1995 = vcmp.lt.s32.totalorder %v1994, 0
        %v1996 = vsub.s32 0, %v1994
        %v1997 = vsel %vm1995, %v1996, %v1994
        %v1998 = vclz %v1997
        %v1999 = vsub.s32 %v1998, 2
        %vm2000 = vcmp.gt.s32.totalorder 0, %v1999
        %v2001 = vsel %vm2000, 0, %v1999
        %v2002 = vsub.s32 32, %v2001
        %v2003 = vshll.u32 %v1994, %v2001
        %v2004 = vshrl.u32 %v1986, %v2002
        %v2005 = vor.u32 %v2003, %v2004
        %v2006 = vsub.s32 4294967266, %v2001
        %v2007 = vadd.s32 %v2006, 127
        %v2008 = vshll.u32 %v2007, 23
        %v2009 = vor.u32 4788187, %v2008
        %v2010 = vand.u32 2147483647, %v2009
        %v2012 = vcvt.s32.f32 %v2005
        %v2013 = vmul.f32 %v2012, %v2010
        %v2014 = vxor.u32 %v2013, 2147483648
        %v2015 = vsel %vm1932, %v2014, %v2013
        %v2016 = vsub.s32 4, %v1992
        %v2017 = vsel %vm1932, %v2016, %v1992
        %v2018 = vsel %vm1931, %v541, %v2015
        %v2019 = vsel %vm1931, 0, %v2017
        %v2020 = vcosq.f32.pop %v2018
        %v2021 = vsinq.f32.pop %v2018
        %vm2022 = vweird.f32 %v541
        %v2023 = vadd.s32 %v2019, 3
        %v2024 = vand.u32 %v2023, 3
        %vm2025 = vcmp.lt.s32.totalorder %v2024, 2
        %vm2026 = vcmp.eq.s32.totalorder %v2024, 0
        %v2027 = vxor.u32 %v2021, 2147483648
        %v2028 = vsel %vm2026, %v2020, %v2027
        %vm2029 = vcmp.eq.s32.totalorder %v2024, 2
        %v2030 = vxor.u32 %v2020, 2147483648
        %v2031 = vsel %vm2029, %v2030, %v2021
        %v2032 = vsel %vm2025, %v2028, %v2031
        %v2033 = vsel %vm2022, nan, %v2032
        %v2034 = vand.u32 2147483647, %v543
        %vm2035 = vcmp.le.f32.partialorder %v2034, 0.7853982
        %vm2036 = vcmp.lt.s32.totalorder %v543, 0
        %v2037 = vand.u32 %v543, 2139095040
        %v2038 = vshrl.u32 %v2037, 23
        %v2039 = vsub.s32 %v2038, 127
        %v2040 = vand.u32 2147483647, %v543
        %v2041 = vand.u32 %v2040, 8388607
        %v2042 = vor.u32 %v2041, 8388608
        %v2043 = vsub.s32 0, %v2042
        %v2044 = vadd.s32 %v2039, 1
        %vm2045 = vcmp.gt.s32.totalorder %v2044, 0
        %v2046 = vsel %vm2045, %v2044, 0
        %v2047 = vshrl.u32 %v2046, 5
        %v2048 = vand.u32 %v2046, 31
        %v2049 = vsub.s32 32, %v2048
        %v2050 = vshrl.u32 683565275, %v2049
        %v2051 = vshll.u32 683565275, %v2048
        %v2052 = vshrl.u32 2475754826, %v2049
        %v2053 = vor.u32 %v2051, %v2052
        %v2054 = vshll.u32 2475754826, %v2048
        %v2055 = vshrl.u32 2131351028, %v2049
        %v2056 = vor.u32 %v2054, %v2055
        %v2057 = vshll.u32 2131351028, %v2048
        %v2058 = vshrl.u32 2102212464, %v2049
        %v2059 = vor.u32 %v2057, %v2058
        %v2060 = vshll.u32 2102212464, %v2048
        %v2061 = vshrl.u32 920167782, %v2049
        %v2062 = vor.u32 %v2060, %v2061
        %v2063 = vshll.u32 920167782, %v2048
        %v2064 = vshrl.u32 1326507024, %v2049
        %v2065 = vor.u32 %v2063, %v2064
        %vm2066 = vcmp.lt.s32.totalorder %v2047, 1
        %vm2067 = vcmp.lt.s32.totalorder %v2047, 2
        %vm2068 = vcmp.lt.s32.totalorder %v2047, 3
        %vm2069 = vcmp.lt.s32.totalorder %v2047, 4
        %v2070 = vsel %vm2066, %v2050, %v2053
        %v2071 = vsel %vm2069, %v2059, 2102212464
        %v2072 = vsel %vm2068, %v2056, %v2071
        %v2073 = vsel %vm2067, %v2070, %v2072
        %v2074 = vsel %vm2066, %v2053, %v2056
        %v2075 = vsel %vm2069, %v2062, 920167782
        %v2076 = vsel %vm2068, %v2059, %v2075
        %v2077 = vsel %vm2067, %v2074, %v2076
        %v2078 = vsel %vm2066, %v2056, %v2059
        %v2079 = vsel %vm2069, %v2065, 1326507024
        %v2080 = vsel %vm2068, %v2062, %v2079
        %v2081 = vsel %vm2067, %v2078, %v2080
        %v2082 = vshll.u32 %v2042, 8
        %v2083 = vmul.u32.u64.compose %v2082, %v2081
        %v2084 = vextract.low.u32 %v2083
        %v2085 = vextract.high.u32 %v2083
        %v2086 = vmul.u32.u64.compose %v2082, %v2077
        %v2087 = vextract.low.u32 %v2086
        %v2088 = vextract.high.u32 %v2086
        %v2089 = vmul.u32 %v2082, %v2073
        %v2090 = vadd.s32 %v2085, %v2087
        %vm2091 = vc.u32 %v2085, %v2087
        %v2092 = vadd.s32 %v2088, 1
        %v2093 = vsel %vm2091, %v2092, %v2088
        %v2094 = vadd.s32 %v2089, %v2093
        %v2095 = vadd.s32 %v2094, 536870912
        %v2096 = vshrl.u32 %v2095, 30
        %v2097 = vshll.u32 %v2096, 30
        %v2098 = vsub.s32 %v2094, %v2097
        %vm2099 = vcmp.lt.s32.totalorder %v2098, 0
        %v2100 = vsub.s32 0, %v2098
        %v2101 = vsel %vm2099, %v2100, %v2098
        %v2102 = vclz %v2101
        %v2103 = vsub.s32 %v2102, 2
        %vm2104 = vcmp.gt.s32.totalorder 0, %v2103
        %v2105 = vsel %vm2104, 0, %v2103
        %v2106 = vsub.s32 32, %v2105
        %v2107 = vshll.u32 %v2098, %v2105
        %v2108 = vshrl.u32 %v2090, %v2106
        %v2109 = vor.u32 %v2107, %v2108
        %v2110 = vsub.s32 4294967266, %v2105
        %v2111 = vadd.s32 %v2110, 127
        %v2112 = vshll.u32 %v2111, 23
        %v2113 = vor.u32 4788187, %v2112
        %v2114 = vand.u32 2147483647, %v2113
        %v2116 = vcvt.s32.f32 %v2109
        %v2117 = vmul.f32 %v2116, %v2114
        %v2118 = vxor.u32 %v2117, 2147483648
        %v2119 = vsel %vm2036, %v2118, %v2117
        %v2120 = vsub.s32 4, %v2096
        %v2121 = vsel %vm2036, %v2120, %v2096
        %v2122 = vsel %vm2035, %v543, %v2119
        %v2123 = vsel %vm2035, 0, %v2121
        %v2124 = vcosq.f32.pop %v2122
        %v2125 = vsinq.f32.pop %v2122
        %vm2126 = vweird.f32 %v543
        %v2127 = vadd.s32 %v2123, 3
        %v2128 = vand.u32 %v2127, 3
        %vm2129 = vcmp.lt.s32.totalorder %v2128, 2
        %vm2130 = vcmp.eq.s32.totalorder %v2128, 0
        %v2131 = vxor.u32 %v2125, 2147483648
        %v2132 = vsel %vm2130, %v2124, %v2131
        %vm2133 = vcmp.eq.s32.totalorder %v2128, 2
        %v2134 = vxor.u32 %v2124, 2147483648
        %v2135 = vsel %vm2133, %v2134, %v2125
        %v2136 = vsel %vm2129, %v2132, %v2135
        %v2137 = vsel %vm2126, nan, %v2136
        %v2138 = vand.u32 2147483647, %v654
        %vm2139 = vcmp.le.f32.partialorder %v2138, 0.7853982
        %vm2140 = vcmp.lt.s32.totalorder %v654, 0
        %v2141 = vand.u32 %v654, 2139095040
        %v2142 = vshrl.u32 %v2141, 23
        %v2143 = vsub.s32 %v2142, 127
        %v2144 = vand.u32 2147483647, %v654
        %v2145 = vand.u32 %v2144, 8388607
        %v2146 = vor.u32 %v2145, 8388608
        %v2147 = vsub.s32 0, %v2146
        %v2148 = vadd.s32 %v2143, 1
        %vm2149 = vcmp.gt.s32.totalorder %v2148, 0
        %v2150 = vsel %vm2149, %v2148, 0
        %v2151 = vshrl.u32 %v2150, 5
        %v2152 = vand.u32 %v2150, 31
        %v2153 = vsub.s32 32, %v2152
        %v2154 = vshrl.u32 683565275, %v2153
        %v2155 = vshll.u32 683565275, %v2152
        %v2156 = vshrl.u32 2475754826, %v2153
        %v2157 = vor.u32 %v2155, %v2156
        %v2158 = vshll.u32 2475754826, %v2152
        %v2159 = vshrl.u32 2131351028, %v2153
        %v2160 = vor.u32 %v2158, %v2159
        %v2161 = vshll.u32 2131351028, %v2152
        %v2162 = vshrl.u32 2102212464, %v2153
        %v2163 = vor.u32 %v2161, %v2162
        %v2164 = vshll.u32 2102212464, %v2152
        %v2165 = vshrl.u32 920167782, %v2153
        %v2166 = vor.u32 %v2164, %v2165
        %v2167 = vshll.u32 920167782, %v2152
        %v2168 = vshrl.u32 1326507024, %v2153
        %v2169 = vor.u32 %v2167, %v2168
        %vm2170 = vcmp.lt.s32.totalorder %v2151, 1
        %vm2171 = vcmp.lt.s32.totalorder %v2151, 2
        %vm2172 = vcmp.lt.s32.totalorder %v2151, 3
        %vm2173 = vcmp.lt.s32.totalorder %v2151, 4
        %v2174 = vsel %vm2170, %v2154, %v2157
        %v2175 = vsel %vm2173, %v2163, 2102212464
        %v2176 = vsel %vm2172, %v2160, %v2175
        %v2177 = vsel %vm2171, %v2174, %v2176
        %v2178 = vsel %vm2170, %v2157, %v2160
        %v2179 = vsel %vm2173, %v2166, 920167782
        %v2180 = vsel %vm2172, %v2163, %v2179
        %v2181 = vsel %vm2171, %v2178, %v2180
        %v2182 = vsel %vm2170, %v2160, %v2163
        %v2183 = vsel %vm2173, %v2169, 1326507024
        %v2184 = vsel %vm2172, %v2166, %v2183
        %v2185 = vsel %vm2171, %v2182, %v2184
        %v2186 = vshll.u32 %v2146, 8
        %v2187 = vmul.u32.u64.compose %v2186, %v2185
        %v2188 = vextract.low.u32 %v2187
        %v2189 = vextract.high.u32 %v2187
        %v2190 = vmul.u32.u64.compose %v2186, %v2181
        %v2191 = vextract.low.u32 %v2190
        %v2192 = vextract.high.u32 %v2190
        %v2193 = vmul.u32 %v2186, %v2177
        %v2194 = vadd.s32 %v2189, %v2191
        %vm2195 = vc.u32 %v2189, %v2191
        %v2196 = vadd.s32 %v2192, 1
        %v2197 = vsel %vm2195, %v2196, %v2192
        %v2198 = vadd.s32 %v2193, %v2197
        %v2199 = vadd.s32 %v2198, 536870912
        %v2200 = vshrl.u32 %v2199, 30
        %v2201 = vshll.u32 %v2200, 30
        %v2202 = vsub.s32 %v2198, %v2201
        %vm2203 = vcmp.lt.s32.totalorder %v2202, 0
        %v2204 = vsub.s32 0, %v2202
        %v2205 = vsel %vm2203, %v2204, %v2202
        %v2206 = vclz %v2205
        %v2207 = vsub.s32 %v2206, 2
        %vm2208 = vcmp.gt.s32.totalorder 0, %v2207
        %v2209 = vsel %vm2208, 0, %v2207
        %v2210 = vsub.s32 32, %v2209
        %v2211 = vshll.u32 %v2202, %v2209
        %v2212 = vshrl.u32 %v2194, %v2210
        %v2213 = vor.u32 %v2211, %v2212
        %v2214 = vsub.s32 4294967266, %v2209
        %v2215 = vadd.s32 %v2214, 127
        %v2216 = vshll.u32 %v2215, 23
        %v2217 = vor.u32 4788187, %v2216
        %v2218 = vand.u32 2147483647, %v2217
        %v2220 = vcvt.s32.f32 %v2213
        %v2221 = vmul.f32 %v2220, %v2218
        %v2222 = vxor.u32 %v2221, 2147483648
        %v2223 = vsel %vm2140, %v2222, %v2221
        %v2224 = vsub.s32 4, %v2200
        %v2225 = vsel %vm2140, %v2224, %v2200
        %v2226 = vsel %vm2139, %v654, %v2223
        %v2227 = vsel %vm2139, 0, %v2225
        %v2228 = vcosq.f32.pop %v2226
        %v2229 = vsinq.f32.pop %v2226
        %vm2230 = vweird.f32 %v654
        %v2231 = vadd.s32 %v2227, 3
        %v2232 = vand.u32 %v2231, 3
        %vm2233 = vcmp.lt.s32.totalorder %v2232, 2
        %vm2234 = vcmp.eq.s32.totalorder %v2232, 0
        %v2235 = vxor.u32 %v2229, 2147483648
        %v2236 = vsel %vm2234, %v2228, %v2235
        %vm2237 = vcmp.eq.s32.totalorder %v2232, 2
        %v2238 = vxor.u32 %v2228, 2147483648
        %v2239 = vsel %vm2237, %v2238, %v2229
        %v2240 = vsel %vm2233, %v2236, %v2239
        %v2241 = vsel %vm2230, nan, %v2240
        %v2242 = vand.u32 2147483647, %v656
        %vm2243 = vcmp.le.f32.partialorder %v2242, 0.7853982
        %vm2244 = vcmp.lt.s32.totalorder %v656, 0
        %v2245 = vand.u32 %v656, 2139095040
        %v2246 = vshrl.u32 %v2245, 23
        %v2247 = vsub.s32 %v2246, 127
        %v2248 = vand.u32 2147483647, %v656
        %v2249 = vand.u32 %v2248, 8388607
        %v2250 = vor.u32 %v2249, 8388608
        %v2251 = vsub.s32 0, %v2250
        %v2252 = vadd.s32 %v2247, 1
        %vm2253 = vcmp.gt.s32.totalorder %v2252, 0
        %v2254 = vsel %vm2253, %v2252, 0
        %v2255 = vshrl.u32 %v2254, 5
        %v2256 = vand.u32 %v2254, 31
        %v2257 = vsub.s32 32, %v2256
        %v2258 = vshrl.u32 683565275, %v2257
        %v2259 = vshll.u32 683565275, %v2256
        %v2260 = vshrl.u32 2475754826, %v2257
        %v2261 = vor.u32 %v2259, %v2260
        %v2262 = vshll.u32 2475754826, %v2256
        %v2263 = vshrl.u32 2131351028, %v2257
        %v2264 = vor.u32 %v2262, %v2263
        %v2265 = vshll.u32 2131351028, %v2256
        %v2266 = vshrl.u32 2102212464, %v2257
        %v2267 = vor.u32 %v2265, %v2266
        %v2268 = vshll.u32 2102212464, %v2256
        %v2269 = vshrl.u32 920167782, %v2257
        %v2270 = vor.u32 %v2268, %v2269
        %v2271 = vshll.u32 920167782, %v2256
        %v2272 = vshrl.u32 1326507024, %v2257
        %v2273 = vor.u32 %v2271, %v2272
        %vm2274 = vcmp.lt.s32.totalorder %v2255, 1
        %vm2275 = vcmp.lt.s32.totalorder %v2255, 2
        %vm2276 = vcmp.lt.s32.totalorder %v2255, 3
        %vm2277 = vcmp.lt.s32.totalorder %v2255, 4
        %v2278 = vsel %vm2274, %v2258, %v2261
        %v2279 = vsel %vm2277, %v2267, 2102212464
        %v2280 = vsel %vm2276, %v2264, %v2279
        %v2281 = vsel %vm2275, %v2278, %v2280
        %v2282 = vsel %vm2274, %v2261, %v2264
        %v2283 = vsel %vm2277, %v2270, 920167782
        %v2284 = vsel %vm2276, %v2267, %v2283
        %v2285 = vsel %vm2275, %v2282, %v2284
        %v2286 = vsel %vm2274, %v2264, %v2267
        %v2287 = vsel %vm2277, %v2273, 1326507024
        %v2288 = vsel %vm2276, %v2270, %v2287
        %v2289 = vsel %vm2275, %v2286, %v2288
        %v2290 = vshll.u32 %v2250, 8
        %v2291 = vmul.u32.u64.compose %v2290, %v2289
        %v2292 = vextract.low.u32 %v2291
        %v2293 = vextract.high.u32 %v2291
        %v2294 = vmul.u32.u64.compose %v2290, %v2285
        %v2295 = vextract.low.u32 %v2294
        %v2296 = vextract.high.u32 %v2294
        %v2297 = vmul.u32 %v2290, %v2281
        %v2298 = vadd.s32 %v2293, %v2295
        %vm2299 = vc.u32 %v2293, %v2295
        %v2300 = vadd.s32 %v2296, 1
        %v2301 = vsel %vm2299, %v2300, %v2296
        %v2302 = vadd.s32 %v2297, %v2301
        %v2303 = vadd.s32 %v2302, 536870912
        %v2304 = vshrl.u32 %v2303, 30
        %v2305 = vshll.u32 %v2304, 30
        %v2306 = vsub.s32 %v2302, %v2305
        %vm2307 = vcmp.lt.s32.totalorder %v2306, 0
        %v2308 = vsub.s32 0, %v2306
        %v2309 = vsel %vm2307, %v2308, %v2306
        %v2310 = vclz %v2309
        %v2311 = vsub.s32 %v2310, 2
        %vm2312 = vcmp.gt.s32.totalorder 0, %v2311
        %v2313 = vsel %vm2312, 0, %v2311
        %v2314 = vsub.s32 32, %v2313
        %v2315 = vshll.u32 %v2306, %v2313
        %v2316 = vshrl.u32 %v2298, %v2314
        %v2317 = vor.u32 %v2315, %v2316
        %v2318 = vsub.s32 4294967266, %v2313
        %v2319 = vadd.s32 %v2318, 127
        %v2320 = vshll.u32 %v2319, 23
        %v2321 = vor.u32 4788187, %v2320
        %v2322 = vand.u32 2147483647, %v2321
        %v2324 = vcvt.s32.f32 %v2317
        %v2325 = vmul.f32 %v2324, %v2322
        %v2326 = vxor.u32 %v2325, 2147483648
        %v2327 = vsel %vm2244, %v2326, %v2325
        %v2328 = vsub.s32 4, %v2304
        %v2329 = vsel %vm2244, %v2328, %v2304
        %v2330 = vsel %vm2243, %v656, %v2327
        %v2331 = vsel %vm2243, 0, %v2329
        %v2332 = vcosq.f32.pop %v2330
        %v2333 = vsinq.f32.pop %v2330
        %vm2334 = vweird.f32 %v656
        %v2335 = vadd.s32 %v2331, 3
        %v2336 = vand.u32 %v2335, 3
        %vm2337 = vcmp.lt.s32.totalorder %v2336, 2
        %vm2338 = vcmp.eq.s32.totalorder %v2336, 0
        %v2339 = vxor.u32 %v2333, 2147483648
        %v2340 = vsel %vm2338, %v2332, %v2339
        %vm2341 = vcmp.eq.s32.totalorder %v2336, 2
        %v2342 = vxor.u32 %v2332, 2147483648
        %v2343 = vsel %vm2341, %v2342, %v2333
        %v2344 = vsel %vm2337, %v2340, %v2343
        %v2345 = vsel %vm2334, nan, %v2344
        %v2346 = vand.u32 2147483647, %v547
        %vm2347 = vcmp.le.f32.partialorder %v2346, 0.7853982
        %vm2348 = vcmp.lt.s32.totalorder %v547, 0
        %v2349 = vand.u32 %v547, 2139095040
        %v2350 = vshrl.u32 %v2349, 23
        %v2351 = vsub.s32 %v2350, 127
        %v2352 = vand.u32 2147483647, %v547
        %v2353 = vand.u32 %v2352, 8388607
        %v2354 = vor.u32 %v2353, 8388608
        %v2355 = vsub.s32 0, %v2354
        %v2356 = vadd.s32 %v2351, 1
        %vm2357 = vcmp.gt.s32.totalorder %v2356, 0
        %v2358 = vsel %vm2357, %v2356, 0
        %v2359 = vshrl.u32 %v2358, 5
        %v2360 = vand.u32 %v2358, 31
        %v2361 = vsub.s32 32, %v2360
        %v2362 = vshrl.u32 683565275, %v2361
        %v2363 = vshll.u32 683565275, %v2360
        %v2364 = vshrl.u32 2475754826, %v2361
        %v2365 = vor.u32 %v2363, %v2364
        %v2366 = vshll.u32 2475754826, %v2360
        %v2367 = vshrl.u32 2131351028, %v2361
        %v2368 = vor.u32 %v2366, %v2367
        %v2369 = vshll.u32 2131351028, %v2360
        %v2370 = vshrl.u32 2102212464, %v2361
        %v2371 = vor.u32 %v2369, %v2370
        %v2372 = vshll.u32 2102212464, %v2360
        %v2373 = vshrl.u32 920167782, %v2361
        %v2374 = vor.u32 %v2372, %v2373
        %v2375 = vshll.u32 920167782, %v2360
        %v2376 = vshrl.u32 1326507024, %v2361
        %v2377 = vor.u32 %v2375, %v2376
        %vm2378 = vcmp.lt.s32.totalorder %v2359, 1
        %vm2379 = vcmp.lt.s32.totalorder %v2359, 2
        %vm2380 = vcmp.lt.s32.totalorder %v2359, 3
        %vm2381 = vcmp.lt.s32.totalorder %v2359, 4
        %v2382 = vsel %vm2378, %v2362, %v2365
        %v2383 = vsel %vm2381, %v2371, 2102212464
        %v2384 = vsel %vm2380, %v2368, %v2383
        %v2385 = vsel %vm2379, %v2382, %v2384
        %v2386 = vsel %vm2378, %v2365, %v2368
        %v2387 = vsel %vm2381, %v2374, 920167782
        %v2388 = vsel %vm2380, %v2371, %v2387
        %v2389 = vsel %vm2379, %v2386, %v2388
        %v2390 = vsel %vm2378, %v2368, %v2371
        %v2391 = vsel %vm2381, %v2377, 1326507024
        %v2392 = vsel %vm2380, %v2374, %v2391
        %v2393 = vsel %vm2379, %v2390, %v2392
        %v2394 = vshll.u32 %v2354, 8
        %v2395 = vmul.u32.u64.compose %v2394, %v2393
        %v2396 = vextract.low.u32 %v2395
        %v2397 = vextract.high.u32 %v2395
        %v2398 = vmul.u32.u64.compose %v2394, %v2389
        %v2399 = vextract.low.u32 %v2398
        %v2400 = vextract.high.u32 %v2398
        %v2401 = vmul.u32 %v2394, %v2385
        %v2402 = vadd.s32 %v2397, %v2399
        %vm2403 = vc.u32 %v2397, %v2399
        %v2404 = vadd.s32 %v2400, 1
        %v2405 = vsel %vm2403, %v2404, %v2400
        %v2406 = vadd.s32 %v2401, %v2405
        %v2407 = vadd.s32 %v2406, 536870912
        %v2408 = vshrl.u32 %v2407, 30
        %v2409 = vshll.u32 %v2408, 30
        %v2410 = vsub.s32 %v2406, %v2409
        %vm2411 = vcmp.lt.s32.totalorder %v2410, 0
        %v2412 = vsub.s32 0, %v2410
        %v2413 = vsel %vm2411, %v2412, %v2410
        %v2414 = vclz %v2413
        %v2415 = vsub.s32 %v2414, 2
        %vm2416 = vcmp.gt.s32.totalorder 0, %v2415
        %v2417 = vsel %vm2416, 0, %v2415
        %v2418 = vsub.s32 32, %v2417
        %v2419 = vshll.u32 %v2410, %v2417
        %v2420 = vshrl.u32 %v2402, %v2418
        %v2421 = vor.u32 %v2419, %v2420
        %v2422 = vsub.s32 4294967266, %v2417
        %v2423 = vadd.s32 %v2422, 127
        %v2424 = vshll.u32 %v2423, 23
        %v2425 = vor.u32 4788187, %v2424
        %v2426 = vand.u32 2147483647, %v2425
        %v2428 = vcvt.s32.f32 %v2421
        %v2429 = vmul.f32 %v2428, %v2426
        %v2430 = vxor.u32 %v2429, 2147483648
        %v2431 = vsel %vm2348, %v2430, %v2429
        %v2432 = vsub.s32 4, %v2408
        %v2433 = vsel %vm2348, %v2432, %v2408
        %v2434 = vsel %vm2347, %v547, %v2431
        %v2435 = vsel %vm2347, 0, %v2433
        %v2436 = vcosq.f32.pop %v2434
        %v2437 = vsinq.f32.pop %v2434
        %vm2438 = vweird.f32 %v547
        %v2439 = vadd.s32 %v2435, 3
        %v2440 = vand.u32 %v2439, 3
        %vm2441 = vcmp.lt.s32.totalorder %v2440, 2
        %vm2442 = vcmp.eq.s32.totalorder %v2440, 0
        %v2443 = vxor.u32 %v2437, 2147483648
        %v2444 = vsel %vm2442, %v2436, %v2443
        %vm2445 = vcmp.eq.s32.totalorder %v2440, 2
        %v2446 = vxor.u32 %v2436, 2147483648
        %v2447 = vsel %vm2445, %v2446, %v2437
        %v2448 = vsel %vm2441, %v2444, %v2447
        %v2449 = vsel %vm2438, nan, %v2448
        %v2450 = vand.u32 2147483647, %v549
        %vm2451 = vcmp.le.f32.partialorder %v2450, 0.7853982
        %vm2452 = vcmp.lt.s32.totalorder %v549, 0
        %v2453 = vand.u32 %v549, 2139095040
        %v2454 = vshrl.u32 %v2453, 23
        %v2455 = vsub.s32 %v2454, 127
        %v2456 = vand.u32 2147483647, %v549
        %v2457 = vand.u32 %v2456, 8388607
        %v2458 = vor.u32 %v2457, 8388608
        %v2459 = vsub.s32 0, %v2458
        %v2460 = vadd.s32 %v2455, 1
        %vm2461 = vcmp.gt.s32.totalorder %v2460, 0
        %v2462 = vsel %vm2461, %v2460, 0
        %v2463 = vshrl.u32 %v2462, 5
        %v2464 = vand.u32 %v2462, 31
        %v2465 = vsub.s32 32, %v2464
        %v2466 = vshrl.u32 683565275, %v2465
        %v2467 = vshll.u32 683565275, %v2464
        %v2468 = vshrl.u32 2475754826, %v2465
        %v2469 = vor.u32 %v2467, %v2468
        %v2470 = vshll.u32 2475754826, %v2464
        %v2471 = vshrl.u32 2131351028, %v2465
        %v2472 = vor.u32 %v2470, %v2471
        %v2473 = vshll.u32 2131351028, %v2464
        %v2474 = vshrl.u32 2102212464, %v2465
        %v2475 = vor.u32 %v2473, %v2474
        %v2476 = vshll.u32 2102212464, %v2464
        %v2477 = vshrl.u32 920167782, %v2465
        %v2478 = vor.u32 %v2476, %v2477
        %v2479 = vshll.u32 920167782, %v2464
        %v2480 = vshrl.u32 1326507024, %v2465
        %v2481 = vor.u32 %v2479, %v2480
        %vm2482 = vcmp.lt.s32.totalorder %v2463, 1
        %vm2483 = vcmp.lt.s32.totalorder %v2463, 2
        %vm2484 = vcmp.lt.s32.totalorder %v2463, 3
        %vm2485 = vcmp.lt.s32.totalorder %v2463, 4
        %v2486 = vsel %vm2482, %v2466, %v2469
        %v2487 = vsel %vm2485, %v2475, 2102212464
        %v2488 = vsel %vm2484, %v2472, %v2487
        %v2489 = vsel %vm2483, %v2486, %v2488
        %v2490 = vsel %vm2482, %v2469, %v2472
        %v2491 = vsel %vm2485, %v2478, 920167782
        %v2492 = vsel %vm2484, %v2475, %v2491
        %v2493 = vsel %vm2483, %v2490, %v2492
        %v2494 = vsel %vm2482, %v2472, %v2475
        %v2495 = vsel %vm2485, %v2481, 1326507024
        %v2496 = vsel %vm2484, %v2478, %v2495
        %v2497 = vsel %vm2483, %v2494, %v2496
        %v2498 = vshll.u32 %v2458, 8
        %v2499 = vmul.u32.u64.compose %v2498, %v2497
        %v2500 = vextract.low.u32 %v2499
        %v2501 = vextract.high.u32 %v2499
        %v2502 = vmul.u32.u64.compose %v2498, %v2493
        %v2503 = vextract.low.u32 %v2502
        %v2504 = vextract.high.u32 %v2502
        %v2505 = vmul.u32 %v2498, %v2489
        %v2506 = vadd.s32 %v2501, %v2503
        %vm2507 = vc.u32 %v2501, %v2503
        %v2508 = vadd.s32 %v2504, 1
        %v2509 = vsel %vm2507, %v2508, %v2504
        %v2510 = vadd.s32 %v2505, %v2509
        %v2511 = vadd.s32 %v2510, 536870912
        %v2512 = vshrl.u32 %v2511, 30
        %v2513 = vshll.u32 %v2512, 30
        %v2514 = vsub.s32 %v2510, %v2513
        %vm2515 = vcmp.lt.s32.totalorder %v2514, 0
        %v2516 = vsub.s32 0, %v2514
        %v2517 = vsel %vm2515, %v2516, %v2514
        %v2518 = vclz %v2517
        %v2519 = vsub.s32 %v2518, 2
        %vm2520 = vcmp.gt.s32.totalorder 0, %v2519
        %v2521 = vsel %vm2520, 0, %v2519
        %v2522 = vsub.s32 32, %v2521
        %v2523 = vshll.u32 %v2514, %v2521
        %v2524 = vshrl.u32 %v2506, %v2522
        %v2525 = vor.u32 %v2523, %v2524
        %v2526 = vsub.s32 4294967266, %v2521
        %v2527 = vadd.s32 %v2526, 127
        %v2528 = vshll.u32 %v2527, 23
        %v2529 = vor.u32 4788187, %v2528
        %v2530 = vand.u32 2147483647, %v2529
        %v2532 = vcvt.s32.f32 %v2525
        %v2533 = vmul.f32 %v2532, %v2530
        %v2534 = vxor.u32 %v2533, 2147483648
        %v2535 = vsel %vm2452, %v2534, %v2533
        %v2536 = vsub.s32 4, %v2512
        %v2537 = vsel %vm2452, %v2536, %v2512
        %v2538 = vsel %vm2451, %v549, %v2535
        %v2539 = vsel %vm2451, 0, %v2537
        %v2540 = vcosq.f32.pop %v2538
        %v2541 = vsinq.f32.pop %v2538
        %vm2542 = vweird.f32 %v549
        %v2543 = vadd.s32 %v2539, 3
        %v2544 = vand.u32 %v2543, 3
        %vm2545 = vcmp.lt.s32.totalorder %v2544, 2
        %vm2546 = vcmp.eq.s32.totalorder %v2544, 0
        %v2547 = vxor.u32 %v2541, 2147483648
        %v2548 = vsel %vm2546, %v2540, %v2547
        %vm2549 = vcmp.eq.s32.totalorder %v2544, 2
        %v2550 = vxor.u32 %v2540, 2147483648
        %v2551 = vsel %vm2549, %v2550, %v2541
        %v2552 = vsel %vm2545, %v2548, %v2551
        %v2553 = vsel %vm2542, nan, %v2552
        %v2554 = vand.u32 2147483647, %v660
        %vm2555 = vcmp.le.f32.partialorder %v2554, 0.7853982
        %vm2556 = vcmp.lt.s32.totalorder %v660, 0
        %v2557 = vand.u32 %v660, 2139095040
        %v2558 = vshrl.u32 %v2557, 23
        %v2559 = vsub.s32 %v2558, 127
        %v2560 = vand.u32 2147483647, %v660
        %v2561 = vand.u32 %v2560, 8388607
        %v2562 = vor.u32 %v2561, 8388608
        %v2563 = vsub.s32 0, %v2562
        %v2564 = vadd.s32 %v2559, 1
        %vm2565 = vcmp.gt.s32.totalorder %v2564, 0
        %v2566 = vsel %vm2565, %v2564, 0
        %v2567 = vshrl.u32 %v2566, 5
        %v2568 = vand.u32 %v2566, 31
        %v2569 = vsub.s32 32, %v2568
        %v2570 = vshrl.u32 683565275, %v2569
        %v2571 = vshll.u32 683565275, %v2568
        %v2572 = vshrl.u32 2475754826, %v2569
        %v2573 = vor.u32 %v2571, %v2572
        %v2574 = vshll.u32 2475754826, %v2568
        %v2575 = vshrl.u32 2131351028, %v2569
        %v2576 = vor.u32 %v2574, %v2575
        %v2577 = vshll.u32 2131351028, %v2568
        %v2578 = vshrl.u32 2102212464, %v2569
        %v2579 = vor.u32 %v2577, %v2578
        %v2580 = vshll.u32 2102212464, %v2568
        %v2581 = vshrl.u32 920167782, %v2569
        %v2582 = vor.u32 %v2580, %v2581
        %v2583 = vshll.u32 920167782, %v2568
        %v2584 = vshrl.u32 1326507024, %v2569
        %v2585 = vor.u32 %v2583, %v2584
        %vm2586 = vcmp.lt.s32.totalorder %v2567, 1
        %vm2587 = vcmp.lt.s32.totalorder %v2567, 2
        %vm2588 = vcmp.lt.s32.totalorder %v2567, 3
        %vm2589 = vcmp.lt.s32.totalorder %v2567, 4
        %v2590 = vsel %vm2586, %v2570, %v2573
        %v2591 = vsel %vm2589, %v2579, 2102212464
        %v2592 = vsel %vm2588, %v2576, %v2591
        %v2593 = vsel %vm2587, %v2590, %v2592
        %v2594 = vsel %vm2586, %v2573, %v2576
        %v2595 = vsel %vm2589, %v2582, 920167782
        %v2596 = vsel %vm2588, %v2579, %v2595
        %v2597 = vsel %vm2587, %v2594, %v2596
        %v2598 = vsel %vm2586, %v2576, %v2579
        %v2599 = vsel %vm2589, %v2585, 1326507024
        %v2600 = vsel %vm2588, %v2582, %v2599
        %v2601 = vsel %vm2587, %v2598, %v2600
        %v2602 = vshll.u32 %v2562, 8
        %v2603 = vmul.u32.u64.compose %v2602, %v2601
        %v2604 = vextract.low.u32 %v2603
        %v2605 = vextract.high.u32 %v2603
        %v2606 = vmul.u32.u64.compose %v2602, %v2597
        %v2607 = vextract.low.u32 %v2606
        %v2608 = vextract.high.u32 %v2606
        %v2609 = vmul.u32 %v2602, %v2593
        %v2610 = vadd.s32 %v2605, %v2607
        %vm2611 = vc.u32 %v2605, %v2607
        %v2612 = vadd.s32 %v2608, 1
        %v2613 = vsel %vm2611, %v2612, %v2608
        %v2614 = vadd.s32 %v2609, %v2613
        %v2615 = vadd.s32 %v2614, 536870912
        %v2616 = vshrl.u32 %v2615, 30
        %v2617 = vshll.u32 %v2616, 30
        %v2618 = vsub.s32 %v2614, %v2617
        %vm2619 = vcmp.lt.s32.totalorder %v2618, 0
        %v2620 = vsub.s32 0, %v2618
        %v2621 = vsel %vm2619, %v2620, %v2618
        %v2622 = vclz %v2621
        %v2623 = vsub.s32 %v2622, 2
        %vm2624 = vcmp.gt.s32.totalorder 0, %v2623
        %v2625 = vsel %vm2624, 0, %v2623
        %v2626 = vsub.s32 32, %v2625
        %v2627 = vshll.u32 %v2618, %v2625
        %v2628 = vshrl.u32 %v2610, %v2626
        %v2629 = vor.u32 %v2627, %v2628
        %v2630 = vsub.s32 4294967266, %v2625
        %v2631 = vadd.s32 %v2630, 127
        %v2632 = vshll.u32 %v2631, 23
        %v2633 = vor.u32 4788187, %v2632
        %v2634 = vand.u32 2147483647, %v2633
        %v2636 = vcvt.s32.f32 %v2629
        %v2637 = vmul.f32 %v2636, %v2634
        %v2638 = vxor.u32 %v2637, 2147483648
        %v2639 = vsel %vm2556, %v2638, %v2637
        %v2640 = vsub.s32 4, %v2616
        %v2641 = vsel %vm2556, %v2640, %v2616
        %v2642 = vsel %vm2555, %v660, %v2639
        %v2643 = vsel %vm2555, 0, %v2641
        %v2644 = vcosq.f32.pop %v2642
        %v2645 = vsinq.f32.pop %v2642
        %vm2646 = vweird.f32 %v660
        %v2647 = vadd.s32 %v2643, 3
        %v2648 = vand.u32 %v2647, 3
        %vm2649 = vcmp.lt.s32.totalorder %v2648, 2
        %vm2650 = vcmp.eq.s32.totalorder %v2648, 0
        %v2651 = vxor.u32 %v2645, 2147483648
        %v2652 = vsel %vm2650, %v2644, %v2651
        %vm2653 = vcmp.eq.s32.totalorder %v2648, 2
        %v2654 = vxor.u32 %v2644, 2147483648
        %v2655 = vsel %vm2653, %v2654, %v2645
        %v2656 = vsel %vm2649, %v2652, %v2655
        %v2657 = vsel %vm2646, nan, %v2656
        %v2658 = vand.u32 2147483647, %v662
        %vm2659 = vcmp.le.f32.partialorder %v2658, 0.7853982
        %vm2660 = vcmp.lt.s32.totalorder %v662, 0
        %v2661 = vand.u32 %v662, 2139095040
        %v2662 = vshrl.u32 %v2661, 23
        %v2663 = vsub.s32 %v2662, 127
        %v2664 = vand.u32 2147483647, %v662
        %v2665 = vand.u32 %v2664, 8388607
        %v2666 = vor.u32 %v2665, 8388608
        %v2667 = vsub.s32 0, %v2666
        %v2668 = vadd.s32 %v2663, 1
        %vm2669 = vcmp.gt.s32.totalorder %v2668, 0
        %v2670 = vsel %vm2669, %v2668, 0
        %v2671 = vshrl.u32 %v2670, 5
        %v2672 = vand.u32 %v2670, 31
        %v2673 = vsub.s32 32, %v2672
        %v2674 = vshrl.u32 683565275, %v2673
        %v2675 = vshll.u32 683565275, %v2672
        %v2676 = vshrl.u32 2475754826, %v2673
        %v2677 = vor.u32 %v2675, %v2676
        %v2678 = vshll.u32 2475754826, %v2672
        %v2679 = vshrl.u32 2131351028, %v2673
        %v2680 = vor.u32 %v2678, %v2679
        %v2681 = vshll.u32 2131351028, %v2672
        %v2682 = vshrl.u32 2102212464, %v2673
        %v2683 = vor.u32 %v2681, %v2682
        %v2684 = vshll.u32 2102212464, %v2672
        %v2685 = vshrl.u32 920167782, %v2673
        %v2686 = vor.u32 %v2684, %v2685
        %v2687 = vshll.u32 920167782, %v2672
        %v2688 = vshrl.u32 1326507024, %v2673
        %v2689 = vor.u32 %v2687, %v2688
        %vm2690 = vcmp.lt.s32.totalorder %v2671, 1
        %vm2691 = vcmp.lt.s32.totalorder %v2671, 2
        %vm2692 = vcmp.lt.s32.totalorder %v2671, 3
        %vm2693 = vcmp.lt.s32.totalorder %v2671, 4
        %v2694 = vsel %vm2690, %v2674, %v2677
        %v2695 = vsel %vm2693, %v2683, 2102212464
        %v2696 = vsel %vm2692, %v2680, %v2695
        %v2697 = vsel %vm2691, %v2694, %v2696
        %v2698 = vsel %vm2690, %v2677, %v2680
        %v2699 = vsel %vm2693, %v2686, 920167782
        %v2700 = vsel %vm2692, %v2683, %v2699
        %v2701 = vsel %vm2691, %v2698, %v2700
        %v2702 = vsel %vm2690, %v2680, %v2683
        %v2703 = vsel %vm2693, %v2689, 1326507024
        %v2704 = vsel %vm2692, %v2686, %v2703
        %v2705 = vsel %vm2691, %v2702, %v2704
        %v2706 = vshll.u32 %v2666, 8
        %v2707 = vmul.u32.u64.compose %v2706, %v2705
        %v2708 = vextract.low.u32 %v2707
        %v2709 = vextract.high.u32 %v2707
        %v2710 = vmul.u32.u64.compose %v2706, %v2701
        %v2711 = vextract.low.u32 %v2710
        %v2712 = vextract.high.u32 %v2710
        %v2713 = vmul.u32 %v2706, %v2697
        %v2714 = vadd.s32 %v2709, %v2711
        %vm2715 = vc.u32 %v2709, %v2711
        %v2716 = vadd.s32 %v2712, 1
        %v2717 = vsel %vm2715, %v2716, %v2712
        %v2718 = vadd.s32 %v2713, %v2717
        %v2719 = vadd.s32 %v2718, 536870912
        %v2720 = vshrl.u32 %v2719, 30
        %v2721 = vshll.u32 %v2720, 30
        %v2722 = vsub.s32 %v2718, %v2721
        %vm2723 = vcmp.lt.s32.totalorder %v2722, 0
        %v2724 = vsub.s32 0, %v2722
        %v2725 = vsel %vm2723, %v2724, %v2722
        %v2726 = vclz %v2725
        %v2727 = vsub.s32 %v2726, 2
        %vm2728 = vcmp.gt.s32.totalorder 0, %v2727
        %v2729 = vsel %vm2728, 0, %v2727
        %v2730 = vsub.s32 32, %v2729
        %v2731 = vshll.u32 %v2722, %v2729
        %v2732 = vshrl.u32 %v2714, %v2730
        %v2733 = vor.u32 %v2731, %v2732
        %v2734 = vsub.s32 4294967266, %v2729
        %v2735 = vadd.s32 %v2734, 127
        %v2736 = vshll.u32 %v2735, 23
        %v2737 = vor.u32 4788187, %v2736
        %v2738 = vand.u32 2147483647, %v2737
        %v2740 = vcvt.s32.f32 %v2733
        %v2741 = vmul.f32 %v2740, %v2738
        %v2742 = vxor.u32 %v2741, 2147483648
        %v2743 = vsel %vm2660, %v2742, %v2741
        %v2744 = vsub.s32 4, %v2720
        %v2745 = vsel %vm2660, %v2744, %v2720
        %v2746 = vsel %vm2659, %v662, %v2743
        %v2747 = vsel %vm2659, 0, %v2745
        %v2748 = vcosq.f32.pop %v2746
        %v2749 = vsinq.f32.pop %v2746
        %vm2750 = vweird.f32 %v662
        %v2751 = vadd.s32 %v2747, 3
        %v2752 = vand.u32 %v2751, 3
        %vm2753 = vcmp.lt.s32.totalorder %v2752, 2
        %vm2754 = vcmp.eq.s32.totalorder %v2752, 0
        %v2755 = vxor.u32 %v2749, 2147483648
        %v2756 = vsel %vm2754, %v2748, %v2755
        %vm2757 = vcmp.eq.s32.totalorder %v2752, 2
        %v2758 = vxor.u32 %v2748, 2147483648
        %v2759 = vsel %vm2757, %v2758, %v2749
        %v2760 = vsel %vm2753, %v2756, %v2759
        %v2761 = vsel %vm2750, nan, %v2760
        %v2762 = vand.u32 2147483647, %v553
        %vm2763 = vcmp.le.f32.partialorder %v2762, 0.7853982
        %vm2764 = vcmp.lt.s32.totalorder %v553, 0
        %v2765 = vand.u32 %v553, 2139095040
        %v2766 = vshrl.u32 %v2765, 23
        %v2767 = vsub.s32 %v2766, 127
        %v2768 = vand.u32 2147483647, %v553
        %v2769 = vand.u32 %v2768, 8388607
        %v2770 = vor.u32 %v2769, 8388608
        %v2771 = vsub.s32 0, %v2770
        %v2772 = vadd.s32 %v2767, 1
        %vm2773 = vcmp.gt.s32.totalorder %v2772, 0
        %v2774 = vsel %vm2773, %v2772, 0
        %v2775 = vshrl.u32 %v2774, 5
        %v2776 = vand.u32 %v2774, 31
        %v2777 = vsub.s32 32, %v2776
        %v2778 = vshrl.u32 683565275, %v2777
        %v2779 = vshll.u32 683565275, %v2776
        %v2780 = vshrl.u32 2475754826, %v2777
        %v2781 = vor.u32 %v2779, %v2780
        %v2782 = vshll.u32 2475754826, %v2776
        %v2783 = vshrl.u32 2131351028, %v2777
        %v2784 = vor.u32 %v2782, %v2783
        %v2785 = vshll.u32 2131351028, %v2776
        %v2786 = vshrl.u32 2102212464, %v2777
        %v2787 = vor.u32 %v2785, %v2786
        %v2788 = vshll.u32 2102212464, %v2776
        %v2789 = vshrl.u32 920167782, %v2777
        %v2790 = vor.u32 %v2788, %v2789
        %v2791 = vshll.u32 920167782, %v2776
        %v2792 = vshrl.u32 1326507024, %v2777
        %v2793 = vor.u32 %v2791, %v2792
        %vm2794 = vcmp.lt.s32.totalorder %v2775, 1
        %vm2795 = vcmp.lt.s32.totalorder %v2775, 2
        %vm2796 = vcmp.lt.s32.totalorder %v2775, 3
        %vm2797 = vcmp.lt.s32.totalorder %v2775, 4
        %v2798 = vsel %vm2794, %v2778, %v2781
        %v2799 = vsel %vm2797, %v2787, 2102212464
        %v2800 = vsel %vm2796, %v2784, %v2799
        %v2801 = vsel %vm2795, %v2798, %v2800
        %v2802 = vsel %vm2794, %v2781, %v2784
        %v2803 = vsel %vm2797, %v2790, 920167782
        %v2804 = vsel %vm2796, %v2787, %v2803
        %v2805 = vsel %vm2795, %v2802, %v2804
        %v2806 = vsel %vm2794, %v2784, %v2787
        %v2807 = vsel %vm2797, %v2793, 1326507024
        %v2808 = vsel %vm2796, %v2790, %v2807
        %v2809 = vsel %vm2795, %v2806, %v2808
        %v2810 = vshll.u32 %v2770, 8
        %v2811 = vmul.u32.u64.compose %v2810, %v2809
        %v2812 = vextract.low.u32 %v2811
        %v2813 = vextract.high.u32 %v2811
        %v2814 = vmul.u32.u64.compose %v2810, %v2805
        %v2815 = vextract.low.u32 %v2814
        %v2816 = vextract.high.u32 %v2814
        %v2817 = vmul.u32 %v2810, %v2801
        %v2818 = vadd.s32 %v2813, %v2815
        %vm2819 = vc.u32 %v2813, %v2815
        %v2820 = vadd.s32 %v2816, 1
        %v2821 = vsel %vm2819, %v2820, %v2816
        %v2822 = vadd.s32 %v2817, %v2821
        %v2823 = vadd.s32 %v2822, 536870912
        %v2824 = vshrl.u32 %v2823, 30
        %v2825 = vshll.u32 %v2824, 30
        %v2826 = vsub.s32 %v2822, %v2825
        %vm2827 = vcmp.lt.s32.totalorder %v2826, 0
        %v2828 = vsub.s32 0, %v2826
        %v2829 = vsel %vm2827, %v2828, %v2826
        %v2830 = vclz %v2829
        %v2831 = vsub.s32 %v2830, 2
        %vm2832 = vcmp.gt.s32.totalorder 0, %v2831
        %v2833 = vsel %vm2832, 0, %v2831
        %v2834 = vsub.s32 32, %v2833
        %v2835 = vshll.u32 %v2826, %v2833
        %v2836 = vshrl.u32 %v2818, %v2834
        %v2837 = vor.u32 %v2835, %v2836
        %v2838 = vsub.s32 4294967266, %v2833
        %v2839 = vadd.s32 %v2838, 127
        %v2840 = vshll.u32 %v2839, 23
        %v2841 = vor.u32 4788187, %v2840
        %v2842 = vand.u32 2147483647, %v2841
        %v2844 = vcvt.s32.f32 %v2837
        %v2845 = vmul.f32 %v2844, %v2842
        %v2846 = vxor.u32 %v2845, 2147483648
        %v2847 = vsel %vm2764, %v2846, %v2845
        %v2848 = vsub.s32 4, %v2824
        %v2849 = vsel %vm2764, %v2848, %v2824
        %v2850 = vsel %vm2763, %v553, %v2847
        %v2851 = vsel %vm2763, 0, %v2849
        %v2852 = vcosq.f32.pop %v2850
        %v2853 = vsinq.f32.pop %v2850
        %vm2854 = vweird.f32 %v553
        %v2855 = vadd.s32 %v2851, 3
        %v2856 = vand.u32 %v2855, 3
        %vm2857 = vcmp.lt.s32.totalorder %v2856, 2
        %vm2858 = vcmp.eq.s32.totalorder %v2856, 0
        %v2859 = vxor.u32 %v2853, 2147483648
        %v2860 = vsel %vm2858, %v2852, %v2859
        %vm2861 = vcmp.eq.s32.totalorder %v2856, 2
        %v2862 = vxor.u32 %v2852, 2147483648
        %v2863 = vsel %vm2861, %v2862, %v2853
        %v2864 = vsel %vm2857, %v2860, %v2863
        %v2865 = vsel %vm2854, nan, %v2864
        %v2866 = vand.u32 2147483647, %v555
        %vm2867 = vcmp.le.f32.partialorder %v2866, 0.7853982
        %vm2868 = vcmp.lt.s32.totalorder %v555, 0
        %v2869 = vand.u32 %v555, 2139095040
        %v2870 = vshrl.u32 %v2869, 23
        %v2871 = vsub.s32 %v2870, 127
        %v2872 = vand.u32 2147483647, %v555
        %v2873 = vand.u32 %v2872, 8388607
        %v2874 = vor.u32 %v2873, 8388608
        %v2875 = vsub.s32 0, %v2874
        %v2876 = vadd.s32 %v2871, 1
        %vm2877 = vcmp.gt.s32.totalorder %v2876, 0
        %v2878 = vsel %vm2877, %v2876, 0
        %v2879 = vshrl.u32 %v2878, 5
        %v2880 = vand.u32 %v2878, 31
        %v2881 = vsub.s32 32, %v2880
        %v2882 = vshrl.u32 683565275, %v2881
        %v2883 = vshll.u32 683565275, %v2880
        %v2884 = vshrl.u32 2475754826, %v2881
        %v2885 = vor.u32 %v2883, %v2884
        %v2886 = vshll.u32 2475754826, %v2880
        %v2887 = vshrl.u32 2131351028, %v2881
        %v2888 = vor.u32 %v2886, %v2887
        %v2889 = vshll.u32 2131351028, %v2880
        %v2890 = vshrl.u32 2102212464, %v2881
        %v2891 = vor.u32 %v2889, %v2890
        %v2892 = vshll.u32 2102212464, %v2880
        %v2893 = vshrl.u32 920167782, %v2881
        %v2894 = vor.u32 %v2892, %v2893
        %v2895 = vshll.u32 920167782, %v2880
        %v2896 = vshrl.u32 1326507024, %v2881
        %v2897 = vor.u32 %v2895, %v2896
        %vm2898 = vcmp.lt.s32.totalorder %v2879, 1
        %vm2899 = vcmp.lt.s32.totalorder %v2879, 2
        %vm2900 = vcmp.lt.s32.totalorder %v2879, 3
        %vm2901 = vcmp.lt.s32.totalorder %v2879, 4
        %v2902 = vsel %vm2898, %v2882, %v2885
        %v2903 = vsel %vm2901, %v2891, 2102212464
        %v2904 = vsel %vm2900, %v2888, %v2903
        %v2905 = vsel %vm2899, %v2902, %v2904
        %v2906 = vsel %vm2898, %v2885, %v2888
        %v2907 = vsel %vm2901, %v2894, 920167782
        %v2908 = vsel %vm2900, %v2891, %v2907
        %v2909 = vsel %vm2899, %v2906, %v2908
        %v2910 = vsel %vm2898, %v2888, %v2891
        %v2911 = vsel %vm2901, %v2897, 1326507024
        %v2912 = vsel %vm2900, %v2894, %v2911
        %v2913 = vsel %vm2899, %v2910, %v2912
        %v2914 = vshll.u32 %v2874, 8
        %v2915 = vmul.u32.u64.compose %v2914, %v2913
        %v2916 = vextract.low.u32 %v2915
        %v2917 = vextract.high.u32 %v2915
        %v2918 = vmul.u32.u64.compose %v2914, %v2909
        %v2919 = vextract.low.u32 %v2918
        %v2920 = vextract.high.u32 %v2918
        %v2921 = vmul.u32 %v2914, %v2905
        %v2922 = vadd.s32 %v2917, %v2919
        %vm2923 = vc.u32 %v2917, %v2919
        %v2924 = vadd.s32 %v2920, 1
        %v2925 = vsel %vm2923, %v2924, %v2920
        %v2926 = vadd.s32 %v2921, %v2925
        %v2927 = vadd.s32 %v2926, 536870912
        %v2928 = vshrl.u32 %v2927, 30
        %v2929 = vshll.u32 %v2928, 30
        %v2930 = vsub.s32 %v2926, %v2929
        %vm2931 = vcmp.lt.s32.totalorder %v2930, 0
        %v2932 = vsub.s32 0, %v2930
        %v2933 = vsel %vm2931, %v2932, %v2930
        %v2934 = vclz %v2933
        %v2935 = vsub.s32 %v2934, 2
        %vm2936 = vcmp.gt.s32.totalorder 0, %v2935
        %v2937 = vsel %vm2936, 0, %v2935
        %v2938 = vsub.s32 32, %v2937
        %v2939 = vshll.u32 %v2930, %v2937
        %v2940 = vshrl.u32 %v2922, %v2938
        %v2941 = vor.u32 %v2939, %v2940
        %v2942 = vsub.s32 4294967266, %v2937
        %v2943 = vadd.s32 %v2942, 127
        %v2944 = vshll.u32 %v2943, 23
        %v2945 = vor.u32 4788187, %v2944
        %v2946 = vand.u32 2147483647, %v2945
        %v2948 = vcvt.s32.f32 %v2941
        %v2949 = vmul.f32 %v2948, %v2946
        %v2950 = vxor.u32 %v2949, 2147483648
        %v2951 = vsel %vm2868, %v2950, %v2949
        %v2952 = vsub.s32 4, %v2928
        %v2953 = vsel %vm2868, %v2952, %v2928
        %v2954 = vsel %vm2867, %v555, %v2951
        %v2955 = vsel %vm2867, 0, %v2953
        %v2956 = vcosq.f32.pop %v2954
        %v2957 = vsinq.f32.pop %v2954
        %vm2958 = vweird.f32 %v555
        %v2959 = vadd.s32 %v2955, 3
        %v2960 = vand.u32 %v2959, 3
        %vm2961 = vcmp.lt.s32.totalorder %v2960, 2
        %vm2962 = vcmp.eq.s32.totalorder %v2960, 0
        %v2963 = vxor.u32 %v2957, 2147483648
        %v2964 = vsel %vm2962, %v2956, %v2963
        %vm2965 = vcmp.eq.s32.totalorder %v2960, 2
        %v2966 = vxor.u32 %v2956, 2147483648
        %v2967 = vsel %vm2965, %v2966, %v2957
        %v2968 = vsel %vm2961, %v2964, %v2967
        %v2969 = vsel %vm2958, nan, %v2968
        %v2970 = vand.u32 2147483647, %v666
        %vm2971 = vcmp.le.f32.partialorder %v2970, 0.7853982
        %vm2972 = vcmp.lt.s32.totalorder %v666, 0
        %v2973 = vand.u32 %v666, 2139095040
        %v2974 = vshrl.u32 %v2973, 23
        %v2975 = vsub.s32 %v2974, 127
        %v2976 = vand.u32 2147483647, %v666
        %v2977 = vand.u32 %v2976, 8388607
        %v2978 = vor.u32 %v2977, 8388608
        %v2979 = vsub.s32 0, %v2978
        %v2980 = vadd.s32 %v2975, 1
        %vm2981 = vcmp.gt.s32.totalorder %v2980, 0
        %v2982 = vsel %vm2981, %v2980, 0
        %v2983 = vshrl.u32 %v2982, 5
        %v2984 = vand.u32 %v2982, 31
        %v2985 = vsub.s32 32, %v2984
        %v2986 = vshrl.u32 683565275, %v2985
        %v2987 = vshll.u32 683565275, %v2984
        %v2988 = vshrl.u32 2475754826, %v2985
        %v2989 = vor.u32 %v2987, %v2988
        %v2990 = vshll.u32 2475754826, %v2984
        %v2991 = vshrl.u32 2131351028, %v2985
        %v2992 = vor.u32 %v2990, %v2991
        %v2993 = vshll.u32 2131351028, %v2984
        %v2994 = vshrl.u32 2102212464, %v2985
        %v2995 = vor.u32 %v2993, %v2994
        %v2996 = vshll.u32 2102212464, %v2984
        %v2997 = vshrl.u32 920167782, %v2985
        %v2998 = vor.u32 %v2996, %v2997
        %v2999 = vshll.u32 920167782, %v2984
        %v3000 = vshrl.u32 1326507024, %v2985
        %v3001 = vor.u32 %v2999, %v3000
        %vm3002 = vcmp.lt.s32.totalorder %v2983, 1
        %vm3003 = vcmp.lt.s32.totalorder %v2983, 2
        %vm3004 = vcmp.lt.s32.totalorder %v2983, 3
        %vm3005 = vcmp.lt.s32.totalorder %v2983, 4
        %v3006 = vsel %vm3002, %v2986, %v2989
        %v3007 = vsel %vm3005, %v2995, 2102212464
        %v3008 = vsel %vm3004, %v2992, %v3007
        %v3009 = vsel %vm3003, %v3006, %v3008
        %v3010 = vsel %vm3002, %v2989, %v2992
        %v3011 = vsel %vm3005, %v2998, 920167782
        %v3012 = vsel %vm3004, %v2995, %v3011
        %v3013 = vsel %vm3003, %v3010, %v3012
        %v3014 = vsel %vm3002, %v2992, %v2995
        %v3015 = vsel %vm3005, %v3001, 1326507024
        %v3016 = vsel %vm3004, %v2998, %v3015
        %v3017 = vsel %vm3003, %v3014, %v3016
        %v3018 = vshll.u32 %v2978, 8
        %v3019 = vmul.u32.u64.compose %v3018, %v3017
        %v3020 = vextract.low.u32 %v3019
        %v3021 = vextract.high.u32 %v3019
        %v3022 = vmul.u32.u64.compose %v3018, %v3013
        %v3023 = vextract.low.u32 %v3022
        %v3024 = vextract.high.u32 %v3022
        %v3025 = vmul.u32 %v3018, %v3009
        %v3026 = vadd.s32 %v3021, %v3023
        %vm3027 = vc.u32 %v3021, %v3023
        %v3028 = vadd.s32 %v3024, 1
        %v3029 = vsel %vm3027, %v3028, %v3024
        %v3030 = vadd.s32 %v3025, %v3029
        %v3031 = vadd.s32 %v3030, 536870912
        %v3032 = vshrl.u32 %v3031, 30
        %v3033 = vshll.u32 %v3032, 30
        %v3034 = vsub.s32 %v3030, %v3033
        %vm3035 = vcmp.lt.s32.totalorder %v3034, 0
        %v3036 = vsub.s32 0, %v3034
        %v3037 = vsel %vm3035, %v3036, %v3034
        %v3038 = vclz %v3037
        %v3039 = vsub.s32 %v3038, 2
        %vm3040 = vcmp.gt.s32.totalorder 0, %v3039
        %v3041 = vsel %vm3040, 0, %v3039
        %v3042 = vsub.s32 32, %v3041
        %v3043 = vshll.u32 %v3034, %v3041
        %v3044 = vshrl.u32 %v3026, %v3042
        %v3045 = vor.u32 %v3043, %v3044
        %v3046 = vsub.s32 4294967266, %v3041
        %v3047 = vadd.s32 %v3046, 127
        %v3048 = vshll.u32 %v3047, 23
        %v3049 = vor.u32 4788187, %v3048
        %v3050 = vand.u32 2147483647, %v3049
        %v3052 = vcvt.s32.f32 %v3045
        %v3053 = vmul.f32 %v3052, %v3050
        %v3054 = vxor.u32 %v3053, 2147483648
        %v3055 = vsel %vm2972, %v3054, %v3053
        %v3056 = vsub.s32 4, %v3032
        %v3057 = vsel %vm2972, %v3056, %v3032
        %v3058 = vsel %vm2971, %v666, %v3055
        %v3059 = vsel %vm2971, 0, %v3057
        %v3060 = vcosq.f32.pop %v3058
        %v3061 = vsinq.f32.pop %v3058
        %vm3062 = vweird.f32 %v666
        %v3063 = vadd.s32 %v3059, 3
        %v3064 = vand.u32 %v3063, 3
        %vm3065 = vcmp.lt.s32.totalorder %v3064, 2
        %vm3066 = vcmp.eq.s32.totalorder %v3064, 0
        %v3067 = vxor.u32 %v3061, 2147483648
        %v3068 = vsel %vm3066, %v3060, %v3067
        %vm3069 = vcmp.eq.s32.totalorder %v3064, 2
        %v3070 = vxor.u32 %v3060, 2147483648
        %v3071 = vsel %vm3069, %v3070, %v3061
        %v3072 = vsel %vm3065, %v3068, %v3071
        %v3073 = vsel %vm3062, nan, %v3072
        %v3074 = vand.u32 2147483647, %v668
        %vm3075 = vcmp.le.f32.partialorder %v3074, 0.7853982
        %vm3076 = vcmp.lt.s32.totalorder %v668, 0
        %v3077 = vand.u32 %v668, 2139095040
        %v3078 = vshrl.u32 %v3077, 23
        %v3079 = vsub.s32 %v3078, 127
        %v3080 = vand.u32 2147483647, %v668
        %v3081 = vand.u32 %v3080, 8388607
        %v3082 = vor.u32 %v3081, 8388608
        %v3083 = vsub.s32 0, %v3082
        %v3084 = vadd.s32 %v3079, 1
        %vm3085 = vcmp.gt.s32.totalorder %v3084, 0
        %v3086 = vsel %vm3085, %v3084, 0
        %v3087 = vshrl.u32 %v3086, 5
        %v3088 = vand.u32 %v3086, 31
        %v3089 = vsub.s32 32, %v3088
        %v3090 = vshrl.u32 683565275, %v3089
        %v3091 = vshll.u32 683565275, %v3088
        %v3092 = vshrl.u32 2475754826, %v3089
        %v3093 = vor.u32 %v3091, %v3092
        %v3094 = vshll.u32 2475754826, %v3088
        %v3095 = vshrl.u32 2131351028, %v3089
        %v3096 = vor.u32 %v3094, %v3095
        %v3097 = vshll.u32 2131351028, %v3088
        %v3098 = vshrl.u32 2102212464, %v3089
        %v3099 = vor.u32 %v3097, %v3098
        %v3100 = vshll.u32 2102212464, %v3088
        %v3101 = vshrl.u32 920167782, %v3089
        %v3102 = vor.u32 %v3100, %v3101
        %v3103 = vshll.u32 920167782, %v3088
        %v3104 = vshrl.u32 1326507024, %v3089
        %v3105 = vor.u32 %v3103, %v3104
        %vm3106 = vcmp.lt.s32.totalorder %v3087, 1
        %vm3107 = vcmp.lt.s32.totalorder %v3087, 2
        %vm3108 = vcmp.lt.s32.totalorder %v3087, 3
        %vm3109 = vcmp.lt.s32.totalorder %v3087, 4
        %v3110 = vsel %vm3106, %v3090, %v3093
        %v3111 = vsel %vm3109, %v3099, 2102212464
        %v3112 = vsel %vm3108, %v3096, %v3111
        %v3113 = vsel %vm3107, %v3110, %v3112
        %v3114 = vsel %vm3106, %v3093, %v3096
        %v3115 = vsel %vm3109, %v3102, 920167782
        %v3116 = vsel %vm3108, %v3099, %v3115
        %v3117 = vsel %vm3107, %v3114, %v3116
        %v3118 = vsel %vm3106, %v3096, %v3099
        %v3119 = vsel %vm3109, %v3105, 1326507024
        %v3120 = vsel %vm3108, %v3102, %v3119
        %v3121 = vsel %vm3107, %v3118, %v3120
        %v3122 = vshll.u32 %v3082, 8
        %v3123 = vmul.u32.u64.compose %v3122, %v3121
        %v3124 = vextract.low.u32 %v3123
        %v3125 = vextract.high.u32 %v3123
        %v3126 = vmul.u32.u64.compose %v3122, %v3117
        %v3127 = vextract.low.u32 %v3126
        %v3128 = vextract.high.u32 %v3126
        %v3129 = vmul.u32 %v3122, %v3113
        %v3130 = vadd.s32 %v3125, %v3127
        %vm3131 = vc.u32 %v3125, %v3127
        %v3132 = vadd.s32 %v3128, 1
        %v3133 = vsel %vm3131, %v3132, %v3128
        %v3134 = vadd.s32 %v3129, %v3133
        %v3135 = vadd.s32 %v3134, 536870912
        %v3136 = vshrl.u32 %v3135, 30
        %v3137 = vshll.u32 %v3136, 30
        %v3138 = vsub.s32 %v3134, %v3137
        %vm3139 = vcmp.lt.s32.totalorder %v3138, 0
        %v3140 = vsub.s32 0, %v3138
        %v3141 = vsel %vm3139, %v3140, %v3138
        %v3142 = vclz %v3141
        %v3143 = vsub.s32 %v3142, 2
        %vm3144 = vcmp.gt.s32.totalorder 0, %v3143
        %v3145 = vsel %vm3144, 0, %v3143
        %v3146 = vsub.s32 32, %v3145
        %v3147 = vshll.u32 %v3138, %v3145
        %v3148 = vshrl.u32 %v3130, %v3146
        %v3149 = vor.u32 %v3147, %v3148
        %v3150 = vsub.s32 4294967266, %v3145
        %v3151 = vadd.s32 %v3150, 127
        %v3152 = vshll.u32 %v3151, 23
        %v3153 = vor.u32 4788187, %v3152
        %v3154 = vand.u32 2147483647, %v3153
        %v3156 = vcvt.s32.f32 %v3149
        %v3157 = vmul.f32 %v3156, %v3154
        %v3158 = vxor.u32 %v3157, 2147483648
        %v3159 = vsel %vm3076, %v3158, %v3157
        %v3160 = vsub.s32 4, %v3136
        %v3161 = vsel %vm3076, %v3160, %v3136
        %v3162 = vsel %vm3075, %v668, %v3159
        %v3163 = vsel %vm3075, 0, %v3161
        %v3164 = vcosq.f32.pop %v3162
        %v3165 = vsinq.f32.pop %v3162
        %vm3166 = vweird.f32 %v668
        %v3167 = vadd.s32 %v3163, 3
        %v3168 = vand.u32 %v3167, 3
        %vm3169 = vcmp.lt.s32.totalorder %v3168, 2
        %vm3170 = vcmp.eq.s32.totalorder %v3168, 0
        %v3171 = vxor.u32 %v3165, 2147483648
        %v3172 = vsel %vm3170, %v3164, %v3171
        %vm3173 = vcmp.eq.s32.totalorder %v3168, 2
        %v3174 = vxor.u32 %v3164, 2147483648
        %v3175 = vsel %vm3173, %v3174, %v3165
        %v3176 = vsel %vm3169, %v3172, %v3175
        %v3177 = vsel %vm3166, nan, %v3176
        %v3178 = vand.u32 2147483647, %v559
        %vm3179 = vcmp.le.f32.partialorder %v3178, 0.7853982
        %vm3180 = vcmp.lt.s32.totalorder %v559, 0
        %v3181 = vand.u32 %v559, 2139095040
        %v3182 = vshrl.u32 %v3181, 23
        %v3183 = vsub.s32 %v3182, 127
        %v3184 = vand.u32 2147483647, %v559
        %v3185 = vand.u32 %v3184, 8388607
        %v3186 = vor.u32 %v3185, 8388608
        %v3187 = vsub.s32 0, %v3186
        %v3188 = vadd.s32 %v3183, 1
        %vm3189 = vcmp.gt.s32.totalorder %v3188, 0
        %v3190 = vsel %vm3189, %v3188, 0
        %v3191 = vshrl.u32 %v3190, 5
        %v3192 = vand.u32 %v3190, 31
        %v3193 = vsub.s32 32, %v3192
        %v3194 = vshrl.u32 683565275, %v3193
        %v3195 = vshll.u32 683565275, %v3192
        %v3196 = vshrl.u32 2475754826, %v3193
        %v3197 = vor.u32 %v3195, %v3196
        %v3198 = vshll.u32 2475754826, %v3192
        %v3199 = vshrl.u32 2131351028, %v3193
        %v3200 = vor.u32 %v3198, %v3199
        %v3201 = vshll.u32 2131351028, %v3192
        %v3202 = vshrl.u32 2102212464, %v3193
        %v3203 = vor.u32 %v3201, %v3202
        %v3204 = vshll.u32 2102212464, %v3192
        %v3205 = vshrl.u32 920167782, %v3193
        %v3206 = vor.u32 %v3204, %v3205
        %v3207 = vshll.u32 920167782, %v3192
        %v3208 = vshrl.u32 1326507024, %v3193
        %v3209 = vor.u32 %v3207, %v3208
        %vm3210 = vcmp.lt.s32.totalorder %v3191, 1
        %vm3211 = vcmp.lt.s32.totalorder %v3191, 2
        %vm3212 = vcmp.lt.s32.totalorder %v3191, 3
        %vm3213 = vcmp.lt.s32.totalorder %v3191, 4
        %v3214 = vsel %vm3210, %v3194, %v3197
        %v3215 = vsel %vm3213, %v3203, 2102212464
        %v3216 = vsel %vm3212, %v3200, %v3215
        %v3217 = vsel %vm3211, %v3214, %v3216
        %v3218 = vsel %vm3210, %v3197, %v3200
        %v3219 = vsel %vm3213, %v3206, 920167782
        %v3220 = vsel %vm3212, %v3203, %v3219
        %v3221 = vsel %vm3211, %v3218, %v3220
        %v3222 = vsel %vm3210, %v3200, %v3203
        %v3223 = vsel %vm3213, %v3209, 1326507024
        %v3224 = vsel %vm3212, %v3206, %v3223
        %v3225 = vsel %vm3211, %v3222, %v3224
        %v3226 = vshll.u32 %v3186, 8
        %v3227 = vmul.u32.u64.compose %v3226, %v3225
        %v3228 = vextract.low.u32 %v3227
        %v3229 = vextract.high.u32 %v3227
        %v3230 = vmul.u32.u64.compose %v3226, %v3221
        %v3231 = vextract.low.u32 %v3230
        %v3232 = vextract.high.u32 %v3230
        %v3233 = vmul.u32 %v3226, %v3217
        %v3234 = vadd.s32 %v3229, %v3231
        %vm3235 = vc.u32 %v3229, %v3231
        %v3236 = vadd.s32 %v3232, 1
        %v3237 = vsel %vm3235, %v3236, %v3232
        %v3238 = vadd.s32 %v3233, %v3237
        %v3239 = vadd.s32 %v3238, 536870912
        %v3240 = vshrl.u32 %v3239, 30
        %v3241 = vshll.u32 %v3240, 30
        %v3242 = vsub.s32 %v3238, %v3241
        %vm3243 = vcmp.lt.s32.totalorder %v3242, 0
        %v3244 = vsub.s32 0, %v3242
        %v3245 = vsel %vm3243, %v3244, %v3242
        %v3246 = vclz %v3245
        %v3247 = vsub.s32 %v3246, 2
        %vm3248 = vcmp.gt.s32.totalorder 0, %v3247
        %v3249 = vsel %vm3248, 0, %v3247
        %v3250 = vsub.s32 32, %v3249
        %v3251 = vshll.u32 %v3242, %v3249
        %v3252 = vshrl.u32 %v3234, %v3250
        %v3253 = vor.u32 %v3251, %v3252
        %v3254 = vsub.s32 4294967266, %v3249
        %v3255 = vadd.s32 %v3254, 127
        %v3256 = vshll.u32 %v3255, 23
        %v3257 = vor.u32 4788187, %v3256
        %v3258 = vand.u32 2147483647, %v3257
        %v3260 = vcvt.s32.f32 %v3253
        %v3261 = vmul.f32 %v3260, %v3258
        %v3262 = vxor.u32 %v3261, 2147483648
        %v3263 = vsel %vm3180, %v3262, %v3261
        %v3264 = vsub.s32 4, %v3240
        %v3265 = vsel %vm3180, %v3264, %v3240
        %v3266 = vsel %vm3179, %v559, %v3263
        %v3267 = vsel %vm3179, 0, %v3265
        %v3268 = vcosq.f32.pop %v3266
        %v3269 = vsinq.f32.pop %v3266
        %vm3270 = vweird.f32 %v559
        %v3271 = vadd.s32 %v3267, 3
        %v3272 = vand.u32 %v3271, 3
        %vm3273 = vcmp.lt.s32.totalorder %v3272, 2
        %vm3274 = vcmp.eq.s32.totalorder %v3272, 0
        %v3275 = vxor.u32 %v3269, 2147483648
        %v3276 = vsel %vm3274, %v3268, %v3275
        %vm3277 = vcmp.eq.s32.totalorder %v3272, 2
        %v3278 = vxor.u32 %v3268, 2147483648
        %v3279 = vsel %vm3277, %v3278, %v3269
        %v3280 = vsel %vm3273, %v3276, %v3279
        %v3281 = vsel %vm3270, nan, %v3280
        %v3282 = vand.u32 2147483647, %v561
        %vm3283 = vcmp.le.f32.partialorder %v3282, 0.7853982
        %vm3284 = vcmp.lt.s32.totalorder %v561, 0
        %v3285 = vand.u32 %v561, 2139095040
        %v3286 = vshrl.u32 %v3285, 23
        %v3287 = vsub.s32 %v3286, 127
        %v3288 = vand.u32 2147483647, %v561
        %v3289 = vand.u32 %v3288, 8388607
        %v3290 = vor.u32 %v3289, 8388608
        %v3291 = vsub.s32 0, %v3290
        %v3292 = vadd.s32 %v3287, 1
        %vm3293 = vcmp.gt.s32.totalorder %v3292, 0
        %v3294 = vsel %vm3293, %v3292, 0
        %v3295 = vshrl.u32 %v3294, 5
        %v3296 = vand.u32 %v3294, 31
        %v3297 = vsub.s32 32, %v3296
        %v3298 = vshrl.u32 683565275, %v3297
        %v3299 = vshll.u32 683565275, %v3296
        %v3300 = vshrl.u32 2475754826, %v3297
        %v3301 = vor.u32 %v3299, %v3300
        %v3302 = vshll.u32 2475754826, %v3296
        %v3303 = vshrl.u32 2131351028, %v3297
        %v3304 = vor.u32 %v3302, %v3303
        %v3305 = vshll.u32 2131351028, %v3296
        %v3306 = vshrl.u32 2102212464, %v3297
        %v3307 = vor.u32 %v3305, %v3306
        %v3308 = vshll.u32 2102212464, %v3296
        %v3309 = vshrl.u32 920167782, %v3297
        %v3310 = vor.u32 %v3308, %v3309
        %v3311 = vshll.u32 920167782, %v3296
        %v3312 = vshrl.u32 1326507024, %v3297
        %v3313 = vor.u32 %v3311, %v3312
        %vm3314 = vcmp.lt.s32.totalorder %v3295, 1
        %vm3315 = vcmp.lt.s32.totalorder %v3295, 2
        %vm3316 = vcmp.lt.s32.totalorder %v3295, 3
        %vm3317 = vcmp.lt.s32.totalorder %v3295, 4
        %v3318 = vsel %vm3314, %v3298, %v3301
        %v3319 = vsel %vm3317, %v3307, 2102212464
        %v3320 = vsel %vm3316, %v3304, %v3319
        %v3321 = vsel %vm3315, %v3318, %v3320
        %v3322 = vsel %vm3314, %v3301, %v3304
        %v3323 = vsel %vm3317, %v3310, 920167782
        %v3324 = vsel %vm3316, %v3307, %v3323
        %v3325 = vsel %vm3315, %v3322, %v3324
        %v3326 = vsel %vm3314, %v3304, %v3307
        %v3327 = vsel %vm3317, %v3313, 1326507024
        %v3328 = vsel %vm3316, %v3310, %v3327
        %v3329 = vsel %vm3315, %v3326, %v3328
        %v3330 = vshll.u32 %v3290, 8
        %v3331 = vmul.u32.u64.compose %v3330, %v3329
        %v3332 = vextract.low.u32 %v3331
        %v3333 = vextract.high.u32 %v3331
        %v3334 = vmul.u32.u64.compose %v3330, %v3325
        %v3335 = vextract.low.u32 %v3334
        %v3336 = vextract.high.u32 %v3334
        %v3337 = vmul.u32 %v3330, %v3321
        %v3338 = vadd.s32 %v3333, %v3335
        %vm3339 = vc.u32 %v3333, %v3335
        %v3340 = vadd.s32 %v3336, 1
        %v3341 = vsel %vm3339, %v3340, %v3336
        %v3342 = vadd.s32 %v3337, %v3341
        %v3343 = vadd.s32 %v3342, 536870912
        %v3344 = vshrl.u32 %v3343, 30
        %v3345 = vshll.u32 %v3344, 30
        %v3346 = vsub.s32 %v3342, %v3345
        %vm3347 = vcmp.lt.s32.totalorder %v3346, 0
        %v3348 = vsub.s32 0, %v3346
        %v3349 = vsel %vm3347, %v3348, %v3346
        %v3350 = vclz %v3349
        %v3351 = vsub.s32 %v3350, 2
        %vm3352 = vcmp.gt.s32.totalorder 0, %v3351
        %v3353 = vsel %vm3352, 0, %v3351
        %v3354 = vsub.s32 32, %v3353
        %v3355 = vshll.u32 %v3346, %v3353
        %v3356 = vshrl.u32 %v3338, %v3354
        %v3357 = vor.u32 %v3355, %v3356
        %v3358 = vsub.s32 4294967266, %v3353
        %v3359 = vadd.s32 %v3358, 127
        %v3360 = vshll.u32 %v3359, 23
        %v3361 = vor.u32 4788187, %v3360
        %v3362 = vand.u32 2147483647, %v3361
        %v3364 = vcvt.s32.f32 %v3357
        %v3365 = vmul.f32 %v3364, %v3362
        %v3366 = vxor.u32 %v3365, 2147483648
        %v3367 = vsel %vm3284, %v3366, %v3365
        %v3368 = vsub.s32 4, %v3344
        %v3369 = vsel %vm3284, %v3368, %v3344
        %v3370 = vsel %vm3283, %v561, %v3367
        %v3371 = vsel %vm3283, 0, %v3369
        %v3372 = vcosq.f32.pop %v3370
        %v3373 = vsinq.f32.pop %v3370
        %vm3374 = vweird.f32 %v561
        %v3375 = vadd.s32 %v3371, 3
        %v3376 = vand.u32 %v3375, 3
        %vm3377 = vcmp.lt.s32.totalorder %v3376, 2
        %vm3378 = vcmp.eq.s32.totalorder %v3376, 0
        %v3379 = vxor.u32 %v3373, 2147483648
        %v3380 = vsel %vm3378, %v3372, %v3379
        %vm3381 = vcmp.eq.s32.totalorder %v3376, 2
        %v3382 = vxor.u32 %v3372, 2147483648
        %v3383 = vsel %vm3381, %v3382, %v3373
        %v3384 = vsel %vm3377, %v3380, %v3383
        %v3385 = vsel %vm3374, nan, %v3384
        %v3386 = vand.u32 2147483647, %v672
        %vm3387 = vcmp.le.f32.partialorder %v3386, 0.7853982
        %vm3388 = vcmp.lt.s32.totalorder %v672, 0
        %v3389 = vand.u32 %v672, 2139095040
        %v3390 = vshrl.u32 %v3389, 23
        %v3391 = vsub.s32 %v3390, 127
        %v3392 = vand.u32 2147483647, %v672
        %v3393 = vand.u32 %v3392, 8388607
        %v3394 = vor.u32 %v3393, 8388608
        %v3395 = vsub.s32 0, %v3394
        %v3396 = vadd.s32 %v3391, 1
        %vm3397 = vcmp.gt.s32.totalorder %v3396, 0
        %v3398 = vsel %vm3397, %v3396, 0
        %v3399 = vshrl.u32 %v3398, 5
        %v3400 = vand.u32 %v3398, 31
        %v3401 = vsub.s32 32, %v3400
        %v3402 = vshrl.u32 683565275, %v3401
        %v3403 = vshll.u32 683565275, %v3400
        %v3404 = vshrl.u32 2475754826, %v3401
        %v3405 = vor.u32 %v3403, %v3404
        %v3406 = vshll.u32 2475754826, %v3400
        %v3407 = vshrl.u32 2131351028, %v3401
        %v3408 = vor.u32 %v3406, %v3407
        %v3409 = vshll.u32 2131351028, %v3400
        %v3410 = vshrl.u32 2102212464, %v3401
        %v3411 = vor.u32 %v3409, %v3410
        %v3412 = vshll.u32 2102212464, %v3400
        %v3413 = vshrl.u32 920167782, %v3401
        %v3414 = vor.u32 %v3412, %v3413
        %v3415 = vshll.u32 920167782, %v3400
        %v3416 = vshrl.u32 1326507024, %v3401
        %v3417 = vor.u32 %v3415, %v3416
        %vm3418 = vcmp.lt.s32.totalorder %v3399, 1
        %vm3419 = vcmp.lt.s32.totalorder %v3399, 2
        %vm3420 = vcmp.lt.s32.totalorder %v3399, 3
        %vm3421 = vcmp.lt.s32.totalorder %v3399, 4
        %v3422 = vsel %vm3418, %v3402, %v3405
        %v3423 = vsel %vm3421, %v3411, 2102212464
        %v3424 = vsel %vm3420, %v3408, %v3423
        %v3425 = vsel %vm3419, %v3422, %v3424
        %v3426 = vsel %vm3418, %v3405, %v3408
        %v3427 = vsel %vm3421, %v3414, 920167782
        %v3428 = vsel %vm3420, %v3411, %v3427
        %v3429 = vsel %vm3419, %v3426, %v3428
        %v3430 = vsel %vm3418, %v3408, %v3411
        %v3431 = vsel %vm3421, %v3417, 1326507024
        %v3432 = vsel %vm3420, %v3414, %v3431
        %v3433 = vsel %vm3419, %v3430, %v3432
        %v3434 = vshll.u32 %v3394, 8
        %v3435 = vmul.u32.u64.compose %v3434, %v3433
        %v3436 = vextract.low.u32 %v3435
        %v3437 = vextract.high.u32 %v3435
        %v3438 = vmul.u32.u64.compose %v3434, %v3429
        %v3439 = vextract.low.u32 %v3438
        %v3440 = vextract.high.u32 %v3438
        %v3441 = vmul.u32 %v3434, %v3425
        %v3442 = vadd.s32 %v3437, %v3439
        %vm3443 = vc.u32 %v3437, %v3439
        %v3444 = vadd.s32 %v3440, 1
        %v3445 = vsel %vm3443, %v3444, %v3440
        %v3446 = vadd.s32 %v3441, %v3445
        %v3447 = vadd.s32 %v3446, 536870912
        %v3448 = vshrl.u32 %v3447, 30
        %v3449 = vshll.u32 %v3448, 30
        %v3450 = vsub.s32 %v3446, %v3449
        %vm3451 = vcmp.lt.s32.totalorder %v3450, 0
        %v3452 = vsub.s32 0, %v3450
        %v3453 = vsel %vm3451, %v3452, %v3450
        %v3454 = vclz %v3453
        %v3455 = vsub.s32 %v3454, 2
        %vm3456 = vcmp.gt.s32.totalorder 0, %v3455
        %v3457 = vsel %vm3456, 0, %v3455
        %v3458 = vsub.s32 32, %v3457
        %v3459 = vshll.u32 %v3450, %v3457
        %v3460 = vshrl.u32 %v3442, %v3458
        %v3461 = vor.u32 %v3459, %v3460
        %v3462 = vsub.s32 4294967266, %v3457
        %v3463 = vadd.s32 %v3462, 127
        %v3464 = vshll.u32 %v3463, 23
        %v3465 = vor.u32 4788187, %v3464
        %v3466 = vand.u32 2147483647, %v3465
        %v3468 = vcvt.s32.f32 %v3461
        %v3469 = vmul.f32 %v3468, %v3466
        %v3470 = vxor.u32 %v3469, 2147483648
        %v3471 = vsel %vm3388, %v3470, %v3469
        %v3472 = vsub.s32 4, %v3448
        %v3473 = vsel %vm3388, %v3472, %v3448
        %v3474 = vsel %vm3387, %v672, %v3471
        %v3475 = vsel %vm3387, 0, %v3473
        %v3476 = vcosq.f32.pop %v3474
        %v3477 = vsinq.f32.pop %v3474
        %vm3478 = vweird.f32 %v672
        %v3479 = vadd.s32 %v3475, 3
        %v3480 = vand.u32 %v3479, 3
        %vm3481 = vcmp.lt.s32.totalorder %v3480, 2
        %vm3482 = vcmp.eq.s32.totalorder %v3480, 0
        %v3483 = vxor.u32 %v3477, 2147483648
        %v3484 = vsel %vm3482, %v3476, %v3483
        %vm3485 = vcmp.eq.s32.totalorder %v3480, 2
        %v3486 = vxor.u32 %v3476, 2147483648
        %v3487 = vsel %vm3485, %v3486, %v3477
        %v3488 = vsel %vm3481, %v3484, %v3487
        %v3489 = vsel %vm3478, nan, %v3488
        %v3490 = vand.u32 2147483647, %v674
        %vm3491 = vcmp.le.f32.partialorder %v3490, 0.7853982
        %vm3492 = vcmp.lt.s32.totalorder %v674, 0
        %v3493 = vand.u32 %v674, 2139095040
        %v3494 = vshrl.u32 %v3493, 23
        %v3495 = vsub.s32 %v3494, 127
        %v3496 = vand.u32 2147483647, %v674
        %v3497 = vand.u32 %v3496, 8388607
        %v3498 = vor.u32 %v3497, 8388608
        %v3499 = vsub.s32 0, %v3498
        %v3500 = vadd.s32 %v3495, 1
        %vm3501 = vcmp.gt.s32.totalorder %v3500, 0
        %v3502 = vsel %vm3501, %v3500, 0
        %v3503 = vshrl.u32 %v3502, 5
        %v3504 = vand.u32 %v3502, 31
        %v3505 = vsub.s32 32, %v3504
        %v3506 = vshrl.u32 683565275, %v3505
        %v3507 = vshll.u32 683565275, %v3504
        %v3508 = vshrl.u32 2475754826, %v3505
        %v3509 = vor.u32 %v3507, %v3508
        %v3510 = vshll.u32 2475754826, %v3504
        %v3511 = vshrl.u32 2131351028, %v3505
        %v3512 = vor.u32 %v3510, %v3511
        %v3513 = vshll.u32 2131351028, %v3504
        %v3514 = vshrl.u32 2102212464, %v3505
        %v3515 = vor.u32 %v3513, %v3514
        %v3516 = vshll.u32 2102212464, %v3504
        %v3517 = vshrl.u32 920167782, %v3505
        %v3518 = vor.u32 %v3516, %v3517
        %v3519 = vshll.u32 920167782, %v3504
        %v3520 = vshrl.u32 1326507024, %v3505
        %v3521 = vor.u32 %v3519, %v3520
        %vm3522 = vcmp.lt.s32.totalorder %v3503, 1
        %vm3523 = vcmp.lt.s32.totalorder %v3503, 2
        %vm3524 = vcmp.lt.s32.totalorder %v3503, 3
        %vm3525 = vcmp.lt.s32.totalorder %v3503, 4
        %v3526 = vsel %vm3522, %v3506, %v3509
        %v3527 = vsel %vm3525, %v3515, 2102212464
        %v3528 = vsel %vm3524, %v3512, %v3527
        %v3529 = vsel %vm3523, %v3526, %v3528
        %v3530 = vsel %vm3522, %v3509, %v3512
        %v3531 = vsel %vm3525, %v3518, 920167782
        %v3532 = vsel %vm3524, %v3515, %v3531
        %v3533 = vsel %vm3523, %v3530, %v3532
        %v3534 = vsel %vm3522, %v3512, %v3515
        %v3535 = vsel %vm3525, %v3521, 1326507024
        %v3536 = vsel %vm3524, %v3518, %v3535
        %v3537 = vsel %vm3523, %v3534, %v3536
        %v3538 = vshll.u32 %v3498, 8
        %v3539 = vmul.u32.u64.compose %v3538, %v3537
        %v3540 = vextract.low.u32 %v3539
        %v3541 = vextract.high.u32 %v3539
        %v3542 = vmul.u32.u64.compose %v3538, %v3533
        %v3543 = vextract.low.u32 %v3542
        %v3544 = vextract.high.u32 %v3542
        %v3545 = vmul.u32 %v3538, %v3529
        %v3546 = vadd.s32 %v3541, %v3543
        %vm3547 = vc.u32 %v3541, %v3543
        %v3548 = vadd.s32 %v3544, 1
        %v3549 = vsel %vm3547, %v3548, %v3544
        %v3550 = vadd.s32 %v3545, %v3549
        %v3551 = vadd.s32 %v3550, 536870912
        %v3552 = vshrl.u32 %v3551, 30
        %v3553 = vshll.u32 %v3552, 30
        %v3554 = vsub.s32 %v3550, %v3553
        %vm3555 = vcmp.lt.s32.totalorder %v3554, 0
        %v3556 = vsub.s32 0, %v3554
        %v3557 = vsel %vm3555, %v3556, %v3554
        %v3558 = vclz %v3557
        %v3559 = vsub.s32 %v3558, 2
        %vm3560 = vcmp.gt.s32.totalorder 0, %v3559
        %v3561 = vsel %vm3560, 0, %v3559
        %v3562 = vsub.s32 32, %v3561
        %v3563 = vshll.u32 %v3554, %v3561
        %v3564 = vshrl.u32 %v3546, %v3562
        %v3565 = vor.u32 %v3563, %v3564
        %v3566 = vsub.s32 4294967266, %v3561
        %v3567 = vadd.s32 %v3566, 127
        %v3568 = vshll.u32 %v3567, 23
        %v3569 = vor.u32 4788187, %v3568
        %v3570 = vand.u32 2147483647, %v3569
        %v3572 = vcvt.s32.f32 %v3565
        %v3573 = vmul.f32 %v3572, %v3570
        %v3574 = vxor.u32 %v3573, 2147483648
        %v3575 = vsel %vm3492, %v3574, %v3573
        %v3576 = vsub.s32 4, %v3552
        %v3577 = vsel %vm3492, %v3576, %v3552
        %v3578 = vsel %vm3491, %v674, %v3575
        %v3579 = vsel %vm3491, 0, %v3577
        %v3580 = vcosq.f32.pop %v3578
        %v3581 = vsinq.f32.pop %v3578
        %vm3582 = vweird.f32 %v674
        %v3583 = vadd.s32 %v3579, 3
        %v3584 = vand.u32 %v3583, 3
        %vm3585 = vcmp.lt.s32.totalorder %v3584, 2
        %vm3586 = vcmp.eq.s32.totalorder %v3584, 0
        %v3587 = vxor.u32 %v3581, 2147483648
        %v3588 = vsel %vm3586, %v3580, %v3587
        %vm3589 = vcmp.eq.s32.totalorder %v3584, 2
        %v3590 = vxor.u32 %v3580, 2147483648
        %v3591 = vsel %vm3589, %v3590, %v3581
        %v3592 = vsel %vm3585, %v3588, %v3591
        %v3593 = vsel %vm3582, nan, %v3592
        %v3594 = vand.u32 2147483647, %v565
        %vm3595 = vcmp.le.f32.partialorder %v3594, 0.7853982
        %vm3596 = vcmp.lt.s32.totalorder %v565, 0
        %v3597 = vand.u32 %v565, 2139095040
        %v3598 = vshrl.u32 %v3597, 23
        %v3599 = vsub.s32 %v3598, 127
        %v3600 = vand.u32 2147483647, %v565
        %v3601 = vand.u32 %v3600, 8388607
        %v3602 = vor.u32 %v3601, 8388608
        %v3603 = vsub.s32 0, %v3602
        %v3604 = vadd.s32 %v3599, 1
        %vm3605 = vcmp.gt.s32.totalorder %v3604, 0
        %v3606 = vsel %vm3605, %v3604, 0
        %v3607 = vshrl.u32 %v3606, 5
        %v3608 = vand.u32 %v3606, 31
        %v3609 = vsub.s32 32, %v3608
        %v3610 = vshrl.u32 683565275, %v3609
        %v3611 = vshll.u32 683565275, %v3608
        %v3612 = vshrl.u32 2475754826, %v3609
        %v3613 = vor.u32 %v3611, %v3612
        %v3614 = vshll.u32 2475754826, %v3608
        %v3615 = vshrl.u32 2131351028, %v3609
        %v3616 = vor.u32 %v3614, %v3615
        %v3617 = vshll.u32 2131351028, %v3608
        %v3618 = vshrl.u32 2102212464, %v3609
        %v3619 = vor.u32 %v3617, %v3618
        %v3620 = vshll.u32 2102212464, %v3608
        %v3621 = vshrl.u32 920167782, %v3609
        %v3622 = vor.u32 %v3620, %v3621
        %v3623 = vshll.u32 920167782, %v3608
        %v3624 = vshrl.u32 1326507024, %v3609
        %v3625 = vor.u32 %v3623, %v3624
        %vm3626 = vcmp.lt.s32.totalorder %v3607, 1
        %vm3627 = vcmp.lt.s32.totalorder %v3607, 2
        %vm3628 = vcmp.lt.s32.totalorder %v3607, 3
        %vm3629 = vcmp.lt.s32.totalorder %v3607, 4
        %v3630 = vsel %vm3626, %v3610, %v3613
        %v3631 = vsel %vm3629, %v3619, 2102212464
        %v3632 = vsel %vm3628, %v3616, %v3631
        %v3633 = vsel %vm3627, %v3630, %v3632
        %v3634 = vsel %vm3626, %v3613, %v3616
        %v3635 = vsel %vm3629, %v3622, 920167782
        %v3636 = vsel %vm3628, %v3619, %v3635
        %v3637 = vsel %vm3627, %v3634, %v3636
        %v3638 = vsel %vm3626, %v3616, %v3619
        %v3639 = vsel %vm3629, %v3625, 1326507024
        %v3640 = vsel %vm3628, %v3622, %v3639
        %v3641 = vsel %vm3627, %v3638, %v3640
        %v3642 = vshll.u32 %v3602, 8
        %v3643 = vmul.u32.u64.compose %v3642, %v3641
        %v3644 = vextract.low.u32 %v3643
        %v3645 = vextract.high.u32 %v3643
        %v3646 = vmul.u32.u64.compose %v3642, %v3637
        %v3647 = vextract.low.u32 %v3646
        %v3648 = vextract.high.u32 %v3646
        %v3649 = vmul.u32 %v3642, %v3633
        %v3650 = vadd.s32 %v3645, %v3647
        %vm3651 = vc.u32 %v3645, %v3647
        %v3652 = vadd.s32 %v3648, 1
        %v3653 = vsel %vm3651, %v3652, %v3648
        %v3654 = vadd.s32 %v3649, %v3653
        %v3655 = vadd.s32 %v3654, 536870912
        %v3656 = vshrl.u32 %v3655, 30
        %v3657 = vshll.u32 %v3656, 30
        %v3658 = vsub.s32 %v3654, %v3657
        %vm3659 = vcmp.lt.s32.totalorder %v3658, 0
        %v3660 = vsub.s32 0, %v3658
        %v3661 = vsel %vm3659, %v3660, %v3658
        %v3662 = vclz %v3661
        %v3663 = vsub.s32 %v3662, 2
        %vm3664 = vcmp.gt.s32.totalorder 0, %v3663
        %v3665 = vsel %vm3664, 0, %v3663
        %v3666 = vsub.s32 32, %v3665
        %v3667 = vshll.u32 %v3658, %v3665
        %v3668 = vshrl.u32 %v3650, %v3666
        %v3669 = vor.u32 %v3667, %v3668
        %v3670 = vsub.s32 4294967266, %v3665
        %v3671 = vadd.s32 %v3670, 127
        %v3672 = vshll.u32 %v3671, 23
        %v3673 = vor.u32 4788187, %v3672
        %v3674 = vand.u32 2147483647, %v3673
        %v3676 = vcvt.s32.f32 %v3669
        %v3677 = vmul.f32 %v3676, %v3674
        %v3678 = vxor.u32 %v3677, 2147483648
        %v3679 = vsel %vm3596, %v3678, %v3677
        %v3680 = vsub.s32 4, %v3656
        %v3681 = vsel %vm3596, %v3680, %v3656
        %v3682 = vsel %vm3595, %v565, %v3679
        %v3683 = vsel %vm3595, 0, %v3681
        %v3684 = vcosq.f32.pop %v3682
        %v3685 = vsinq.f32.pop %v3682
        %vm3686 = vweird.f32 %v565
        %v3687 = vadd.s32 %v3683, 3
        %v3688 = vand.u32 %v3687, 3
        %vm3689 = vcmp.lt.s32.totalorder %v3688, 2
        %vm3690 = vcmp.eq.s32.totalorder %v3688, 0
        %v3691 = vxor.u32 %v3685, 2147483648
        %v3692 = vsel %vm3690, %v3684, %v3691
        %vm3693 = vcmp.eq.s32.totalorder %v3688, 2
        %v3694 = vxor.u32 %v3684, 2147483648
        %v3695 = vsel %vm3693, %v3694, %v3685
        %v3696 = vsel %vm3689, %v3692, %v3695
        %v3697 = vsel %vm3686, nan, %v3696
        %v3698 = vand.u32 2147483647, %v567
        %vm3699 = vcmp.le.f32.partialorder %v3698, 0.7853982
        %vm3700 = vcmp.lt.s32.totalorder %v567, 0
        %v3701 = vand.u32 %v567, 2139095040
        %v3702 = vshrl.u32 %v3701, 23
        %v3703 = vsub.s32 %v3702, 127
        %v3704 = vand.u32 2147483647, %v567
        %v3705 = vand.u32 %v3704, 8388607
        %v3706 = vor.u32 %v3705, 8388608
        %v3707 = vsub.s32 0, %v3706
        %v3708 = vadd.s32 %v3703, 1
        %vm3709 = vcmp.gt.s32.totalorder %v3708, 0
        %v3710 = vsel %vm3709, %v3708, 0
        %v3711 = vshrl.u32 %v3710, 5
        %v3712 = vand.u32 %v3710, 31
        %v3713 = vsub.s32 32, %v3712
        %v3714 = vshrl.u32 683565275, %v3713
        %v3715 = vshll.u32 683565275, %v3712
        %v3716 = vshrl.u32 2475754826, %v3713
        %v3717 = vor.u32 %v3715, %v3716
        %v3718 = vshll.u32 2475754826, %v3712
        %v3719 = vshrl.u32 2131351028, %v3713
        %v3720 = vor.u32 %v3718, %v3719
        %v3721 = vshll.u32 2131351028, %v3712
        %v3722 = vshrl.u32 2102212464, %v3713
        %v3723 = vor.u32 %v3721, %v3722
        %v3724 = vshll.u32 2102212464, %v3712
        %v3725 = vshrl.u32 920167782, %v3713
        %v3726 = vor.u32 %v3724, %v3725
        %v3727 = vshll.u32 920167782, %v3712
        %v3728 = vshrl.u32 1326507024, %v3713
        %v3729 = vor.u32 %v3727, %v3728
        %vm3730 = vcmp.lt.s32.totalorder %v3711, 1
        %vm3731 = vcmp.lt.s32.totalorder %v3711, 2
        %vm3732 = vcmp.lt.s32.totalorder %v3711, 3
        %vm3733 = vcmp.lt.s32.totalorder %v3711, 4
        %v3734 = vsel %vm3730, %v3714, %v3717
        %v3735 = vsel %vm3733, %v3723, 2102212464
        %v3736 = vsel %vm3732, %v3720, %v3735
        %v3737 = vsel %vm3731, %v3734, %v3736
        %v3738 = vsel %vm3730, %v3717, %v3720
        %v3739 = vsel %vm3733, %v3726, 920167782
        %v3740 = vsel %vm3732, %v3723, %v3739
        %v3741 = vsel %vm3731, %v3738, %v3740
        %v3742 = vsel %vm3730, %v3720, %v3723
        %v3743 = vsel %vm3733, %v3729, 1326507024
        %v3744 = vsel %vm3732, %v3726, %v3743
        %v3745 = vsel %vm3731, %v3742, %v3744
        %v3746 = vshll.u32 %v3706, 8
        %v3747 = vmul.u32.u64.compose %v3746, %v3745
        %v3748 = vextract.low.u32 %v3747
        %v3749 = vextract.high.u32 %v3747
        %v3750 = vmul.u32.u64.compose %v3746, %v3741
        %v3751 = vextract.low.u32 %v3750
        %v3752 = vextract.high.u32 %v3750
        %v3753 = vmul.u32 %v3746, %v3737
        %v3754 = vadd.s32 %v3749, %v3751
        %vm3755 = vc.u32 %v3749, %v3751
        %v3756 = vadd.s32 %v3752, 1
        %v3757 = vsel %vm3755, %v3756, %v3752
        %v3758 = vadd.s32 %v3753, %v3757
        %v3759 = vadd.s32 %v3758, 536870912
        %v3760 = vshrl.u32 %v3759, 30
        %v3761 = vshll.u32 %v3760, 30
        %v3762 = vsub.s32 %v3758, %v3761
        %vm3763 = vcmp.lt.s32.totalorder %v3762, 0
        %v3764 = vsub.s32 0, %v3762
        %v3765 = vsel %vm3763, %v3764, %v3762
        %v3766 = vclz %v3765
        %v3767 = vsub.s32 %v3766, 2
        %vm3768 = vcmp.gt.s32.totalorder 0, %v3767
        %v3769 = vsel %vm3768, 0, %v3767
        %v3770 = vsub.s32 32, %v3769
        %v3771 = vshll.u32 %v3762, %v3769
        %v3772 = vshrl.u32 %v3754, %v3770
        %v3773 = vor.u32 %v3771, %v3772
        %v3774 = vsub.s32 4294967266, %v3769
        %v3775 = vadd.s32 %v3774, 127
        %v3776 = vshll.u32 %v3775, 23
        %v3777 = vor.u32 4788187, %v3776
        %v3778 = vand.u32 2147483647, %v3777
        %v3780 = vcvt.s32.f32 %v3773
        %v3781 = vmul.f32 %v3780, %v3778
        %v3782 = vxor.u32 %v3781, 2147483648
        %v3783 = vsel %vm3700, %v3782, %v3781
        %v3784 = vsub.s32 4, %v3760
        %v3785 = vsel %vm3700, %v3784, %v3760
        %v3786 = vsel %vm3699, %v567, %v3783
        %v3787 = vsel %vm3699, 0, %v3785
        %v3788 = vcosq.f32.pop %v3786
        %v3789 = vsinq.f32.pop %v3786
        %vm3790 = vweird.f32 %v567
        %v3791 = vadd.s32 %v3787, 3
        %v3792 = vand.u32 %v3791, 3
        %vm3793 = vcmp.lt.s32.totalorder %v3792, 2
        %vm3794 = vcmp.eq.s32.totalorder %v3792, 0
        %v3795 = vxor.u32 %v3789, 2147483648
        %v3796 = vsel %vm3794, %v3788, %v3795
        %vm3797 = vcmp.eq.s32.totalorder %v3792, 2
        %v3798 = vxor.u32 %v3788, 2147483648
        %v3799 = vsel %vm3797, %v3798, %v3789
        %v3800 = vsel %vm3793, %v3796, %v3799
        %v3801 = vsel %vm3790, nan, %v3800
        %v3802 = vand.u32 2147483647, %v678
        %vm3803 = vcmp.le.f32.partialorder %v3802, 0.7853982
        %vm3804 = vcmp.lt.s32.totalorder %v678, 0
        %v3805 = vand.u32 %v678, 2139095040
        %v3806 = vshrl.u32 %v3805, 23
        %v3807 = vsub.s32 %v3806, 127
        %v3808 = vand.u32 2147483647, %v678
        %v3809 = vand.u32 %v3808, 8388607
        %v3810 = vor.u32 %v3809, 8388608
        %v3811 = vsub.s32 0, %v3810
        %v3812 = vadd.s32 %v3807, 1
        %vm3813 = vcmp.gt.s32.totalorder %v3812, 0
        %v3814 = vsel %vm3813, %v3812, 0
        %v3815 = vshrl.u32 %v3814, 5
        %v3816 = vand.u32 %v3814, 31
        %v3817 = vsub.s32 32, %v3816
        %v3818 = vshrl.u32 683565275, %v3817
        %v3819 = vshll.u32 683565275, %v3816
        %v3820 = vshrl.u32 2475754826, %v3817
        %v3821 = vor.u32 %v3819, %v3820
        %v3822 = vshll.u32 2475754826, %v3816
        %v3823 = vshrl.u32 2131351028, %v3817
        %v3824 = vor.u32 %v3822, %v3823
        %v3825 = vshll.u32 2131351028, %v3816
        %v3826 = vshrl.u32 2102212464, %v3817
        %v3827 = vor.u32 %v3825, %v3826
        %v3828 = vshll.u32 2102212464, %v3816
        %v3829 = vshrl.u32 920167782, %v3817
        %v3830 = vor.u32 %v3828, %v3829
        %v3831 = vshll.u32 920167782, %v3816
        %v3832 = vshrl.u32 1326507024, %v3817
        %v3833 = vor.u32 %v3831, %v3832
        %vm3834 = vcmp.lt.s32.totalorder %v3815, 1
        %vm3835 = vcmp.lt.s32.totalorder %v3815, 2
        %vm3836 = vcmp.lt.s32.totalorder %v3815, 3
        %vm3837 = vcmp.lt.s32.totalorder %v3815, 4
        %v3838 = vsel %vm3834, %v3818, %v3821
        %v3839 = vsel %vm3837, %v3827, 2102212464
        %v3840 = vsel %vm3836, %v3824, %v3839
        %v3841 = vsel %vm3835, %v3838, %v3840
        %v3842 = vsel %vm3834, %v3821, %v3824
        %v3843 = vsel %vm3837, %v3830, 920167782
        %v3844 = vsel %vm3836, %v3827, %v3843
        %v3845 = vsel %vm3835, %v3842, %v3844
        %v3846 = vsel %vm3834, %v3824, %v3827
        %v3847 = vsel %vm3837, %v3833, 1326507024
        %v3848 = vsel %vm3836, %v3830, %v3847
        %v3849 = vsel %vm3835, %v3846, %v3848
        %v3850 = vshll.u32 %v3810, 8
        %v3851 = vmul.u32.u64.compose %v3850, %v3849
        %v3852 = vextract.low.u32 %v3851
        %v3853 = vextract.high.u32 %v3851
        %v3854 = vmul.u32.u64.compose %v3850, %v3845
        %v3855 = vextract.low.u32 %v3854
        %v3856 = vextract.high.u32 %v3854
        %v3857 = vmul.u32 %v3850, %v3841
        %v3858 = vadd.s32 %v3853, %v3855
        %vm3859 = vc.u32 %v3853, %v3855
        %v3860 = vadd.s32 %v3856, 1
        %v3861 = vsel %vm3859, %v3860, %v3856
        %v3862 = vadd.s32 %v3857, %v3861
        %v3863 = vadd.s32 %v3862, 536870912
        %v3864 = vshrl.u32 %v3863, 30
        %v3865 = vshll.u32 %v3864, 30
        %v3866 = vsub.s32 %v3862, %v3865
        %vm3867 = vcmp.lt.s32.totalorder %v3866, 0
        %v3868 = vsub.s32 0, %v3866
        %v3869 = vsel %vm3867, %v3868, %v3866
        %v3870 = vclz %v3869
        %v3871 = vsub.s32 %v3870, 2
        %vm3872 = vcmp.gt.s32.totalorder 0, %v3871
        %v3873 = vsel %vm3872, 0, %v3871
        %v3874 = vsub.s32 32, %v3873
        %v3875 = vshll.u32 %v3866, %v3873
        %v3876 = vshrl.u32 %v3858, %v3874
        %v3877 = vor.u32 %v3875, %v3876
        %v3878 = vsub.s32 4294967266, %v3873
        %v3879 = vadd.s32 %v3878, 127
        %v3880 = vshll.u32 %v3879, 23
        %v3881 = vor.u32 4788187, %v3880
        %v3882 = vand.u32 2147483647, %v3881
        %v3884 = vcvt.s32.f32 %v3877
        %v3885 = vmul.f32 %v3884, %v3882
        %v3886 = vxor.u32 %v3885, 2147483648
        %v3887 = vsel %vm3804, %v3886, %v3885
        %v3888 = vsub.s32 4, %v3864
        %v3889 = vsel %vm3804, %v3888, %v3864
        %v3890 = vsel %vm3803, %v678, %v3887
        %v3891 = vsel %vm3803, 0, %v3889
        %v3892 = vcosq.f32.pop %v3890
        %v3893 = vsinq.f32.pop %v3890
        %vm3894 = vweird.f32 %v678
        %v3895 = vadd.s32 %v3891, 3
        %v3896 = vand.u32 %v3895, 3
        %vm3897 = vcmp.lt.s32.totalorder %v3896, 2
        %vm3898 = vcmp.eq.s32.totalorder %v3896, 0
        %v3899 = vxor.u32 %v3893, 2147483648
        %v3900 = vsel %vm3898, %v3892, %v3899
        %vm3901 = vcmp.eq.s32.totalorder %v3896, 2
        %v3902 = vxor.u32 %v3892, 2147483648
        %v3903 = vsel %vm3901, %v3902, %v3893
        %v3904 = vsel %vm3897, %v3900, %v3903
        %v3905 = vsel %vm3894, nan, %v3904
        %v3906 = vand.u32 2147483647, %v680
        %vm3907 = vcmp.le.f32.partialorder %v3906, 0.7853982
        %vm3908 = vcmp.lt.s32.totalorder %v680, 0
        %v3909 = vand.u32 %v680, 2139095040
        %v3910 = vshrl.u32 %v3909, 23
        %v3911 = vsub.s32 %v3910, 127
        %v3912 = vand.u32 2147483647, %v680
        %v3913 = vand.u32 %v3912, 8388607
        %v3914 = vor.u32 %v3913, 8388608
        %v3915 = vsub.s32 0, %v3914
        %v3916 = vadd.s32 %v3911, 1
        %vm3917 = vcmp.gt.s32.totalorder %v3916, 0
        %v3918 = vsel %vm3917, %v3916, 0
        %v3919 = vshrl.u32 %v3918, 5
        %v3920 = vand.u32 %v3918, 31
        %v3921 = vsub.s32 32, %v3920
        %v3922 = vshrl.u32 683565275, %v3921
        %v3923 = vshll.u32 683565275, %v3920
        %v3924 = vshrl.u32 2475754826, %v3921
        %v3925 = vor.u32 %v3923, %v3924
        %v3926 = vshll.u32 2475754826, %v3920
        %v3927 = vshrl.u32 2131351028, %v3921
        %v3928 = vor.u32 %v3926, %v3927
        %v3929 = vshll.u32 2131351028, %v3920
        %v3930 = vshrl.u32 2102212464, %v3921
        %v3931 = vor.u32 %v3929, %v3930
        %v3932 = vshll.u32 2102212464, %v3920
        %v3933 = vshrl.u32 920167782, %v3921
        %v3934 = vor.u32 %v3932, %v3933
        %v3935 = vshll.u32 920167782, %v3920
        %v3936 = vshrl.u32 1326507024, %v3921
        %v3937 = vor.u32 %v3935, %v3936
        %vm3938 = vcmp.lt.s32.totalorder %v3919, 1
        %vm3939 = vcmp.lt.s32.totalorder %v3919, 2
        %vm3940 = vcmp.lt.s32.totalorder %v3919, 3
        %vm3941 = vcmp.lt.s32.totalorder %v3919, 4
        %v3942 = vsel %vm3938, %v3922, %v3925
        %v3943 = vsel %vm3941, %v3931, 2102212464
        %v3944 = vsel %vm3940, %v3928, %v3943
        %v3945 = vsel %vm3939, %v3942, %v3944
        %v3946 = vsel %vm3938, %v3925, %v3928
        %v3947 = vsel %vm3941, %v3934, 920167782
        %v3948 = vsel %vm3940, %v3931, %v3947
        %v3949 = vsel %vm3939, %v3946, %v3948
        %v3950 = vsel %vm3938, %v3928, %v3931
        %v3951 = vsel %vm3941, %v3937, 1326507024
        %v3952 = vsel %vm3940, %v3934, %v3951
        %v3953 = vsel %vm3939, %v3950, %v3952
        %v3954 = vshll.u32 %v3914, 8
        %v3955 = vmul.u32.u64.compose %v3954, %v3953
        %v3956 = vextract.low.u32 %v3955
        %v3957 = vextract.high.u32 %v3955
        %v3958 = vmul.u32.u64.compose %v3954, %v3949
        %v3959 = vextract.low.u32 %v3958
        %v3960 = vextract.high.u32 %v3958
        %v3961 = vmul.u32 %v3954, %v3945
        %v3962 = vadd.s32 %v3957, %v3959
        %vm3963 = vc.u32 %v3957, %v3959
        %v3964 = vadd.s32 %v3960, 1
        %v3965 = vsel %vm3963, %v3964, %v3960
        %v3966 = vadd.s32 %v3961, %v3965
        %v3967 = vadd.s32 %v3966, 536870912
        %v3968 = vshrl.u32 %v3967, 30
        %v3969 = vshll.u32 %v3968, 30
        %v3970 = vsub.s32 %v3966, %v3969
        %vm3971 = vcmp.lt.s32.totalorder %v3970, 0
        %v3972 = vsub.s32 0, %v3970
        %v3973 = vsel %vm3971, %v3972, %v3970
        %v3974 = vclz %v3973
        %v3975 = vsub.s32 %v3974, 2
        %vm3976 = vcmp.gt.s32.totalorder 0, %v3975
        %v3977 = vsel %vm3976, 0, %v3975
        %v3978 = vsub.s32 32, %v3977
        %v3979 = vshll.u32 %v3970, %v3977
        %v3980 = vshrl.u32 %v3962, %v3978
        %v3981 = vor.u32 %v3979, %v3980
        %v3982 = vsub.s32 4294967266, %v3977
        %v3983 = vadd.s32 %v3982, 127
        %v3984 = vshll.u32 %v3983, 23
        %v3985 = vor.u32 4788187, %v3984
        %v3986 = vand.u32 2147483647, %v3985
        %v3988 = vcvt.s32.f32 %v3981
        %v3989 = vmul.f32 %v3988, %v3986
        %v3990 = vxor.u32 %v3989, 2147483648
        %v3991 = vsel %vm3908, %v3990, %v3989
        %v3992 = vsub.s32 4, %v3968
        %v3993 = vsel %vm3908, %v3992, %v3968
        %v3994 = vsel %vm3907, %v680, %v3991
        %v3995 = vsel %vm3907, 0, %v3993
        %v3996 = vcosq.f32.pop %v3994
        %v3997 = vsinq.f32.pop %v3994
        %vm3998 = vweird.f32 %v680
        %v3999 = vadd.s32 %v3995, 3
        %v4000 = vand.u32 %v3999, 3
        %vm4001 = vcmp.lt.s32.totalorder %v4000, 2
        %vm4002 = vcmp.eq.s32.totalorder %v4000, 0
        %v4003 = vxor.u32 %v3997, 2147483648
        %v4004 = vsel %vm4002, %v3996, %v4003
        %vm4005 = vcmp.eq.s32.totalorder %v4000, 2
        %v4006 = vxor.u32 %v3996, 2147483648
        %v4007 = vsel %vm4005, %v4006, %v3997
        %v4008 = vsel %vm4001, %v4004, %v4007
        %v4009 = vsel %vm3998, nan, %v4008
        %v4010 = vpack.c.bf16 %v1201, %v785
        %v4011 = vpack.c.bf16 %v1305, %v889
        %v4012 = vpack.c.bf16 %v1409, %v993
        %v4013 = vpack.c.bf16 %v1513, %v1097
        %v4014 = vpack.c.bf16 %v2033, %v1617
        %v4015 = vpack.c.bf16 %v2137, %v1721
        %v4016 = vpack.c.bf16 %v2241, %v1825
        %v4017 = vpack.c.bf16 %v2345, %v1929
        %v4018 = vpack.c.bf16 %v2865, %v2449
        %v4019 = vpack.c.bf16 %v2969, %v2553
        %v4020 = vpack.c.bf16 %v3073, %v2657
        %v4021 = vpack.c.bf16 %v3177, %v2761
        %v4022 = vpack.c.bf16 %v3697, %v3281
        %v4023 = vpack.c.bf16 %v3801, %v3385
        %v4024 = vpack.c.bf16 %v3905, %v3489
        %v4025 = vpack.c.bf16 %v4009, %v3593
        %v4026 = vld [vmem:[#allocation7] sm:$0xf]
        %v4027 = vld [vmem:[#allocation7 + $0x4] sm:$0xf]
        %v4028 = vld [vmem:[#allocation7 + $0x8] sm:$0xf]
        %v4029 = vld [vmem:[#allocation7 + $0xc] sm:$0xf]
        %v4030 = vld [vmem:[#allocation7 + $0x10] sm:$0xf]
        %v4031 = vld [vmem:[#allocation7 + $0x14] sm:$0xf]
        %v4032 = vld [vmem:[#allocation7 + $0x18] sm:$0xf]
        %v4033 = vld [vmem:[#allocation7 + $0x1c] sm:$0xf]
        %v4034 = vld [vmem:[#allocation7 + $0x20] sm:$0xf]
        %v4035 = vld [vmem:[#allocation7 + $0x24] sm:$0xf]
        %v4036 = vld [vmem:[#allocation7 + $0x28] sm:$0xf]
        %v4037 = vld [vmem:[#allocation7 + $0x2c] sm:$0xf]
        %v4038 = vld [vmem:[#allocation7 + $0x30] sm:$0xf]
        %v4039 = vld [vmem:[#allocation7 + $0x34] sm:$0xf]
        %v4040 = vld [vmem:[#allocation7 + $0x38] sm:$0xf]
        %v4041 = vld [vmem:[#allocation7 + $0x3c] sm:$0xf]
        %v4042 = vld [vmem:[#allocation8] sm:$0xf]
        %v4043 = vld [vmem:[#allocation8 + $0x4] sm:$0xf]
        %v4044 = vld [vmem:[#allocation8 + $0x8] sm:$0xf]
        %v4045 = vld [vmem:[#allocation8 + $0xc] sm:$0xf]
        %v4046 = vld [vmem:[#allocation8 + $0x10] sm:$0xf]
        %v4047 = vld [vmem:[#allocation8 + $0x14] sm:$0xf]
        %v4048 = vld [vmem:[#allocation8 + $0x18] sm:$0xf]
        %v4049 = vld [vmem:[#allocation8 + $0x1c] sm:$0xf]
        %v4050 = vld [vmem:[#allocation8 + $0x20] sm:$0xf]
        %v4051 = vld [vmem:[#allocation8 + $0x24] sm:$0xf]
        %v4052 = vld [vmem:[#allocation8 + $0x28] sm:$0xf]
        %v4053 = vld [vmem:[#allocation8 + $0x2c] sm:$0xf]
        %v4054 = vld [vmem:[#allocation8 + $0x30] sm:$0xf]
        %v4055 = vld [vmem:[#allocation8 + $0x34] sm:$0xf]
        %v4056 = vld [vmem:[#allocation8 + $0x38] sm:$0xf]
        %v4057 = vld [vmem:[#allocation8 + $0x3c] sm:$0xf]
        %v4074 = vunpack.c.l.b16 %v4042
        %v4075 = vunpack.c.l.b16 %v4043
        %v4076 = vunpack.c.l.b16 %v4044
        %v4077 = vunpack.c.l.b16 %v4045
        %v4078 = vunpack.c.l.b16 %v4046
        %v4079 = vunpack.c.l.b16 %v4047
        %v4080 = vunpack.c.l.b16 %v4048
        %v4081 = vunpack.c.l.b16 %v4049
        %v4082 = vunpack.c.l.b16 %v4050
        %v4083 = vunpack.c.l.b16 %v4051
        %v4084 = vunpack.c.l.b16 %v4052
        %v4085 = vunpack.c.l.b16 %v4053
        %v4086 = vunpack.c.l.b16 %v4054
        %v4087 = vunpack.c.l.b16 %v4055
        %v4088 = vunpack.c.l.b16 %v4056
        %v4089 = vunpack.c.l.b16 %v4057
        %v4090 = vpack.c.b16 %v4075, %v4074
        %v4091 = vpack.c.b16 %v4077, %v4076
        %v4092 = vpack.c.b16 %v4079, %v4078
        %v4093 = vpack.c.b16 %v4081, %v4080
        %v4094 = vpack.c.b16 %v4083, %v4082
        %v4095 = vpack.c.b16 %v4085, %v4084
        %v4096 = vpack.c.b16 %v4087, %v4086
        %v4097 = vpack.c.b16 %v4089, %v4088
        %4106 = vmatprep.subr.bf16.mxu0 0
        %4107 = vmatpush1.bf16.msra.mxu0 %v4090
        %4108 = vmatprep.subr.bf16.mxu0 0
        %4109 = vmatpush1.bf16.msra.mxu0 %v4091
        %4110 = vmatprep.subr.bf16.mxu0 0
        %4111 = vmatpush1.bf16.msra.mxu0 %v4092
        %4112 = vmatprep.subr.bf16.mxu0 0
        %4113 = vmatpush1.bf16.msra.mxu0 %v4093
        %4114 = vmatprep.subr.bf16.mxu0 0
        %4115 = vmatpush1.bf16.msra.mxu0 %v4094
        %4116 = vmatprep.subr.bf16.mxu0 0
        %4117 = vmatpush1.bf16.msra.mxu0 %v4095
        %4118 = vmatprep.subr.bf16.mxu0 0
        %4119 = vmatpush1.bf16.msra.mxu0 %v4096
        %4120 = vmatprep.subr.bf16.mxu0 0
        %4121 = vmatpush1.bf16.msra.mxu0 %v4097
        %4122 = vmatprep.subr.bf16.mxu0 0
        %4123 = vmatpush1.bf16.msra.mxu0 0
        %4124 = vmatprep.subr.bf16.mxu0 0
        %4125 = vmatpush1.bf16.msra.mxu0 0
        %4126 = vmatprep.subr.bf16.mxu0 0
        %4127 = vmatpush1.bf16.msra.mxu0 0
        %4128 = vmatprep.subr.bf16.mxu0 0
        %4129 = vmatpush1.bf16.msra.mxu0 0
        %4130 = vmatprep.subr.bf16.mxu0 0
        %4131 = vmatpush1.bf16.msra.mxu0 0
        %4132 = vmatprep.subr.bf16.mxu0 0
        %4133 = vmatpush1.bf16.msra.mxu0 0
        %4134 = vmatprep.subr.bf16.mxu0 0
        %4135 = vmatpush1.bf16.msra.mxu0 0
        %4136 = vmatprep.subr.bf16.mxu0 0
        %4137 = vmatpush1.bf16.msra.mxu0 0
        %4138 = vmatprep.mubr.bf16.mxu0 0
        %4139 = vmatmul.mubr.bf16.gmra.mrb[0].mxu0 %v4011
        %v4140 = vpop.f32.mrb[0].mxu0
        %v4141 = vadd.f32 0.0, %v4140
        %v4142 = vpop.f32.mrb[0].mxu0
        %v4143 = vpop.f32.mrb[0].mxu0
        %v4144 = vadd.f32 0.0, %v4143
        %v4145 = vpop.f32.mrb[0].mxu0
        %4146 = vmatprep.mubr.bf16.mxu0 0
        %4147 = vmatmul.mubr.bf16.gmra.mrb[0].mxu0 %v4015
        %v4148 = vpop.f32.mrb[0].mxu0
        %v4149 = vadd.f32 0.0, %v4148
        %v4150 = vpop.f32.mrb[0].mxu0
        %v4151 = vpop.f32.mrb[0].mxu0
        %v4152 = vadd.f32 0.0, %v4151
        %v4153 = vpop.f32.mrb[0].mxu0
        %4154 = vmatprep.mubr.bf16.mxu0 0
        %4155 = vmatmul.mubr.bf16.gmra.mrb[0].mxu0 %v4019
        %v4156 = vpop.f32.mrb[0].mxu0
        %v4157 = vadd.f32 0.0, %v4156
        %v4158 = vpop.f32.mrb[0].mxu0
        %v4159 = vpop.f32.mrb[0].mxu0
        %v4160 = vadd.f32 0.0, %v4159
        %v4161 = vpop.f32.mrb[0].mxu0
        %4162 = vmatprep.mubr.bf16.mxu0 0
        %4163 = vmatmul.mubr.bf16.gmra.mrb[0].mxu0 %v4023
        %v4164 = vpop.f32.mrb[0].mxu0
        %v4165 = vadd.f32 0.0, %v4164
        %v4166 = vpop.f32.mrb[0].mxu0
        %v4167 = vpop.f32.mrb[0].mxu0
        %v4168 = vadd.f32 0.0, %v4167
        %v4169 = vpop.f32.mrb[0].mxu0
        %4170 = vdwg.mxu0
        %4171 = vmatprep.subr.bf16.mxu0 0
        %4172 = vmatpush1.bf16.msra.mxu0 %v4090
        %4173 = vmatprep.subr.bf16.mxu0 0
        %4174 = vmatpush1.bf16.msra.mxu0 %v4091
        %4175 = vmatprep.subr.bf16.mxu0 0
        %4176 = vmatpush1.bf16.msra.mxu0 %v4092
        %4177 = vmatprep.subr.bf16.mxu0 0
        %4178 = vmatpush1.bf16.msra.mxu0 %v4093
        %4179 = vmatprep.subr.bf16.mxu0 0
        %4180 = vmatpush1.bf16.msra.mxu0 %v4094
        %4181 = vmatprep.subr.bf16.mxu0 0
        %4182 = vmatpush1.bf16.msra.mxu0 %v4095
        %4183 = vmatprep.subr.bf16.mxu0 0
        %4184 = vmatpush1.bf16.msra.mxu0 %v4096
        %4185 = vmatprep.subr.bf16.mxu0 0
        %4186 = vmatpush1.bf16.msra.mxu0 %v4097
        %4187 = vmatprep.subr.bf16.mxu0 0
        %4188 = vmatpush1.bf16.msra.mxu0 0
        %4189 = vmatprep.subr.bf16.mxu0 0
        %4190 = vmatpush1.bf16.msra.mxu0 0
        %4191 = vmatprep.subr.bf16.mxu0 0
        %4192 = vmatpush1.bf16.msra.mxu0 0
        %4193 = vmatprep.subr.bf16.mxu0 0
        %4194 = vmatpush1.bf16.msra.mxu0 0
        %4195 = vmatprep.subr.bf16.mxu0 0
        %4196 = vmatpush1.bf16.msra.mxu0 0
        %4197 = vmatprep.subr.bf16.mxu0 0
        %4198 = vmatpush1.bf16.msra.mxu0 0
        %4199 = vmatprep.subr.bf16.mxu0 0
        %4200 = vmatpush1.bf16.msra.mxu0 0
        %4201 = vmatprep.subr.bf16.mxu0 0
        %4202 = vmatpush1.bf16.msra.mxu0 0
        %4203 = vmatprep.mubr.bf16.mxu0 0
        %4204 = vmatmul.mubr.bf16.gmra.mrb[0].mxu0 %v4012
        %v4205 = vpop.f32.mrb[0].mxu0
        %v4206 = vadd.f32 0.0, %v4205
        %v4207 = vpop.f32.mrb[0].mxu0
        %v4208 = vpop.f32.mrb[0].mxu0
        %v4209 = vadd.f32 0.0, %v4208
        %v4210 = vpop.f32.mrb[0].mxu0
        %4211 = vmatprep.mubr.bf16.mxu0 0
        %4212 = vmatmul.mubr.bf16.gmra.mrb[0].mxu0 %v4016
        %v4213 = vpop.f32.mrb[0].mxu0
        %v4214 = vadd.f32 0.0, %v4213
        %v4215 = vpop.f32.mrb[0].mxu0
        %v4216 = vpop.f32.mrb[0].mxu0
        %v4217 = vadd.f32 0.0, %v4216
        %v4218 = vpop.f32.mrb[0].mxu0
        %4219 = vmatprep.mubr.bf16.mxu0 0
        %4220 = vmatmul.mubr.bf16.gmra.mrb[0].mxu0 %v4020
        %v4221 = vpop.f32.mrb[0].mxu0
        %v4222 = vadd.f32 0.0, %v4221
        %v4223 = vpop.f32.mrb[0].mxu0
        %v4224 = vpop.f32.mrb[0].mxu0
        %v4225 = vadd.f32 0.0, %v4224
        %v4226 = vpop.f32.mrb[0].mxu0
        %4227 = vmatprep.mubr.bf16.mxu0 0
        %4228 = vmatmul.mubr.bf16.gmra.mrb[0].mxu0 %v4024
        %v4229 = vpop.f32.mrb[0].mxu0
        %v4230 = vadd.f32 0.0, %v4229
        %v4231 = vpop.f32.mrb[0].mxu0
        %v4232 = vpop.f32.mrb[0].mxu0
        %v4233 = vadd.f32 0.0, %v4232
        %v4234 = vpop.f32.mrb[0].mxu0
        %4235 = vdwg.mxu0
        %v4236 = vmax.f32 %v4141, %v4206
        %v4237 = vmax.f32 %v4144, %v4209
        %v4238 = vmax.f32 %v4149, %v4214
        %v4239 = vmax.f32 %v4152, %v4217
        %v4240 = vmax.f32 %v4157, %v4222
        %v4241 = vmax.f32 %v4160, %v4225
        %v4242 = vmax.f32 %v4165, %v4230
        %v4243 = vmax.f32 %v4168, %v4233
        %4244 = vmatprep.subr.bf16.mxu0 0
        %4245 = vmatpush1.bf16.msra.mxu0 %v4090
        %4246 = vmatprep.subr.bf16.mxu0 0
        %4247 = vmatpush1.bf16.msra.mxu0 %v4091
        %4248 = vmatprep.subr.bf16.mxu0 0
        %4249 = vmatpush1.bf16.msra.mxu0 %v4092
        %4250 = vmatprep.subr.bf16.mxu0 0
        %4251 = vmatpush1.bf16.msra.mxu0 %v4093
        %4252 = vmatprep.subr.bf16.mxu0 0
        %4253 = vmatpush1.bf16.msra.mxu0 %v4094
        %4254 = vmatprep.subr.bf16.mxu0 0
        %4255 = vmatpush1.bf16.msra.mxu0 %v4095
        %4256 = vmatprep.subr.bf16.mxu0 0
        %4257 = vmatpush1.bf16.msra.mxu0 %v4096
        %4258 = vmatprep.subr.bf16.mxu0 0
        %4259 = vmatpush1.bf16.msra.mxu0 %v4097
        %4260 = vmatprep.subr.bf16.mxu0 0
        %4261 = vmatpush1.bf16.msra.mxu0 0
        %4262 = vmatprep.subr.bf16.mxu0 0
        %4263 = vmatpush1.bf16.msra.mxu0 0
        %4264 = vmatprep.subr.bf16.mxu0 0
        %4265 = vmatpush1.bf16.msra.mxu0 0
        %4266 = vmatprep.subr.bf16.mxu0 0
        %4267 = vmatpush1.bf16.msra.mxu0 0
        %4268 = vmatprep.subr.bf16.mxu0 0
        %4269 = vmatpush1.bf16.msra.mxu0 0
        %4270 = vmatprep.subr.bf16.mxu0 0
        %4271 = vmatpush1.bf16.msra.mxu0 0
        %4272 = vmatprep.subr.bf16.mxu0 0
        %4273 = vmatpush1.bf16.msra.mxu0 0
        %4274 = vmatprep.subr.bf16.mxu0 0
        %4275 = vmatpush1.bf16.msra.mxu0 0
        %4276 = vmatprep.mubr.bf16.mxu0 0
        %4277 = vmatmul.mubr.bf16.gmra.mrb[0].mxu0 %v4013
        %v4278 = vpop.f32.mrb[0].mxu0
        %v4279 = vadd.f32 0.0, %v4278
        %v4280 = vpop.f32.mrb[0].mxu0
        %v4281 = vpop.f32.mrb[0].mxu0
        %v4282 = vadd.f32 0.0, %v4281
        %v4283 = vpop.f32.mrb[0].mxu0
        %4284 = vmatprep.mubr.bf16.mxu0 0
        %4285 = vmatmul.mubr.bf16.gmra.mrb[0].mxu0 %v4017
        %v4286 = vpop.f32.mrb[0].mxu0
        %v4287 = vadd.f32 0.0, %v4286
        %v4288 = vpop.f32.mrb[0].mxu0
        %v4289 = vpop.f32.mrb[0].mxu0
        %v4290 = vadd.f32 0.0, %v4289
        %v4291 = vpop.f32.mrb[0].mxu0
        %4292 = vmatprep.mubr.bf16.mxu0 0
        %4293 = vmatmul.mubr.bf16.gmra.mrb[0].mxu0 %v4021
        %v4294 = vpop.f32.mrb[0].mxu0
        %v4295 = vadd.f32 0.0, %v4294
        %v4296 = vpop.f32.mrb[0].mxu0
        %v4297 = vpop.f32.mrb[0].mxu0
        %v4298 = vadd.f32 0.0, %v4297
        %v4299 = vpop.f32.mrb[0].mxu0
        %4300 = vmatprep.mubr.bf16.mxu0 0
        %4301 = vmatmul.mubr.bf16.gmra.mrb[0].mxu0 %v4025
        %v4302 = vpop.f32.mrb[0].mxu0
        %v4303 = vadd.f32 0.0, %v4302
        %v4304 = vpop.f32.mrb[0].mxu0
        %v4305 = vpop.f32.mrb[0].mxu0
        %v4306 = vadd.f32 0.0, %v4305
        %v4307 = vpop.f32.mrb[0].mxu0
        %4308 = vdwg.mxu0
        %v4309 = vmax.f32 %v4236, %v4279
        %v4310 = vmax.f32 %v4237, %v4282
        %v4311 = vmax.f32 %v4238, %v4287
        %v4312 = vmax.f32 %v4239, %v4290
        %v4313 = vmax.f32 %v4240, %v4295
        %v4314 = vmax.f32 %v4241, %v4298
        %v4315 = vmax.f32 %v4242, %v4303
        %v4316 = vmax.f32 %v4243, %v4306
        %v4317 = vld [vmem:[%s4] sm:$0x1]
        %v4319 = vlaneseq
        %v4320 = vshrl.u32 %v4319, 7
        %v4321 = vsub.s32 0, %v4320
        %v4322 = vrot.slane %v4317, %v4321
        %v4340 = vunpack.c.l.b16 %v4026
        %v4341 = vunpack.c.l.b16 %v4027
        %v4342 = vunpack.c.l.b16 %v4028
        %v4343 = vunpack.c.l.b16 %v4029
        %v4344 = vunpack.c.l.b16 %v4030
        %v4345 = vunpack.c.l.b16 %v4031
        %v4346 = vunpack.c.l.b16 %v4032
        %v4347 = vunpack.c.l.b16 %v4033
        %v4348 = vunpack.c.l.b16 %v4034
        %v4349 = vunpack.c.l.b16 %v4035
        %v4350 = vunpack.c.l.b16 %v4036
        %v4351 = vunpack.c.l.b16 %v4037
        %v4352 = vunpack.c.l.b16 %v4038
        %v4353 = vunpack.c.l.b16 %v4039
        %v4354 = vunpack.c.l.b16 %v4040
        %v4355 = vunpack.c.l.b16 %v4041
        %v4356 = vpack.c.b16 %v4341, %v4340
        %v4357 = vpack.c.b16 %v4343, %v4342
        %v4358 = vpack.c.b16 %v4345, %v4344
        %v4359 = vpack.c.b16 %v4347, %v4346
        %v4360 = vpack.c.b16 %v4349, %v4348
        %v4361 = vpack.c.b16 %v4351, %v4350
        %v4362 = vpack.c.b16 %v4353, %v4352
        %v4363 = vpack.c.b16 %v4355, %v4354
        %4372 = vmatprep.subr.bf16.mxu0 0
        %4373 = vmatpush1.bf16.msra.mxu0 %v4356
        %4374 = vmatprep.subr.bf16.mxu0 0
        %4375 = vmatpush1.bf16.msra.mxu0 %v4357
        %4376 = vmatprep.subr.bf16.mxu0 0
        %4377 = vmatpush1.bf16.msra.mxu0 %v4358
        %4378 = vmatprep.subr.bf16.mxu0 0
        %4379 = vmatpush1.bf16.msra.mxu0 %v4359
        %4380 = vmatprep.subr.bf16.mxu0 0
        %4381 = vmatpush1.bf16.msra.mxu0 %v4360
        %4382 = vmatprep.subr.bf16.mxu0 0
        %4383 = vmatpush1.bf16.msra.mxu0 %v4361
        %4384 = vmatprep.subr.bf16.mxu0 0
        %4385 = vmatpush1.bf16.msra.mxu0 %v4362
        %4386 = vmatprep.subr.bf16.mxu0 0
        %4387 = vmatpush1.bf16.msra.mxu0 %v4363
        %4388 = vmatprep.subr.bf16.mxu0 0
        %4389 = vmatpush1.bf16.msra.mxu0 0
        %4390 = vmatprep.subr.bf16.mxu0 0
        %4391 = vmatpush1.bf16.msra.mxu0 0
        %4392 = vmatprep.subr.bf16.mxu0 0
        %4393 = vmatpush1.bf16.msra.mxu0 0
        %4394 = vmatprep.subr.bf16.mxu0 0
        %4395 = vmatpush1.bf16.msra.mxu0 0
        %4396 = vmatprep.subr.bf16.mxu0 0
        %4397 = vmatpush1.bf16.msra.mxu0 0
        %4398 = vmatprep.subr.bf16.mxu0 0
        %4399 = vmatpush1.bf16.msra.mxu0 0
        %4400 = vmatprep.subr.bf16.mxu0 0
        %4401 = vmatpush1.bf16.msra.mxu0 0
        %4402 = vmatprep.subr.bf16.mxu0 0
        %4403 = vmatpush1.bf16.msra.mxu0 0
        %4404 = vmatprep.mubr.bf16.mxu0 0
        %4405 = vmatmul.mubr.bf16.gmra.mrb[0].mxu0 %v4010
        %v4406 = vpop.f32.mrb[0].mxu0
        %v4407 = vadd.f32 %v4322, %v4406
        %v4408 = vpop.f32.mrb[0].mxu0
        %v4409 = vpop.f32.mrb[0].mxu0
        %v4410 = vadd.f32 %v4322, %v4409
        %v4411 = vpop.f32.mrb[0].mxu0
        %4412 = vmatprep.mubr.bf16.mxu0 0
        %4413 = vmatmul.mubr.bf16.gmra.mrb[0].mxu0 %v4014
        %v4414 = vpop.f32.mrb[0].mxu0
        %v4415 = vadd.f32 %v4322, %v4414
        %v4416 = vpop.f32.mrb[0].mxu0
        %v4417 = vpop.f32.mrb[0].mxu0
        %v4418 = vadd.f32 %v4322, %v4417
        %v4419 = vpop.f32.mrb[0].mxu0
        %4420 = vmatprep.mubr.bf16.mxu0 0
        %4421 = vmatmul.mubr.bf16.gmra.mrb[0].mxu0 %v4018
        %v4422 = vpop.f32.mrb[0].mxu0
        %v4423 = vadd.f32 %v4322, %v4422
        %v4424 = vpop.f32.mrb[0].mxu0
        %v4425 = vpop.f32.mrb[0].mxu0
        %v4426 = vadd.f32 %v4322, %v4425
        %v4427 = vpop.f32.mrb[0].mxu0
        %4428 = vmatprep.mubr.bf16.mxu0 0
        %4429 = vmatmul.mubr.bf16.gmra.mrb[0].mxu0 %v4022
        %v4430 = vpop.f32.mrb[0].mxu0
        %v4431 = vadd.f32 %v4322, %v4430
        %v4432 = vpop.f32.mrb[0].mxu0
        %v4433 = vpop.f32.mrb[0].mxu0
        %v4434 = vadd.f32 %v4322, %v4433
        %v4435 = vpop.f32.mrb[0].mxu0
        %4436 = vdwg.mxu0
        %v4437 = vadd.f32 %v4407, %v4309
        %v4438 = vadd.f32 %v4410, %v4310
        %v4439 = vadd.f32 %v4415, %v4311
        %v4440 = vadd.f32 %v4418, %v4312
        %v4441 = vadd.f32 %v4423, %v4313
        %v4442 = vadd.f32 %v4426, %v4314
        %v4443 = vadd.f32 %v4431, %v4315
        %v4444 = vadd.f32 %v4434, %v4316
        %v4445 = vld [vmem:[%s6] sm:$0x1]
        %v4447 = vlaneseq
        %v4448 = vshrl.u32 %v4447, 7
        %v4449 = vsub.s32 0, %v4448
        %v4450 = vrot.slane %v4445, %v4449
        %v4452 = vadd.f32 %v4437, %v4450
        %v4453 = vadd.f32 %v4438, %v4450
        %v4454 = vadd.f32 %v4439, %v4450
        %v4455 = vadd.f32 %v4440, %v4450
        %v4456 = vadd.f32 %v4441, %v4450
        %v4457 = vadd.f32 %v4442, %v4450
        %v4458 = vadd.f32 %v4443, %v4450
        %v4459 = vadd.f32 %v4444, %v4450
        %4460 = vst [vmem:[%s358] sm:$0xff] %v4452
        %4461 = vst [vmem:[%s358 + $0x8] sm:$0xff] %v4453
        %4462 = vst [vmem:[%s358 + $0x10] sm:$0xff] %v4454
        %4463 = vst [vmem:[%s358 + $0x18] sm:$0xff] %v4455
        %4464 = vst [vmem:[%s358 + $0x20] sm:$0xff] %v4456
        %4465 = vst [vmem:[%s358 + $0x28] sm:$0xff] %v4457
        %4466 = vst [vmem:[%s358 + $0x30] sm:$0xff] %v4458
        %4467 = vst [vmem:[%s358 + $0x38] sm:$0xff] %v4459
        %s4468 = sand.u32 %s202, 1
        %s4469 = scalar_lea.sflag [#allocation4], %s4468
        %s4470 = sand.u32 %s202, 1
        %s4471 = smul.addr %s4470, 64
        %s4472 = scalar_lea.vmem [#allocation10], %s4471
        // Predicated region
        $region65: #{tpu_custom_call.1} parent=47 // pred_check
          %p4473 = pneg %p212
        $region66: #{tpu_custom_call.1} parent=47 // pred_check_branch
          %4475 = sbr.rel (%p4473) target = $region68
        $region67: #{tpu_custom_call.1} parent=47 // pred_region
          %s4476 = smul.u32 8, %s31
          %s4478 = ssub.s32 1024, 1024
          %4479 = vsyncadd %s4469, %s4478
          %s4480 = smul.addr %s30, 8
          %s4481 = sadd.s32 %s4476, %s4480
          %s4482 = smul.addr %s4481, 128
          %s4483 = scalar_lea.hbm %s7, %s4482
          %s4484 = sshll.u32 %s4472, 4
          %s4485 = int_to_ptr.vmem [resolvable:$true] %s4484
          %4490 = dma.vmem_to_hbm [thread:$0]  %s4485, 1024, %s4483, %s4469, 128, 128, 8
        $region68: #{tpu_custom_call.1} parent=47 // pred_fallthru
          _
      $region48: #{tpu_custom_call.1} parent=5 // pred_fallthru
        _
      %p4491 = scmp.le.s32.totalorder 2, %s21
      // Predicated region
      $region69: #{tpu_custom_call.1} parent=5 // pred_check
        %p4492 = pneg %p4491
      $region70: #{tpu_custom_call.1} parent=5 // pred_check_branch
        %4494 = sbr.rel (%p4492) target = $region72
      $region71: #{tpu_custom_call.1} parent=5 // pred_region
        %s4495 = ssub.s32 %s21, 2
        // Predicated region
        $region73: #{tpu_custom_call.1} parent=71 // pred_check
          %p4496 = pneg %p218
        $region74: #{tpu_custom_call.1} parent=71 // pred_check_branch
          %4498 = sbr.rel (%p4496) target = $region76
        $region75: #{tpu_custom_call.1} parent=71 // pred_region
          %s4499 = sand.u32 %s203, 1
          %s4500 = scalar_lea.sflag [#allocation4], %s4499
          %s4501 = sand.u32 %s203, 1
          %s4502 = smul.addr %s4501, 64
          %s4503 = scalar_lea.vmem [#allocation10], %s4502
          %4504 = dma.done %s4500, 1024
        $region76: #{tpu_custom_call.1} parent=71 // pred_fallthru
          _
      $region72: #{tpu_custom_call.1} parent=5 // pred_fallthru
        _
    $region6: #{tpu_custom_call.1} parent=1 // loop_footer
      %s25 = sadd.s32 1, %s21
    $region7: #{tpu_custom_call.1} parent=1 // loop_footer_branch
      %20 = sbr.rel target = $region3
    $region8: #{tpu_custom_call.1} parent=1 // loop_exit
      _
    %4505 = vsyncpa [#allocation3], 1
    %s4506 = scalar_lea.sflag [#allocation3], 1
    %4507 = vsyncpa %s4506, 1
    %4508 = vsyncpa [#allocation6], 1
    %4509 = vsyncpa [#allocation9], 1
    %4510 = vsyncpa [#allocation4], 1
    %s4511 = scalar_lea.sflag [#allocation4], 1
    %4512 = vsyncpa %s4511, 1

</llo_original>
